<compile_context>
chip_gen: v7x
topology: tpu7x:2x2x1
jax: 0.10.0
libtpu: 0.0.40
codegen_flags: <defaults>
</compile_context>

<pallas_src>
import functools

import jax
import jax.numpy as jnp
from jax.experimental import pallas as pl
from jax.experimental.pallas import tpu as pltpu

_BN_EPS = 1e-5


# ----------------------------------------------------------------------------
# Fused OSA kernel (one grid step = one image)
# ----------------------------------------------------------------------------
def _osa_fused_kernel(num_layers, H, W, identity, x_ref, *refs):
    # refs layout:
    #   per layer l: w_ref (9, stage_ch, Cin_l) bf16 , b_ref (stage_ch, 1) f32
    #   wc_ref (concat_ch, c_total) bf16
    #   bc_ref (concat_ch, 1) f32
    #   o_ref  (1, concat_ch, H*W) bf16
    #   buf_ref (Cin_max, 2*LPAD + H*W) bf16   -- zero-bordered shift buffer
    #   cat_ref (c_total, H*W) bf16            -- concatenated features
    idx = 0
    layer_w, layer_b = [], []
    for _ in range(num_layers):
        layer_w.append(refs[idx])
        layer_b.append(refs[idx + 1])
        idx += 2
    wc_ref = refs[idx]
    bc_ref = refs[idx + 1]
    o_ref = refs[idx + 2]
    buf_ref = refs[idx + 3]
    cat_ref = refs[idx + 4]

    HW = H * W
    LPAD = (buf_ref.shape[1] - HW) // 2  # zero border width on each side

    # Column masks for taps that cross a row boundary (hoisted out of loops).
    # Masking is done in bf16 (half the VPU work on v6e/v7x; correct on v5e).
    col = jax.lax.broadcasted_iota(jnp.int32, (1, HW), 1) % W
    mask_left = col >= 1        # dx == 0: needs input column w-1
    mask_right = col <= W - 2   # dx == 2: needs input column w+1

    # Zero only the borders (never written elsewhere); centre is rewritten
    # per layer.  Done per grid step so megacore-sharded grids stay correct.
    zeros_border = jnp.zeros((buf_ref.shape[0], LPAD), buf_ref.dtype)
    buf_ref[:, 0:LPAD] = zeros_border
    buf_ref[:, LPAD + HW:] = zeros_border

    x_bf = x_ref[0]                          # (in_ch, HW) bf16 from HBM
    in_ch = x_bf.shape[0]
    cat_ref[0:in_ch, :] = x_bf               # feature 0 of the 1x1 concat conv
    cur_bf = x_bf
    ch_off = in_ch

    for l in range(num_layers):
        w_ref = layer_w[l]                   # (9, cout, cin) bf16, tap-major
        b_ref = layer_b[l]                   # (cout, 1) f32
        _, cout, cin = w_ref.shape

        # Current activation into the centre of the zero-bordered buffer
        # (lane offset LPAD is 128-aligned -> unmasked stores).
        buf_ref[0:cin, LPAD:LPAD + HW] = cur_bf

        # Nine statically shifted lane windows, each fed straight into an
        # accumulating K=cin matmul (no patch materialization).
        acc = jnp.zeros((cout, HW), jnp.float32)
        for dy in range(3):
            for dx in range(3):
                off = (dy - 1) * W + (dx - 1)
                tap = buf_ref[0:cin, LPAD + off:LPAD + off + HW]   # bf16
                if dx == 0:
                    tap = jnp.where(mask_left, tap, 0.0)
                elif dx == 2:
                    tap = jnp.where(mask_right, tap, 0.0)
                t = dy * 3 + dx
                acc = acc + jnp.dot(w_ref[t], tap,
                                    preferred_element_type=jnp.float32)

        cur_f32 = jnp.maximum(acc + b_ref[...], 0.0)     # BN bias + ReLU
        cur_bf = cur_f32.astype(jnp.bfloat16)
        cat_ref[ch_off:ch_off + cout, :] = cur_bf        # into concat scratch
        ch_off += cout

    # 1x1 "concat" conv: ONE long-K matmul over the persistent concat scratch.
    y = jnp.dot(wc_ref[...], cat_ref[...], preferred_element_type=jnp.float32)
    y = jnp.maximum(y + bc_ref[...], 0.0)
    if identity:
        y = y + x_bf.astype(jnp.float32)     # post-ReLU identity add
    o_ref[0] = y.astype(o_ref.dtype)         # lane-dense (concat_ch, HW) store


# ----------------------------------------------------------------------------
# Wrapper (pallas_call plumbing); input/output are plain NCHW
# ----------------------------------------------------------------------------
def osa_module_forward(x_nchw, params, identity=False):
    """x_nchw: (N, in_ch, H, W) float. Returns (N, concat_ch, H, W) bfloat16."""
    N, in_ch, H, W = x_nchw.shape
    HW = H * W
    layers = params["layers"]        # [(w bf16 (9, stage_ch, cin), b f32 (st,1))]
    wc = params["concat_w"]          # bf16 (concat_ch, c_total)
    bc = params["concat_b"]          # f32  (concat_ch, 1)
    num_layers = len(layers)
    stage_ch = layers[0][0].shape[1]
    concat_ch = bc.shape[0]
    c_total = wc.shape[1]
    assert c_total == in_ch + num_layers * stage_ch
    if identity:
        assert concat_ch == in_ch, "identity add requires concat_ch == in_ch"

    cin_max = max(in_ch, stage_ch)
    lpad = max(W + 1, 128)           # >= W+1 zeros each side, 128-aligned centre

    x_flat = x_nchw.reshape(N, in_ch, HW).astype(jnp.bfloat16)

    kernel = functools.partial(_osa_fused_kernel, num_layers, H, W, identity)

    in_specs = [pl.BlockSpec((1, in_ch, HW), lambda n: (n, 0, 0))]
    args = [x_flat]
    for (w, b) in layers:
        in_specs.append(pl.BlockSpec(w.shape, lambda n: (0, 0, 0)))
        in_specs.append(pl.BlockSpec(b.shape, lambda n: (0, 0)))
        args += [w, b]
    in_specs.append(pl.BlockSpec(wc.shape, lambda n: (0, 0)))
    in_specs.append(pl.BlockSpec(bc.shape, lambda n: (0, 0)))
    args += [wc, bc]

    # Advisory cost estimate for XLA's scheduler.
    flops = 0
    weight_bytes = 0
    for (w, b) in layers:
        _, cout, cin = w.shape
        flops += 2 * 9 * cout * cin * HW
        weight_bytes += w.size * 2 + b.size * 4
    flops += 2 * concat_ch * c_total * HW
    flops *= N
    weight_bytes += wc.size * 2 + bc.size * 4
    bytes_accessed = int(x_flat.size * 2 + N * concat_ch * HW * 2 + weight_bytes)
    cost = pl.CostEstimate(flops=int(flops), transcendentals=0,
                           bytes_accessed=bytes_accessed)

    # Explicit VMEM budget: scratch + double-buffered I/O blocks + weights,
    # with 2x margin, clamped to [32 MiB, 64 MiB] (v7x physical VMEM is 64 MiB).
    scratch_bytes = cin_max * (2 * lpad + HW) * 2 + c_total * HW * 2
    block_bytes = 2 * (in_ch * HW * 2) + 2 * (concat_ch * HW * 2)
    vmem_limit = int(min(64 * 1024 * 1024,
                         max(32 * 1024 * 1024,
                             2 * (scratch_bytes + block_bytes
                                  + 2 * weight_bytes))))

    out = pl.pallas_call(
        kernel,
        out_shape=jax.ShapeDtypeStruct((N, concat_ch, HW), jnp.bfloat16),
        grid=(N,),
        in_specs=in_specs,
        out_specs=pl.BlockSpec((1, concat_ch, HW), lambda n: (n, 0, 0)),
        scratch_shapes=[
            pltpu.VMEM((cin_max, 2 * lpad + HW), jnp.bfloat16),  # shift buffer
            pltpu.VMEM((c_total, HW), jnp.bfloat16),             # concat feats
        ],
        compiler_params=pltpu.CompilerParams(
            dimension_semantics=("parallel",),
            vmem_limit_bytes=vmem_limit,
        ),
        cost_estimate=cost,
    )(*args)
    return out.reshape(N, concat_ch, H, W)


# ----------------------------------------------------------------------------
# Parameter construction (deterministic; BN scale folded into the weights)
# ----------------------------------------------------------------------------
def _fold_bn(gamma, beta, mean, var):
    scale = gamma * jax.lax.rsqrt(var + _BN_EPS)
    bias = beta - mean * scale
    return scale, bias


def make_osa_params(key, in_ch, stage_ch, concat_ch, layer_per_block):
    layers = []
    c = in_ch
    for i in range(layer_per_block):
        k = jax.random.fold_in(key, i)
        kw, kg, kb, km, kv = jax.random.split(k, 5)
        w = jax.random.normal(kw, (3, 3, c, stage_ch), jnp.float32) * 0.1  # HWIO
        gamma = jax.random.uniform(kg, (stage_ch,), jnp.float32, 0.5, 1.5)
        beta = jax.random.normal(kb, (stage_ch,), jnp.float32) * 0.1
        mean = jax.random.normal(km, (stage_ch,), jnp.float32) * 0.1
        var = jax.random.uniform(kv, (stage_ch,), jnp.float32, 0.5, 1.5)
        scale, bias = _fold_bn(gamma, beta, mean, var)
        w = w * scale                                     # fold BN scale
        # (dy, dx, ci, o) -> (dy, dx, o, ci) -> (9, o, ci): tap-major so the
        # kernel reads w_ref[t] as a free leading-axis load.
        w_tap = jnp.transpose(w, (0, 1, 3, 2)).reshape(9, stage_ch, c)
        layers.append((w_tap.astype(jnp.bfloat16), bias.reshape(stage_ch, 1)))
        c = stage_ch

    c_total = in_ch + layer_per_block * stage_ch
    k = jax.random.fold_in(key, 10_000)
    kw, kg, kb, km, kv = jax.random.split(k, 5)
    wc = jax.random.normal(kw, (c_total, concat_ch), jnp.float32) * 0.1
    gamma = jax.random.uniform(kg, (concat_ch,), jnp.float32, 0.5, 1.5)
    beta = jax.random.normal(kb, (concat_ch,), jnp.float32) * 0.1
    mean = jax.random.normal(km, (concat_ch,), jnp.float32) * 0.1
    var = jax.random.uniform(kv, (concat_ch,), jnp.float32, 0.5, 1.5)
    scale, bias = _fold_bn(gamma, beta, mean, var)
    wc = (wc * scale).T                                   # (concat_ch, c_total)
    return {"layers": layers,
            "concat_w": wc.astype(jnp.bfloat16),
            "concat_b": bias.reshape(concat_ch, 1)}


# ----------------------------------------------------------------------------
# Pure-JAX reference (f32 math, mirroring the kernel's bf16 operand rounding)
# ----------------------------------------------------------------------------
def _ref_forward(x_nchw, params, identity):
    x = x_nchw.astype(jnp.bfloat16).astype(jnp.float32)
    feats = [x]
    cur = x
    for (w_tap, b) in params["layers"]:
        _, cout, cin = w_tap.shape
        w = w_tap.astype(jnp.float32).reshape(3, 3, cout, cin)   # (dy,dx,o,ci)
        w_hwio = jnp.transpose(w, (0, 1, 3, 2))                  # (dy,dx,ci,o)
        a = jnp.transpose(cur, (0, 2, 3, 1))
        a = a.astype(jnp.bfloat16).astype(jnp.float32)           # mirror kernel
        y = jax.lax.conv_general_dilated(
            a, w_hwio, (1, 1), "SAME",
            dimension_numbers=("NHWC", "HWIO", "NHWC"),
            precision=jax.lax.Precision.HIGHEST)
        y = jnp.maximum(y + b[:, 0], 0.0)
        cur = jnp.transpose(y, (0, 3, 1, 2))
        feats.append(cur)
    wc = params["concat_w"].astype(jnp.float32)
    xcat = jnp.concatenate(
        [f.astype(jnp.bfloat16).astype(jnp.float32) for f in feats], axis=1)
    y = jnp.einsum("oc,nchw->nohw", wc, xcat,
                   precision=jax.lax.Precision.HIGHEST)
    y = jnp.maximum(y + params["concat_b"].reshape(1, -1, 1, 1), 0.0)
    if identity:
        y = y + x
    return y


if __name__ == "__main__":
    # _OSA_module(in_ch=16, stage_ch=8, concat_ch=16, layer_per_block=3,
    #             identity=True)  (identity requires concat_ch == in_ch)
    in_ch, stage_ch, concat_ch, layer_per_block = 16, 8, 16, 3
    N, H, W = 2, 16, 16
    identity = True

    key = jax.random.PRNGKey(0)
    kx, kp = jax.random.split(key)
    x_nchw = jax.random.normal(kx, (N, in_ch, H, W), jnp.float32)  # NCHW input
    params = make_osa_params(kp, in_ch, stage_ch, concat_ch, layer_per_block)

    out = osa_module_forward(x_nchw, params, identity=identity)
    out = jax.block_until_ready(out)
    assert out.shape == (N, concat_ch, H, W)

    ref = _ref_forward(x_nchw, params, identity)
    diff = jnp.max(jnp.abs(out.astype(jnp.float32) - ref))
    # bf16 activations/weights -> relaxed tolerance vs the f32 reference.
    assert jnp.allclose(out.astype(jnp.float32), ref, atol=5e-2, rtol=5e-2), \
        float(diff)

    print("KERNEL_OK")
</pallas_src>

<mosaic_0001>
module attributes {stable_mosaic.version = 11 : i64} {
  func.func @_osa_fused_kernel(%arg0: i32, %arg1: memref<1x16x256xbf16, #tpu.memory_space<vmem>>, %arg2: memref<9x8x16xbf16, #tpu.memory_space<vmem>>, %arg3: memref<8x1xf32, #tpu.memory_space<vmem>>, %arg4: memref<9x8x8xbf16, #tpu.memory_space<vmem>>, %arg5: memref<8x1xf32, #tpu.memory_space<vmem>>, %arg6: memref<9x8x8xbf16, #tpu.memory_space<vmem>>, %arg7: memref<8x1xf32, #tpu.memory_space<vmem>>, %arg8: memref<16x40xbf16, #tpu.memory_space<vmem>>, %arg9: memref<16x1xf32, #tpu.memory_space<vmem>>, %arg10: memref<1x16x256xbf16, #tpu.memory_space<vmem>>, %arg11: memref<16x512xbf16, #tpu.memory_space<vmem>>, %arg12: memref<40x256xbf16, #tpu.memory_space<vmem>>) attributes {dimension_semantics = [#tpu.dimension_semantics<parallel>], iteration_bounds = array<i64: 2>, scalar_prefetch = 0 : i64, scratch_operands = 2 : i64, tpu.core_type = #tpu.core_type<tc>, window_params = [{transform_indices = @transform_0, window_bounds = array<i64: 1, 16, 256>}, {pipeline_mode = #tpu.pipeline_mode<synchronous>, transform_indices = @transform_1, window_bounds = array<i64: 9, 8, 16>}, {pipeline_mode = #tpu.pipeline_mode<synchronous>, transform_indices = @transform_2, window_bounds = array<i64: 8, 1>}, {pipeline_mode = #tpu.pipeline_mode<synchronous>, transform_indices = @transform_3, window_bounds = array<i64: 9, 8, 8>}, {pipeline_mode = #tpu.pipeline_mode<synchronous>, transform_indices = @transform_4, window_bounds = array<i64: 8, 1>}, {pipeline_mode = #tpu.pipeline_mode<synchronous>, transform_indices = @transform_5, window_bounds = array<i64: 9, 8, 8>}, {pipeline_mode = #tpu.pipeline_mode<synchronous>, transform_indices = @transform_6, window_bounds = array<i64: 8, 1>}, {pipeline_mode = #tpu.pipeline_mode<synchronous>, transform_indices = @transform_7, window_bounds = array<i64: 16, 40>}, {pipeline_mode = #tpu.pipeline_mode<synchronous>, transform_indices = @transform_8, window_bounds = array<i64: 16, 1>}, {transform_indices = @transform_9, window_bounds = array<i64: 1, 16, 256>}]} {
    %0 = tpu.iota {dimensions = array<i32: 1>} : vector<1x256xi32>
    %c16_i32 = arith.constant 16 : i32
    %c0_i32 = arith.constant 0 : i32
    %1 = arith.cmpi eq, %c16_i32, %c0_i32 : i32
    %c1_i32 = arith.constant 1 : i32
    %2 = arith.select %1, %c1_i32, %c16_i32 : i32
    %3 = vector.broadcast %2 : i32 to vector<1x256xi32>
    %4 = arith.remsi %0, %3 : vector<1x256xi32>
    %c0_i32_0 = arith.constant 0 : i32
    %5 = vector.broadcast %c0_i32_0 : i32 to vector<1x256xi32>
    %6 = arith.cmpi ne, %4, %5 : vector<1x256xi32>
    %c0_i32_1 = arith.constant 0 : i32
    %7 = vector.broadcast %c0_i32_1 : i32 to vector<1x256xi32>
    %8 = arith.cmpi slt, %4, %7 : vector<1x256xi32>
    %c0_i32_2 = arith.constant 0 : i32
    %9 = arith.cmpi slt, %2, %c0_i32_2 : i32
    %10 = vector.broadcast %9 : i1 to vector<1x256xi1>
    %11 = vector.broadcast %10 : vector<1x256xi1> to vector<1x256xi1>
    %12 = arith.xori %8, %11 : vector<1x256xi1>
    %13 = arith.andi %12, %6 : vector<1x256xi1>
    %14 = vector.broadcast %2 : i32 to vector<1x256xi32>
    %15 = arith.addi %4, %14 : vector<1x256xi32>
    %16 = arith.select %13, %15, %4 : vector<1x256xi1>, vector<1x256xi32>
    %c1_i32_3 = arith.constant 1 : i32
    %17 = vector.broadcast %c1_i32_3 : i32 to vector<1x256xi32>
    %18 = arith.cmpi sge, %16, %17 : vector<1x256xi32>
    %c14_i32 = arith.constant 14 : i32
    %19 = vector.broadcast %c14_i32 : i32 to vector<1x256xi32>
    %20 = arith.cmpi sle, %16, %19 : vector<1x256xi32>
    %cst = arith.constant 0.000000e+00 : bf16
    %21 = vector.broadcast %cst : bf16 to vector<16x128xbf16>
    %c0 = arith.constant 0 : index
    %c0_4 = arith.constant 0 : index
    %22 = vector.load %arg11[%c0, %c0_4] : memref<16x512xbf16, #tpu.memory_space<vmem>>, vector<16x128xbf16>
    tpu.vector_store %arg11[%c0, %c0_4], %21 {strides = array<i32>} : memref<16x512xbf16, #tpu.memory_space<vmem>>, vector<16x128xbf16>,
    %c0_5 = arith.constant 0 : index
    %c384 = arith.constant 384 : index
    %23 = vector.load %arg11[%c0_5, %c384] : memref<16x512xbf16, #tpu.memory_space<vmem>>, vector<16x128xbf16>
    tpu.vector_store %arg11[%c0_5, %c384], %21 {strides = array<i32>} : memref<16x512xbf16, #tpu.memory_space<vmem>>, vector<16x128xbf16>,
    %c0_6 = arith.constant 0 : index
    %c0_7 = arith.constant 0 : index
    %c0_8 = arith.constant 0 : index
    %24 = vector.load %arg1[%c0_6, %c0_7, %c0_8] : memref<1x16x256xbf16, #tpu.memory_space<vmem>>, vector<1x16x256xbf16>
    %25 = vector.shape_cast %24 : vector<1x16x256xbf16> to vector<16x256xbf16>
    %c0_9 = arith.constant 0 : index
    %c0_10 = arith.constant 0 : index
    %26 = vector.load %arg12[%c0_9, %c0_10] : memref<40x256xbf16, #tpu.memory_space<vmem>>, vector<16x256xbf16>
    tpu.vector_store %arg12[%c0_9, %c0_10], %25 {strides = array<i32>} : memref<40x256xbf16, #tpu.memory_space<vmem>>, vector<16x256xbf16>,
    %c0_11 = arith.constant 0 : index
    %c128 = arith.constant 128 : index
    %27 = vector.load %arg11[%c0_11, %c128] : memref<16x512xbf16, #tpu.memory_space<vmem>>, vector<16x256xbf16>
    tpu.vector_store %arg11[%c0_11, %c128], %25 {strides = array<i32>} : memref<16x512xbf16, #tpu.memory_space<vmem>>, vector<16x256xbf16>,
    %cst_12 = arith.constant 0.000000e+00 : f32
    %28 = vector.broadcast %cst_12 : f32 to vector<8x256xf32>
    %c0_13 = arith.constant 0 : index
    %c111 = arith.constant 111 : index
    %29 = vector.load %arg11[%c0_13, %c111] : memref<16x512xbf16, #tpu.memory_space<vmem>>, vector<16x256xbf16>
    %cst_14 = arith.constant 0.000000e+00 : f32
    %30 = arith.truncf %cst_14 : f32 to bf16
    %31 = vector.shape_cast %18 : vector<1x256xi1> to vector<1x256xi1>
    %32 = vector.broadcast %31 : vector<1x256xi1> to vector<16x256xi1>
    %33 = vector.broadcast %30 : bf16 to vector<16x256xbf16>
    %34 = arith.select %32, %29, %33 : vector<16x256xi1>, vector<16x256xbf16>
    %c0_15 = arith.constant 0 : index
    %c0_16 = arith.constant 0 : index
    %c0_17 = arith.constant 0 : index
    %35 = vector.load %arg2[%c0_15, %c0_16, %c0_17] : memref<9x8x16xbf16, #tpu.memory_space<vmem>>, vector<1x8x16xbf16>
    %36 = vector.shape_cast %35 : vector<1x8x16xbf16> to vector<8x16xbf16>
    %cst_18 = arith.constant dense<0.000000e+00> : vector<8x256xf32>
    %37 = tpu.matmul %36, %34, %cst_18 {dimension_numbers = #tpu.dot_dimension_numbers<[1], [0], [0], [1], [0, 0, 1, 1], [], []>} : vector<8x16xbf16>, vector<16x256xbf16>, vector<8x256xf32> -> vector<8x256xf32>
    %38 = arith.addf %28, %37 : vector<8x256xf32>
    %c0_19 = arith.constant 0 : index
    %c112 = arith.constant 112 : index
    %39 = vector.load %arg11[%c0_19, %c112] : memref<16x512xbf16, #tpu.memory_space<vmem>>, vector<16x256xbf16>
    %c1 = arith.constant 1 : index
    %c0_20 = arith.constant 0 : index
    %c0_21 = arith.constant 0 : index
    %40 = vector.load %arg2[%c1, %c0_20, %c0_21] : memref<9x8x16xbf16, #tpu.memory_space<vmem>>, vector<1x8x16xbf16>
    %41 = vector.shape_cast %40 : vector<1x8x16xbf16> to vector<8x16xbf16>
    %cst_22 = arith.constant dense<0.000000e+00> : vector<8x256xf32>
    %42 = tpu.matmul %41, %39, %cst_22 {dimension_numbers = #tpu.dot_dimension_numbers<[1], [0], [0], [1], [0, 0, 1, 1], [], []>} : vector<8x16xbf16>, vector<16x256xbf16>, vector<8x256xf32> -> vector<8x256xf32>
    %43 = arith.addf %38, %42 : vector<8x256xf32>
    %c0_23 = arith.constant 0 : index
    %c113 = arith.constant 113 : index
    %44 = vector.load %arg11[%c0_23, %c113] : memref<16x512xbf16, #tpu.memory_space<vmem>>, vector<16x256xbf16>
    %cst_24 = arith.constant 0.000000e+00 : f32
    %45 = arith.truncf %cst_24 : f32 to bf16
    %46 = vector.shape_cast %20 : vector<1x256xi1> to vector<1x256xi1>
    %47 = vector.broadcast %46 : vector<1x256xi1> to vector<16x256xi1>
    %48 = vector.broadcast %45 : bf16 to vector<16x256xbf16>
    %49 = arith.select %47, %44, %48 : vector<16x256xi1>, vector<16x256xbf16>
    %c2 = arith.constant 2 : index
    %c0_25 = arith.constant 0 : index
    %c0_26 = arith.constant 0 : index
    %50 = vector.load %arg2[%c2, %c0_25, %c0_26] : memref<9x8x16xbf16, #tpu.memory_space<vmem>>, vector<1x8x16xbf16>
    %51 = vector.shape_cast %50 : vector<1x8x16xbf16> to vector<8x16xbf16>
    %cst_27 = arith.constant dense<0.000000e+00> : vector<8x256xf32>
    %52 = tpu.matmul %51, %49, %cst_27 {dimension_numbers = #tpu.dot_dimension_numbers<[1], [0], [0], [1], [0, 0, 1, 1], [], []>} : vector<8x16xbf16>, vector<16x256xbf16>, vector<8x256xf32> -> vector<8x256xf32>
    %53 = arith.addf %43, %52 : vector<8x256xf32>
    %c0_28 = arith.constant 0 : index
    %c127 = arith.constant 127 : index
    %54 = vector.load %arg11[%c0_28, %c127] : memref<16x512xbf16, #tpu.memory_space<vmem>>, vector<16x256xbf16>
    %cst_29 = arith.constant 0.000000e+00 : f32
    %55 = arith.truncf %cst_29 : f32 to bf16
    %56 = vector.shape_cast %18 : vector<1x256xi1> to vector<1x256xi1>
    %57 = vector.broadcast %56 : vector<1x256xi1> to vector<16x256xi1>
    %58 = vector.broadcast %55 : bf16 to vector<16x256xbf16>
    %59 = arith.select %57, %54, %58 : vector<16x256xi1>, vector<16x256xbf16>
    %c3 = arith.constant 3 : index
    %c0_30 = arith.constant 0 : index
    %c0_31 = arith.constant 0 : index
    %60 = vector.load %arg2[%c3, %c0_30, %c0_31] : memref<9x8x16xbf16, #tpu.memory_space<vmem>>, vector<1x8x16xbf16>
    %61 = vector.shape_cast %60 : vector<1x8x16xbf16> to vector<8x16xbf16>
    %cst_32 = arith.constant dense<0.000000e+00> : vector<8x256xf32>
    %62 = tpu.matmul %61, %59, %cst_32 {dimension_numbers = #tpu.dot_dimension_numbers<[1], [0], [0], [1], [0, 0, 1, 1], [], []>} : vector<8x16xbf16>, vector<16x256xbf16>, vector<8x256xf32> -> vector<8x256xf32>
    %63 = arith.addf %53, %62 : vector<8x256xf32>
    %c0_33 = arith.constant 0 : index
    %c128_34 = arith.constant 128 : index
    %64 = vector.load %arg11[%c0_33, %c128_34] : memref<16x512xbf16, #tpu.memory_space<vmem>>, vector<16x256xbf16>
    %c4 = arith.constant 4 : index
    %c0_35 = arith.constant 0 : index
    %c0_36 = arith.constant 0 : index
    %65 = vector.load %arg2[%c4, %c0_35, %c0_36] : memref<9x8x16xbf16, #tpu.memory_space<vmem>>, vector<1x8x16xbf16>
    %66 = vector.shape_cast %65 : vector<1x8x16xbf16> to vector<8x16xbf16>
    %cst_37 = arith.constant dense<0.000000e+00> : vector<8x256xf32>
    %67 = tpu.matmul %66, %64, %cst_37 {dimension_numbers = #tpu.dot_dimension_numbers<[1], [0], [0], [1], [0, 0, 1, 1], [], []>} : vector<8x16xbf16>, vector<16x256xbf16>, vector<8x256xf32> -> vector<8x256xf32>
    %68 = arith.addf %63, %67 : vector<8x256xf32>
    %c0_38 = arith.constant 0 : index
    %c129 = arith.constant 129 : index
    %69 = vector.load %arg11[%c0_38, %c129] : memref<16x512xbf16, #tpu.memory_space<vmem>>, vector<16x256xbf16>
    %cst_39 = arith.constant 0.000000e+00 : f32
    %70 = arith.truncf %cst_39 : f32 to bf16
    %71 = vector.shape_cast %20 : vector<1x256xi1> to vector<1x256xi1>
    %72 = vector.broadcast %71 : vector<1x256xi1> to vector<16x256xi1>
    %73 = vector.broadcast %70 : bf16 to vector<16x256xbf16>
    %74 = arith.select %72, %69, %73 : vector<16x256xi1>, vector<16x256xbf16>
    %c5 = arith.constant 5 : index
    %c0_40 = arith.constant 0 : index
    %c0_41 = arith.constant 0 : index
    %75 = vector.load %arg2[%c5, %c0_40, %c0_41] : memref<9x8x16xbf16, #tpu.memory_space<vmem>>, vector<1x8x16xbf16>
    %76 = vector.shape_cast %75 : vector<1x8x16xbf16> to vector<8x16xbf16>
    %cst_42 = arith.constant dense<0.000000e+00> : vector<8x256xf32>
    %77 = tpu.matmul %76, %74, %cst_42 {dimension_numbers = #tpu.dot_dimension_numbers<[1], [0], [0], [1], [0, 0, 1, 1], [], []>} : vector<8x16xbf16>, vector<16x256xbf16>, vector<8x256xf32> -> vector<8x256xf32>
    %78 = arith.addf %68, %77 : vector<8x256xf32>
    %c0_43 = arith.constant 0 : index
    %c143 = arith.constant 143 : index
    %79 = vector.load %arg11[%c0_43, %c143] : memref<16x512xbf16, #tpu.memory_space<vmem>>, vector<16x256xbf16>
    %cst_44 = arith.constant 0.000000e+00 : f32
    %80 = arith.truncf %cst_44 : f32 to bf16
    %81 = vector.shape_cast %18 : vector<1x256xi1> to vector<1x256xi1>
    %82 = vector.broadcast %81 : vector<1x256xi1> to vector<16x256xi1>
    %83 = vector.broadcast %80 : bf16 to vector<16x256xbf16>
    %84 = arith.select %82, %79, %83 : vector<16x256xi1>, vector<16x256xbf16>
    %c6 = arith.constant 6 : index
    %c0_45 = arith.constant 0 : index
    %c0_46 = arith.constant 0 : index
    %85 = vector.load %arg2[%c6, %c0_45, %c0_46] : memref<9x8x16xbf16, #tpu.memory_space<vmem>>, vector<1x8x16xbf16>
    %86 = vector.shape_cast %85 : vector<1x8x16xbf16> to vector<8x16xbf16>
    %cst_47 = arith.constant dense<0.000000e+00> : vector<8x256xf32>
    %87 = tpu.matmul %86, %84, %cst_47 {dimension_numbers = #tpu.dot_dimension_numbers<[1], [0], [0], [1], [0, 0, 1, 1], [], []>} : vector<8x16xbf16>, vector<16x256xbf16>, vector<8x256xf32> -> vector<8x256xf32>
    %88 = arith.addf %78, %87 : vector<8x256xf32>
    %c0_48 = arith.constant 0 : index
    %c144 = arith.constant 144 : index
    %89 = vector.load %arg11[%c0_48, %c144] : memref<16x512xbf16, #tpu.memory_space<vmem>>, vector<16x256xbf16>
    %c7 = arith.constant 7 : index
    %c0_49 = arith.constant 0 : index
    %c0_50 = arith.constant 0 : index
    %90 = vector.load %arg2[%c7, %c0_49, %c0_50] : memref<9x8x16xbf16, #tpu.memory_space<vmem>>, vector<1x8x16xbf16>
    %91 = vector.shape_cast %90 : vector<1x8x16xbf16> to vector<8x16xbf16>
    %cst_51 = arith.constant dense<0.000000e+00> : vector<8x256xf32>
    %92 = tpu.matmul %91, %89, %cst_51 {dimension_numbers = #tpu.dot_dimension_numbers<[1], [0], [0], [1], [0, 0, 1, 1], [], []>} : vector<8x16xbf16>, vector<16x256xbf16>, vector<8x256xf32> -> vector<8x256xf32>
    %93 = arith.addf %88, %92 : vector<8x256xf32>
    %c0_52 = arith.constant 0 : index
    %c145 = arith.constant 145 : index
    %94 = vector.load %arg11[%c0_52, %c145] : memref<16x512xbf16, #tpu.memory_space<vmem>>, vector<16x256xbf16>
    %cst_53 = arith.constant 0.000000e+00 : f32
    %95 = arith.truncf %cst_53 : f32 to bf16
    %96 = vector.shape_cast %20 : vector<1x256xi1> to vector<1x256xi1>
    %97 = vector.broadcast %96 : vector<1x256xi1> to vector<16x256xi1>
    %98 = vector.broadcast %95 : bf16 to vector<16x256xbf16>
    %99 = arith.select %97, %94, %98 : vector<16x256xi1>, vector<16x256xbf16>
    %c8 = arith.constant 8 : index
    %c0_54 = arith.constant 0 : index
    %c0_55 = arith.constant 0 : index
    %100 = vector.load %arg2[%c8, %c0_54, %c0_55] : memref<9x8x16xbf16, #tpu.memory_space<vmem>>, vector<1x8x16xbf16>
    %101 = vector.shape_cast %100 : vector<1x8x16xbf16> to vector<8x16xbf16>
    %cst_56 = arith.constant dense<0.000000e+00> : vector<8x256xf32>
    %102 = tpu.matmul %101, %99, %cst_56 {dimension_numbers = #tpu.dot_dimension_numbers<[1], [0], [0], [1], [0, 0, 1, 1], [], []>} : vector<8x16xbf16>, vector<16x256xbf16>, vector<8x256xf32> -> vector<8x256xf32>
    %103 = arith.addf %93, %102 : vector<8x256xf32>
    %c0_57 = arith.constant 0 : index
    %c0_58 = arith.constant 0 : index
    %104 = vector.load %arg3[%c0_57, %c0_58] : memref<8x1xf32, #tpu.memory_space<vmem>>, vector<8x1xf32>
    %105 = vector.broadcast %104 : vector<8x1xf32> to vector<8x256xf32>
    %106 = arith.addf %103, %105 : vector<8x256xf32>
    %cst_59 = arith.constant 0.000000e+00 : f32
    %107 = vector.broadcast %cst_59 : f32 to vector<8x256xf32>
    %108 = arith.maximumf %106, %107 : vector<8x256xf32>
    %109 = arith.truncf %108 : vector<8x256xf32> to vector<8x256xbf16>
    %c16 = arith.constant 16 : index
    %c0_60 = arith.constant 0 : index
    %110 = vector.load %arg12[%c16, %c0_60] : memref<40x256xbf16, #tpu.memory_space<vmem>>, vector<8x256xbf16>
    tpu.vector_store %arg12[%c16, %c0_60], %109 {strides = array<i32>} : memref<40x256xbf16, #tpu.memory_space<vmem>>, vector<8x256xbf16>,
    %c0_61 = arith.constant 0 : index
    %c128_62 = arith.constant 128 : index
    %111 = vector.load %arg11[%c0_61, %c128_62] : memref<16x512xbf16, #tpu.memory_space<vmem>>, vector<8x256xbf16>
    tpu.vector_store %arg11[%c0_61, %c128_62], %109 {strides = array<i32>} : memref<16x512xbf16, #tpu.memory_space<vmem>>, vector<8x256xbf16>,
    %cst_63 = arith.constant 0.000000e+00 : f32
    %112 = vector.broadcast %cst_63 : f32 to vector<8x256xf32>
    %c0_64 = arith.constant 0 : index
    %c111_65 = arith.constant 111 : index
    %113 = vector.load %arg11[%c0_64, %c111_65] : memref<16x512xbf16, #tpu.memory_space<vmem>>, vector<8x256xbf16>
    %cst_66 = arith.constant 0.000000e+00 : f32
    %114 = arith.truncf %cst_66 : f32 to bf16
    %115 = vector.shape_cast %18 : vector<1x256xi1> to vector<1x256xi1>
    %116 = vector.broadcast %115 : vector<1x256xi1> to vector<8x256xi1>
    %117 = vector.broadcast %114 : bf16 to vector<8x256xbf16>
    %118 = arith.select %116, %113, %117 : vector<8x256xi1>, vector<8x256xbf16>
    %c0_67 = arith.constant 0 : index
    %c0_68 = arith.constant 0 : index
    %c0_69 = arith.constant 0 : index
    %119 = vector.load %arg4[%c0_67, %c0_68, %c0_69] : memref<9x8x8xbf16, #tpu.memory_space<vmem>>, vector<1x8x8xbf16>
    %120 = vector.shape_cast %119 : vector<1x8x8xbf16> to vector<8x8xbf16>
    %cst_70 = arith.constant dense<0.000000e+00> : vector<8x256xf32>
    %121 = tpu.matmul %120, %118, %cst_70 {dimension_numbers = #tpu.dot_dimension_numbers<[1], [0], [0], [1], [0, 0, 1, 1], [], []>} : vector<8x8xbf16>, vector<8x256xbf16>, vector<8x256xf32> -> vector<8x256xf32>
    %122 = arith.addf %112, %121 : vector<8x256xf32>
    %c0_71 = arith.constant 0 : index
    %c112_72 = arith.constant 112 : index
    %123 = vector.load %arg11[%c0_71, %c112_72] : memref<16x512xbf16, #tpu.memory_space<vmem>>, vector<8x256xbf16>
    %c1_73 = arith.constant 1 : index
    %c0_74 = arith.constant 0 : index
    %c0_75 = arith.constant 0 : index
    %124 = vector.load %arg4[%c1_73, %c0_74, %c0_75] : memref<9x8x8xbf16, #tpu.memory_space<vmem>>, vector<1x8x8xbf16>
    %125 = vector.shape_cast %124 : vector<1x8x8xbf16> to vector<8x8xbf16>
    %cst_76 = arith.constant dense<0.000000e+00> : vector<8x256xf32>
    %126 = tpu.matmul %125, %123, %cst_76 {dimension_numbers = #tpu.dot_dimension_numbers<[1], [0], [0], [1], [0, 0, 1, 1], [], []>} : vector<8x8xbf16>, vector<8x256xbf16>, vector<8x256xf32> -> vector<8x256xf32>
    %127 = arith.addf %122, %126 : vector<8x256xf32>
    %c0_77 = arith.constant 0 : index
    %c113_78 = arith.constant 113 : index
    %128 = vector.load %arg11[%c0_77, %c113_78] : memref<16x512xbf16, #tpu.memory_space<vmem>>, vector<8x256xbf16>
    %cst_79 = arith.constant 0.000000e+00 : f32
    %129 = arith.truncf %cst_79 : f32 to bf16
    %130 = vector.shape_cast %20 : vector<1x256xi1> to vector<1x256xi1>
    %131 = vector.broadcast %130 : vector<1x256xi1> to vector<8x256xi1>
    %132 = vector.broadcast %129 : bf16 to vector<8x256xbf16>
    %133 = arith.select %131, %128, %132 : vector<8x256xi1>, vector<8x256xbf16>
    %c2_80 = arith.constant 2 : index
    %c0_81 = arith.constant 0 : index
    %c0_82 = arith.constant 0 : index
    %134 = vector.load %arg4[%c2_80, %c0_81, %c0_82] : memref<9x8x8xbf16, #tpu.memory_space<vmem>>, vector<1x8x8xbf16>
    %135 = vector.shape_cast %134 : vector<1x8x8xbf16> to vector<8x8xbf16>
    %cst_83 = arith.constant dense<0.000000e+00> : vector<8x256xf32>
    %136 = tpu.matmul %135, %133, %cst_83 {dimension_numbers = #tpu.dot_dimension_numbers<[1], [0], [0], [1], [0, 0, 1, 1], [], []>} : vector<8x8xbf16>, vector<8x256xbf16>, vector<8x256xf32> -> vector<8x256xf32>
    %137 = arith.addf %127, %136 : vector<8x256xf32>
    %c0_84 = arith.constant 0 : index
    %c127_85 = arith.constant 127 : index
    %138 = vector.load %arg11[%c0_84, %c127_85] : memref<16x512xbf16, #tpu.memory_space<vmem>>, vector<8x256xbf16>
    %cst_86 = arith.constant 0.000000e+00 : f32
    %139 = arith.truncf %cst_86 : f32 to bf16
    %140 = vector.shape_cast %18 : vector<1x256xi1> to vector<1x256xi1>
    %141 = vector.broadcast %140 : vector<1x256xi1> to vector<8x256xi1>
    %142 = vector.broadcast %139 : bf16 to vector<8x256xbf16>
    %143 = arith.select %141, %138, %142 : vector<8x256xi1>, vector<8x256xbf16>
    %c3_87 = arith.constant 3 : index
    %c0_88 = arith.constant 0 : index
    %c0_89 = arith.constant 0 : index
    %144 = vector.load %arg4[%c3_87, %c0_88, %c0_89] : memref<9x8x8xbf16, #tpu.memory_space<vmem>>, vector<1x8x8xbf16>
    %145 = vector.shape_cast %144 : vector<1x8x8xbf16> to vector<8x8xbf16>
    %cst_90 = arith.constant dense<0.000000e+00> : vector<8x256xf32>
    %146 = tpu.matmul %145, %143, %cst_90 {dimension_numbers = #tpu.dot_dimension_numbers<[1], [0], [0], [1], [0, 0, 1, 1], [], []>} : vector<8x8xbf16>, vector<8x256xbf16>, vector<8x256xf32> -> vector<8x256xf32>
    %147 = arith.addf %137, %146 : vector<8x256xf32>
    %c0_91 = arith.constant 0 : index
    %c128_92 = arith.constant 128 : index
    %148 = vector.load %arg11[%c0_91, %c128_92] : memref<16x512xbf16, #tpu.memory_space<vmem>>, vector<8x256xbf16>
    %c4_93 = arith.constant 4 : index
    %c0_94 = arith.constant 0 : index
    %c0_95 = arith.constant 0 : index
    %149 = vector.load %arg4[%c4_93, %c0_94, %c0_95] : memref<9x8x8xbf16, #tpu.memory_space<vmem>>, vector<1x8x8xbf16>
    %150 = vector.shape_cast %149 : vector<1x8x8xbf16> to vector<8x8xbf16>
    %cst_96 = arith.constant dense<0.000000e+00> : vector<8x256xf32>
    %151 = tpu.matmul %150, %148, %cst_96 {dimension_numbers = #tpu.dot_dimension_numbers<[1], [0], [0], [1], [0, 0, 1, 1], [], []>} : vector<8x8xbf16>, vector<8x256xbf16>, vector<8x256xf32> -> vector<8x256xf32>
    %152 = arith.addf %147, %151 : vector<8x256xf32>
    %c0_97 = arith.constant 0 : index
    %c129_98 = arith.constant 129 : index
    %153 = vector.load %arg11[%c0_97, %c129_98] : memref<16x512xbf16, #tpu.memory_space<vmem>>, vector<8x256xbf16>
    %cst_99 = arith.constant 0.000000e+00 : f32
    %154 = arith.truncf %cst_99 : f32 to bf16
    %155 = vector.shape_cast %20 : vector<1x256xi1> to vector<1x256xi1>
    %156 = vector.broadcast %155 : vector<1x256xi1> to vector<8x256xi1>
    %157 = vector.broadcast %154 : bf16 to vector<8x256xbf16>
    %158 = arith.select %156, %153, %157 : vector<8x256xi1>, vector<8x256xbf16>
    %c5_100 = arith.constant 5 : index
    %c0_101 = arith.constant 0 : index
    %c0_102 = arith.constant 0 : index
    %159 = vector.load %arg4[%c5_100, %c0_101, %c0_102] : memref<9x8x8xbf16, #tpu.memory_space<vmem>>, vector<1x8x8xbf16>
    %160 = vector.shape_cast %159 : vector<1x8x8xbf16> to vector<8x8xbf16>
    %cst_103 = arith.constant dense<0.000000e+00> : vector<8x256xf32>
    %161 = tpu.matmul %160, %158, %cst_103 {dimension_numbers = #tpu.dot_dimension_numbers<[1], [0], [0], [1], [0, 0, 1, 1], [], []>} : vector<8x8xbf16>, vector<8x256xbf16>, vector<8x256xf32> -> vector<8x256xf32>
    %162 = arith.addf %152, %161 : vector<8x256xf32>
    %c0_104 = arith.constant 0 : index
    %c143_105 = arith.constant 143 : index
    %163 = vector.load %arg11[%c0_104, %c143_105] : memref<16x512xbf16, #tpu.memory_space<vmem>>, vector<8x256xbf16>
    %cst_106 = arith.constant 0.000000e+00 : f32
    %164 = arith.truncf %cst_106 : f32 to bf16
    %165 = vector.shape_cast %18 : vector<1x256xi1> to vector<1x256xi1>
    %166 = vector.broadcast %165 : vector<1x256xi1> to vector<8x256xi1>
    %167 = vector.broadcast %164 : bf16 to vector<8x256xbf16>
    %168 = arith.select %166, %163, %167 : vector<8x256xi1>, vector<8x256xbf16>
    %c6_107 = arith.constant 6 : index
    %c0_108 = arith.constant 0 : index
    %c0_109 = arith.constant 0 : index
    %169 = vector.load %arg4[%c6_107, %c0_108, %c0_109] : memref<9x8x8xbf16, #tpu.memory_space<vmem>>, vector<1x8x8xbf16>
    %170 = vector.shape_cast %169 : vector<1x8x8xbf16> to vector<8x8xbf16>
    %cst_110 = arith.constant dense<0.000000e+00> : vector<8x256xf32>
    %171 = tpu.matmul %170, %168, %cst_110 {dimension_numbers = #tpu.dot_dimension_numbers<[1], [0], [0], [1], [0, 0, 1, 1], [], []>} : vector<8x8xbf16>, vector<8x256xbf16>, vector<8x256xf32> -> vector<8x256xf32>
    %172 = arith.addf %162, %171 : vector<8x256xf32>
    %c0_111 = arith.constant 0 : index
    %c144_112 = arith.constant 144 : index
    %173 = vector.load %arg11[%c0_111, %c144_112] : memref<16x512xbf16, #tpu.memory_space<vmem>>, vector<8x256xbf16>
    %c7_113 = arith.constant 7 : index
    %c0_114 = arith.constant 0 : index
    %c0_115 = arith.constant 0 : index
    %174 = vector.load %arg4[%c7_113, %c0_114, %c0_115] : memref<9x8x8xbf16, #tpu.memory_space<vmem>>, vector<1x8x8xbf16>
    %175 = vector.shape_cast %174 : vector<1x8x8xbf16> to vector<8x8xbf16>
    %cst_116 = arith.constant dense<0.000000e+00> : vector<8x256xf32>
    %176 = tpu.matmul %175, %173, %cst_116 {dimension_numbers = #tpu.dot_dimension_numbers<[1], [0], [0], [1], [0, 0, 1, 1], [], []>} : vector<8x8xbf16>, vector<8x256xbf16>, vector<8x256xf32> -> vector<8x256xf32>
    %177 = arith.addf %172, %176 : vector<8x256xf32>
    %c0_117 = arith.constant 0 : index
    %c145_118 = arith.constant 145 : index
    %178 = vector.load %arg11[%c0_117, %c145_118] : memref<16x512xbf16, #tpu.memory_space<vmem>>, vector<8x256xbf16>
    %cst_119 = arith.constant 0.000000e+00 : f32
    %179 = arith.truncf %cst_119 : f32 to bf16
    %180 = vector.shape_cast %20 : vector<1x256xi1> to vector<1x256xi1>
    %181 = vector.broadcast %180 : vector<1x256xi1> to vector<8x256xi1>
    %182 = vector.broadcast %179 : bf16 to vector<8x256xbf16>
    %183 = arith.select %181, %178, %182 : vector<8x256xi1>, vector<8x256xbf16>
    %c8_120 = arith.constant 8 : index
    %c0_121 = arith.constant 0 : index
    %c0_122 = arith.constant 0 : index
    %184 = vector.load %arg4[%c8_120, %c0_121, %c0_122] : memref<9x8x8xbf16, #tpu.memory_space<vmem>>, vector<1x8x8xbf16>
    %185 = vector.shape_cast %184 : vector<1x8x8xbf16> to vector<8x8xbf16>
    %cst_123 = arith.constant dense<0.000000e+00> : vector<8x256xf32>
    %186 = tpu.matmul %185, %183, %cst_123 {dimension_numbers = #tpu.dot_dimension_numbers<[1], [0], [0], [1], [0, 0, 1, 1], [], []>} : vector<8x8xbf16>, vector<8x256xbf16>, vector<8x256xf32> -> vector<8x256xf32>
    %187 = arith.addf %177, %186 : vector<8x256xf32>
    %c0_124 = arith.constant 0 : index
    %c0_125 = arith.constant 0 : index
    %188 = vector.load %arg5[%c0_124, %c0_125] : memref<8x1xf32, #tpu.memory_space<vmem>>, vector<8x1xf32>
    %189 = vector.broadcast %188 : vector<8x1xf32> to vector<8x256xf32>
    %190 = arith.addf %187, %189 : vector<8x256xf32>
    %cst_126 = arith.constant 0.000000e+00 : f32
    %191 = vector.broadcast %cst_126 : f32 to vector<8x256xf32>
    %192 = arith.maximumf %190, %191 : vector<8x256xf32>
    %193 = arith.truncf %192 : vector<8x256xf32> to vector<8x256xbf16>
    %c24 = arith.constant 24 : index
    %c0_127 = arith.constant 0 : index
    %194 = vector.load %arg12[%c24, %c0_127] : memref<40x256xbf16, #tpu.memory_space<vmem>>, vector<8x256xbf16>
    tpu.vector_store %arg12[%c24, %c0_127], %193 {strides = array<i32>} : memref<40x256xbf16, #tpu.memory_space<vmem>>, vector<8x256xbf16>,
    %c0_128 = arith.constant 0 : index
    %c128_129 = arith.constant 128 : index
    %195 = vector.load %arg11[%c0_128, %c128_129] : memref<16x512xbf16, #tpu.memory_space<vmem>>, vector<8x256xbf16>
    tpu.vector_store %arg11[%c0_128, %c128_129], %193 {strides = array<i32>} : memref<16x512xbf16, #tpu.memory_space<vmem>>, vector<8x256xbf16>,
    %cst_130 = arith.constant 0.000000e+00 : f32
    %196 = vector.broadcast %cst_130 : f32 to vector<8x256xf32>
    %c0_131 = arith.constant 0 : index
    %c111_132 = arith.constant 111 : index
    %197 = vector.load %arg11[%c0_131, %c111_132] : memref<16x512xbf16, #tpu.memory_space<vmem>>, vector<8x256xbf16>
    %cst_133 = arith.constant 0.000000e+00 : f32
    %198 = arith.truncf %cst_133 : f32 to bf16
    %199 = vector.shape_cast %18 : vector<1x256xi1> to vector<1x256xi1>
    %200 = vector.broadcast %199 : vector<1x256xi1> to vector<8x256xi1>
    %201 = vector.broadcast %198 : bf16 to vector<8x256xbf16>
    %202 = arith.select %200, %197, %201 : vector<8x256xi1>, vector<8x256xbf16>
    %c0_134 = arith.constant 0 : index
    %c0_135 = arith.constant 0 : index
    %c0_136 = arith.constant 0 : index
    %203 = vector.load %arg6[%c0_134, %c0_135, %c0_136] : memref<9x8x8xbf16, #tpu.memory_space<vmem>>, vector<1x8x8xbf16>
    %204 = vector.shape_cast %203 : vector<1x8x8xbf16> to vector<8x8xbf16>
    %cst_137 = arith.constant dense<0.000000e+00> : vector<8x256xf32>
    %205 = tpu.matmul %204, %202, %cst_137 {dimension_numbers = #tpu.dot_dimension_numbers<[1], [0], [0], [1], [0, 0, 1, 1], [], []>} : vector<8x8xbf16>, vector<8x256xbf16>, vector<8x256xf32> -> vector<8x256xf32>
    %206 = arith.addf %196, %205 : vector<8x256xf32>
    %c0_138 = arith.constant 0 : index
    %c112_139 = arith.constant 112 : index
    %207 = vector.load %arg11[%c0_138, %c112_139] : memref<16x512xbf16, #tpu.memory_space<vmem>>, vector<8x256xbf16>
    %c1_140 = arith.constant 1 : index
    %c0_141 = arith.constant 0 : index
    %c0_142 = arith.constant 0 : index
    %208 = vector.load %arg6[%c1_140, %c0_141, %c0_142] : memref<9x8x8xbf16, #tpu.memory_space<vmem>>, vector<1x8x8xbf16>
    %209 = vector.shape_cast %208 : vector<1x8x8xbf16> to vector<8x8xbf16>
    %cst_143 = arith.constant dense<0.000000e+00> : vector<8x256xf32>
    %210 = tpu.matmul %209, %207, %cst_143 {dimension_numbers = #tpu.dot_dimension_numbers<[1], [0], [0], [1], [0, 0, 1, 1], [], []>} : vector<8x8xbf16>, vector<8x256xbf16>, vector<8x256xf32> -> vector<8x256xf32>
    %211 = arith.addf %206, %210 : vector<8x256xf32>
    %c0_144 = arith.constant 0 : index
    %c113_145 = arith.constant 113 : index
    %212 = vector.load %arg11[%c0_144, %c113_145] : memref<16x512xbf16, #tpu.memory_space<vmem>>, vector<8x256xbf16>
    %cst_146 = arith.constant 0.000000e+00 : f32
    %213 = arith.truncf %cst_146 : f32 to bf16
    %214 = vector.shape_cast %20 : vector<1x256xi1> to vector<1x256xi1>
    %215 = vector.broadcast %214 : vector<1x256xi1> to vector<8x256xi1>
    %216 = vector.broadcast %213 : bf16 to vector<8x256xbf16>
    %217 = arith.select %215, %212, %216 : vector<8x256xi1>, vector<8x256xbf16>
    %c2_147 = arith.constant 2 : index
    %c0_148 = arith.constant 0 : index
    %c0_149 = arith.constant 0 : index
    %218 = vector.load %arg6[%c2_147, %c0_148, %c0_149] : memref<9x8x8xbf16, #tpu.memory_space<vmem>>, vector<1x8x8xbf16>
    %219 = vector.shape_cast %218 : vector<1x8x8xbf16> to vector<8x8xbf16>
    %cst_150 = arith.constant dense<0.000000e+00> : vector<8x256xf32>
    %220 = tpu.matmul %219, %217, %cst_150 {dimension_numbers = #tpu.dot_dimension_numbers<[1], [0], [0], [1], [0, 0, 1, 1], [], []>} : vector<8x8xbf16>, vector<8x256xbf16>, vector<8x256xf32> -> vector<8x256xf32>
    %221 = arith.addf %211, %220 : vector<8x256xf32>
    %c0_151 = arith.constant 0 : index
    %c127_152 = arith.constant 127 : index
    %222 = vector.load %arg11[%c0_151, %c127_152] : memref<16x512xbf16, #tpu.memory_space<vmem>>, vector<8x256xbf16>
    %cst_153 = arith.constant 0.000000e+00 : f32
    %223 = arith.truncf %cst_153 : f32 to bf16
    %224 = vector.shape_cast %18 : vector<1x256xi1> to vector<1x256xi1>
    %225 = vector.broadcast %224 : vector<1x256xi1> to vector<8x256xi1>
    %226 = vector.broadcast %223 : bf16 to vector<8x256xbf16>
    %227 = arith.select %225, %222, %226 : vector<8x256xi1>, vector<8x256xbf16>
    %c3_154 = arith.constant 3 : index
    %c0_155 = arith.constant 0 : index
    %c0_156 = arith.constant 0 : index
    %228 = vector.load %arg6[%c3_154, %c0_155, %c0_156] : memref<9x8x8xbf16, #tpu.memory_space<vmem>>, vector<1x8x8xbf16>
    %229 = vector.shape_cast %228 : vector<1x8x8xbf16> to vector<8x8xbf16>
    %cst_157 = arith.constant dense<0.000000e+00> : vector<8x256xf32>
    %230 = tpu.matmul %229, %227, %cst_157 {dimension_numbers = #tpu.dot_dimension_numbers<[1], [0], [0], [1], [0, 0, 1, 1], [], []>} : vector<8x8xbf16>, vector<8x256xbf16>, vector<8x256xf32> -> vector<8x256xf32>
    %231 = arith.addf %221, %230 : vector<8x256xf32>
    %c0_158 = arith.constant 0 : index
    %c128_159 = arith.constant 128 : index
    %232 = vector.load %arg11[%c0_158, %c128_159] : memref<16x512xbf16, #tpu.memory_space<vmem>>, vector<8x256xbf16>
    %c4_160 = arith.constant 4 : index
    %c0_161 = arith.constant 0 : index
    %c0_162 = arith.constant 0 : index
    %233 = vector.load %arg6[%c4_160, %c0_161, %c0_162] : memref<9x8x8xbf16, #tpu.memory_space<vmem>>, vector<1x8x8xbf16>
    %234 = vector.shape_cast %233 : vector<1x8x8xbf16> to vector<8x8xbf16>
    %cst_163 = arith.constant dense<0.000000e+00> : vector<8x256xf32>
    %235 = tpu.matmul %234, %232, %cst_163 {dimension_numbers = #tpu.dot_dimension_numbers<[1], [0], [0], [1], [0, 0, 1, 1], [], []>} : vector<8x8xbf16>, vector<8x256xbf16>, vector<8x256xf32> -> vector<8x256xf32>
    %236 = arith.addf %231, %235 : vector<8x256xf32>
    %c0_164 = arith.constant 0 : index
    %c129_165 = arith.constant 129 : index
    %237 = vector.load %arg11[%c0_164, %c129_165] : memref<16x512xbf16, #tpu.memory_space<vmem>>, vector<8x256xbf16>
    %cst_166 = arith.constant 0.000000e+00 : f32
    %238 = arith.truncf %cst_166 : f32 to bf16
    %239 = vector.shape_cast %20 : vector<1x256xi1> to vector<1x256xi1>
    %240 = vector.broadcast %239 : vector<1x256xi1> to vector<8x256xi1>
    %241 = vector.broadcast %238 : bf16 to vector<8x256xbf16>
    %242 = arith.select %240, %237, %241 : vector<8x256xi1>, vector<8x256xbf16>
    %c5_167 = arith.constant 5 : index
    %c0_168 = arith.constant 0 : index
    %c0_169 = arith.constant 0 : index
    %243 = vector.load %arg6[%c5_167, %c0_168, %c0_169] : memref<9x8x8xbf16, #tpu.memory_space<vmem>>, vector<1x8x8xbf16>
    %244 = vector.shape_cast %243 : vector<1x8x8xbf16> to vector<8x8xbf16>
    %cst_170 = arith.constant dense<0.000000e+00> : vector<8x256xf32>
    %245 = tpu.matmul %244, %242, %cst_170 {dimension_numbers = #tpu.dot_dimension_numbers<[1], [0], [0], [1], [0, 0, 1, 1], [], []>} : vector<8x8xbf16>, vector<8x256xbf16>, vector<8x256xf32> -> vector<8x256xf32>
    %246 = arith.addf %236, %245 : vector<8x256xf32>
    %c0_171 = arith.constant 0 : index
    %c143_172 = arith.constant 143 : index
    %247 = vector.load %arg11[%c0_171, %c143_172] : memref<16x512xbf16, #tpu.memory_space<vmem>>, vector<8x256xbf16>
    %cst_173 = arith.constant 0.000000e+00 : f32
    %248 = arith.truncf %cst_173 : f32 to bf16
    %249 = vector.shape_cast %18 : vector<1x256xi1> to vector<1x256xi1>
    %250 = vector.broadcast %249 : vector<1x256xi1> to vector<8x256xi1>
    %251 = vector.broadcast %248 : bf16 to vector<8x256xbf16>
    %252 = arith.select %250, %247, %251 : vector<8x256xi1>, vector<8x256xbf16>
    %c6_174 = arith.constant 6 : index
    %c0_175 = arith.constant 0 : index
    %c0_176 = arith.constant 0 : index
    %253 = vector.load %arg6[%c6_174, %c0_175, %c0_176] : memref<9x8x8xbf16, #tpu.memory_space<vmem>>, vector<1x8x8xbf16>
    %254 = vector.shape_cast %253 : vector<1x8x8xbf16> to vector<8x8xbf16>
    %cst_177 = arith.constant dense<0.000000e+00> : vector<8x256xf32>
    %255 = tpu.matmul %254, %252, %cst_177 {dimension_numbers = #tpu.dot_dimension_numbers<[1], [0], [0], [1], [0, 0, 1, 1], [], []>} : vector<8x8xbf16>, vector<8x256xbf16>, vector<8x256xf32> -> vector<8x256xf32>
    %256 = arith.addf %246, %255 : vector<8x256xf32>
    %c0_178 = arith.constant 0 : index
    %c144_179 = arith.constant 144 : index
    %257 = vector.load %arg11[%c0_178, %c144_179] : memref<16x512xbf16, #tpu.memory_space<vmem>>, vector<8x256xbf16>
    %c7_180 = arith.constant 7 : index
    %c0_181 = arith.constant 0 : index
    %c0_182 = arith.constant 0 : index
    %258 = vector.load %arg6[%c7_180, %c0_181, %c0_182] : memref<9x8x8xbf16, #tpu.memory_space<vmem>>, vector<1x8x8xbf16>
    %259 = vector.shape_cast %258 : vector<1x8x8xbf16> to vector<8x8xbf16>
    %cst_183 = arith.constant dense<0.000000e+00> : vector<8x256xf32>
    %260 = tpu.matmul %259, %257, %cst_183 {dimension_numbers = #tpu.dot_dimension_numbers<[1], [0], [0], [1], [0, 0, 1, 1], [], []>} : vector<8x8xbf16>, vector<8x256xbf16>, vector<8x256xf32> -> vector<8x256xf32>
    %261 = arith.addf %256, %260 : vector<8x256xf32>
    %c0_184 = arith.constant 0 : index
    %c145_185 = arith.constant 145 : index
    %262 = vector.load %arg11[%c0_184, %c145_185] : memref<16x512xbf16, #tpu.memory_space<vmem>>, vector<8x256xbf16>
    %cst_186 = arith.constant 0.000000e+00 : f32
    %263 = arith.truncf %cst_186 : f32 to bf16
    %264 = vector.shape_cast %20 : vector<1x256xi1> to vector<1x256xi1>
    %265 = vector.broadcast %264 : vector<1x256xi1> to vector<8x256xi1>
    %266 = vector.broadcast %263 : bf16 to vector<8x256xbf16>
    %267 = arith.select %265, %262, %266 : vector<8x256xi1>, vector<8x256xbf16>
    %c8_187 = arith.constant 8 : index
    %c0_188 = arith.constant 0 : index
    %c0_189 = arith.constant 0 : index
    %268 = vector.load %arg6[%c8_187, %c0_188, %c0_189] : memref<9x8x8xbf16, #tpu.memory_space<vmem>>, vector<1x8x8xbf16>
    %269 = vector.shape_cast %268 : vector<1x8x8xbf16> to vector<8x8xbf16>
    %cst_190 = arith.constant dense<0.000000e+00> : vector<8x256xf32>
    %270 = tpu.matmul %269, %267, %cst_190 {dimension_numbers = #tpu.dot_dimension_numbers<[1], [0], [0], [1], [0, 0, 1, 1], [], []>} : vector<8x8xbf16>, vector<8x256xbf16>, vector<8x256xf32> -> vector<8x256xf32>
    %271 = arith.addf %261, %270 : vector<8x256xf32>
    %c0_191 = arith.constant 0 : index
    %c0_192 = arith.constant 0 : index
    %272 = vector.load %arg7[%c0_191, %c0_192] : memref<8x1xf32, #tpu.memory_space<vmem>>, vector<8x1xf32>
    %273 = vector.broadcast %272 : vector<8x1xf32> to vector<8x256xf32>
    %274 = arith.addf %271, %273 : vector<8x256xf32>
    %cst_193 = arith.constant 0.000000e+00 : f32
    %275 = vector.broadcast %cst_193 : f32 to vector<8x256xf32>
    %276 = arith.maximumf %274, %275 : vector<8x256xf32>
    %277 = arith.truncf %276 : vector<8x256xf32> to vector<8x256xbf16>
    %c32 = arith.constant 32 : index
    %c0_194 = arith.constant 0 : index
    %278 = vector.load %arg12[%c32, %c0_194] : memref<40x256xbf16, #tpu.memory_space<vmem>>, vector<8x256xbf16>
    tpu.vector_store %arg12[%c32, %c0_194], %277 {strides = array<i32>} : memref<40x256xbf16, #tpu.memory_space<vmem>>, vector<8x256xbf16>,
    %c0_195 = arith.constant 0 : index
    %c0_196 = arith.constant 0 : index
    %279 = vector.load %arg8[%c0_195, %c0_196] : memref<16x40xbf16, #tpu.memory_space<vmem>>, vector<16x40xbf16>
    %c0_197 = arith.constant 0 : index
    %c0_198 = arith.constant 0 : index
    %280 = vector.load %arg12[%c0_197, %c0_198] : memref<40x256xbf16, #tpu.memory_space<vmem>>, vector<40x256xbf16>
    %cst_199 = arith.constant dense<0.000000e+00> : vector<16x256xf32>
    %281 = tpu.matmul %279, %280, %cst_199 {dimension_numbers = #tpu.dot_dimension_numbers<[1], [0], [0], [1], [0, 0, 1, 1], [], []>} : vector<16x40xbf16>, vector<40x256xbf16>, vector<16x256xf32> -> vector<16x256xf32>
    %c0_200 = arith.constant 0 : index
    %c0_201 = arith.constant 0 : index
    %282 = vector.load %arg9[%c0_200, %c0_201] : memref<16x1xf32, #tpu.memory_space<vmem>>, vector<16x1xf32>
    %283 = vector.broadcast %282 : vector<16x1xf32> to vector<16x256xf32>
    %284 = arith.addf %281, %283 : vector<16x256xf32>
    %cst_202 = arith.constant 0.000000e+00 : f32
    %285 = vector.broadcast %cst_202 : f32 to vector<16x256xf32>
    %286 = arith.maximumf %284, %285 : vector<16x256xf32>
    %287 = arith.extf %25 : vector<16x256xbf16> to vector<16x256xf32>
    %288 = arith.addf %286, %287 : vector<16x256xf32>
    %289 = arith.truncf %288 : vector<16x256xf32> to vector<16x256xbf16>
    %c0_203 = arith.constant 0 : index
    %c0_204 = arith.constant 0 : index
    %c0_205 = arith.constant 0 : index
    %290 = vector.load %arg10[%c0_203, %c0_204, %c0_205] : memref<1x16x256xbf16, #tpu.memory_space<vmem>>, vector<1x16x256xbf16>
    %291 = vector.shape_cast %290 : vector<1x16x256xbf16> to vector<16x256xbf16>
    %292 = vector.shape_cast %289 : vector<16x256xbf16> to vector<1x16x256xbf16>
    tpu.vector_store %arg10[%c0_203, %c0_204, %c0_205], %292 {strides = array<i32>} : memref<1x16x256xbf16, #tpu.memory_space<vmem>>, vector<1x16x256xbf16>,
    return
  }
  func.func @transform_0(%arg0: i32) -> (i32, i32, i32) {
    %c0_i32 = arith.constant 0 : i32
    %c0_i32_0 = arith.constant 0 : i32
    %c0_i32_1 = arith.constant 0 : i32
    return %arg0, %c0_i32, %c0_i32_0 : i32, i32, i32
  }
  func.func @transform_1(%arg0: i32) -> (i32, i32, i32) {
    %c0_i32 = arith.constant 0 : i32
    %c0_i32_0 = arith.constant 0 : i32
    %c0_i32_1 = arith.constant 0 : i32
    %c0_i32_2 = arith.constant 0 : i32
    return %c0_i32, %c0_i32_0, %c0_i32_1 : i32, i32, i32
  }
  func.func @transform_2(%arg0: i32) -> (i32, i32) {
    %c0_i32 = arith.constant 0 : i32
    %c0_i32_0 = arith.constant 0 : i32
    %c0_i32_1 = arith.constant 0 : i32
    return %c0_i32, %c0_i32_0 : i32, i32
  }
  func.func @transform_3(%arg0: i32) -> (i32, i32, i32) {
    %c0_i32 = arith.constant 0 : i32
    %c0_i32_0 = arith.constant 0 : i32
    %c0_i32_1 = arith.constant 0 : i32
    %c0_i32_2 = arith.constant 0 : i32
    return %c0_i32, %c0_i32_0, %c0_i32_1 : i32, i32, i32
  }
  func.func @transform_4(%arg0: i32) -> (i32, i32) {
    %c0_i32 = arith.constant 0 : i32
    %c0_i32_0 = arith.constant 0 : i32
    %c0_i32_1 = arith.constant 0 : i32
    return %c0_i32, %c0_i32_0 : i32, i32
  }
  func.func @transform_5(%arg0: i32) -> (i32, i32, i32) {
    %c0_i32 = arith.constant 0 : i32
    %c0_i32_0 = arith.constant 0 : i32
    %c0_i32_1 = arith.constant 0 : i32
    %c0_i32_2 = arith.constant 0 : i32
    return %c0_i32, %c0_i32_0, %c0_i32_1 : i32, i32, i32
  }
  func.func @transform_6(%arg0: i32) -> (i32, i32) {
    %c0_i32 = arith.constant 0 : i32
    %c0_i32_0 = arith.constant 0 : i32
    %c0_i32_1 = arith.constant 0 : i32
    return %c0_i32, %c0_i32_0 : i32, i32
  }
  func.func @transform_7(%arg0: i32) -> (i32, i32) {
    %c0_i32 = arith.constant 0 : i32
    %c0_i32_0 = arith.constant 0 : i32
    %c0_i32_1 = arith.constant 0 : i32
    return %c0_i32, %c0_i32_0 : i32, i32
  }
  func.func @transform_8(%arg0: i32) -> (i32, i32) {
    %c0_i32 = arith.constant 0 : i32
    %c0_i32_0 = arith.constant 0 : i32
    %c0_i32_1 = arith.constant 0 : i32
    return %c0_i32, %c0_i32_0 : i32, i32
  }
  func.func @transform_9(%arg0: i32) -> (i32, i32, i32) {
    %c0_i32 = arith.constant 0 : i32
    %c0_i32_0 = arith.constant 0 : i32
    %c0_i32_1 = arith.constant 0 : i32
    return %arg0, %c0_i32, %c0_i32_0 : i32, i32, i32
  }
}

</mosaic_0001>

<llo_original>
// kernel: tpu_custom_call.1
$region0: #{tpu_custom_call.1}
  #allocation0 [shape = 'u32[]', space=smem, size = 0x4, offset = 0x4, fixed_abs, tag = 'smem constant byte address 0x4 - core index']
  #allocation1 [shape = 'u32[144,128]{1,0:T(1,128)}', space=vmem, size = 0x12000, scoped, tag = 'internal scratch']
  #allocation2 [shape = 'bf16[16,512]{1,0:T(16,128)(2,1)}', space=vmem, size = 0x4000, scoped, tag = 'scratch operand']
  #allocation3 [shape = 'bf16[40,256]{1,0:T(8,128)(2,1)}', space=vmem, size = 0x5000, scoped, tag = 'scratch operand']
  %s0 = inlined_call_operand.vmem [shape: bf16[2,16,256], index: 0, kind: input, shape index: {}]
  %s1 = inlined_call_operand.vmem [shape: bf16[9,8,16], index: 1, kind: input, shape index: {}]
  %s2 = inlined_call_operand.vmem [shape: f32[8,1], index: 2, kind: input, shape index: {}]
  %s3 = inlined_call_operand.vmem [shape: bf16[9,8,8], index: 3, kind: input, shape index: {}]
  %s4 = inlined_call_operand.vmem [shape: f32[8,1], index: 4, kind: input, shape index: {}]
  %s5 = inlined_call_operand.vmem [shape: bf16[9,8,8], index: 5, kind: input, shape index: {}]
  %s6 = inlined_call_operand.vmem [shape: f32[8,1], index: 6, kind: input, shape index: {}]
  %s7 = inlined_call_operand.vmem [shape: bf16[16,40], index: 7, kind: input, shape index: {}]
  %s8 = inlined_call_operand.vmem [shape: f32[16,1], index: 8, kind: input, shape index: {}]
  %s9 = inlined_call_operand.hbm [shape: bf16[2,16,256], index: 9, kind: output, shape index: {}]
  %s10 = sld [smem:[#allocation0]]
  $region69: #{tpu_custom_call.1} parent=0
    _
  %s12 = ssub.s32 1, %s10
  %s13 = scalar_select 0, %s12, %s10
  $region1: #{tpu_custom_call.1} parent=0
    #allocation4 [shape = 'u8[16384]{0}', space=vmem, size = 0x4000, scoped, tag = 'output window, operand 0']
    #allocation5 [shape = 's32[2]{0}', space=sflag, size = 0x8, scoped, tag = 'scoped memory for tpu_custom_call.1']
    %14 = vsyncpa [#allocation5], 0
    %s15 = scalar_lea.sflag [#allocation5], 1
    %16 = vsyncpa %s15, 0
    loop: start=0, step=1, limit=4
    $region2: #{tpu_custom_call.1} parent=1 // loop_pre_header
      _
    $region3: #{tpu_custom_call.1} parent=1 // loop_header
      %s18 = sphi 0, %s22
      %p19 = scmp.ge.s32.totalorder %s18, 4
      %s28 = sphi 0, %s30
      %s31 = sphi 0, %s28
      %s32 = sphi 0, %s31
      %s48 = sphi 0, %s32
      %s52 = sphi 0, %s52
      %s54 = sphi 0, %s52
      %s55 = sphi 0, %s54
      %s69 = sphi 0, %s55
      %s73 = sphi 0, %s73
      %s75 = sphi 0, %s73
      %s76 = sphi 0, %s75
      %s90 = sphi 0, %s76
      %s94 = sphi 0, %s94
      %s96 = sphi 0, %s94
      %s97 = sphi 0, %s96
      %s111 = sphi 0, %s97
      %s115 = sphi 0, %s115
      %s117 = sphi 0, %s115
      %s118 = sphi 0, %s117
      %s132 = sphi 0, %s118
      %s136 = sphi 0, %s136
      %s138 = sphi 0, %s136
      %s139 = sphi 0, %s138
      %s153 = sphi 0, %s139
      %s157 = sphi 0, %s157
      %s159 = sphi 0, %s157
      %s160 = sphi 0, %s159
      %s174 = sphi 0, %s160
      %s178 = sphi 0, %s178
      %s180 = sphi 0, %s178
      %s181 = sphi 0, %s180
      %s195 = sphi 0, %s181
      %s199 = sphi 0, %s199
      %s201 = sphi 0, %s199
      %s202 = sphi 0, %s201
      %s216 = sphi 0, %s202
      %s222 = sphi 0, %s224
      %s225 = sphi 0, %s222
      %s226 = sphi 0, %s225
      %s242 = sphi 0, %s226
    $region4: #{tpu_custom_call.1} parent=1 // loop_header_branch
      %21 = sbr.rel (%p19) target = $region8
    $region5: #{tpu_custom_call.1} parent=1 // loop_body
      %s23 = ssub.s32 %s18, 1
      %s24 = ssub.s32 %s18, 2
      %s25 = sadd.s32 %s18, 1
      %s26 = ssub.s32 %s18, %s25
      %p27 = scmp.eq.s32.totalorder %s26, 0
      %s29 = sadd.s32 %s28, 1
      %s30 = scalar_select %p27, %s28, %s29
      %p33 = pneg %p27
      %p34 = scmp.eq.s32.totalorder %s18, 1
      %p35 = por %p33, %p34
      %p36 = scmp.ne.s32.totalorder %s28, %s31
      %p37 = scmp.eq.s32.totalorder %s18, 0
      %p38 = por %p36, %p37
      %p39 = scmp.ne.s32.totalorder %s28, %s31
      %p40 = scmp.eq.s32.totalorder %s23, 1
      %p41 = por %p39, %p40
      %p42 = scmp.ne.s32.totalorder %s31, %s32
      %p43 = scmp.eq.s32.totalorder %s23, 0
      %p44 = por %p42, %p43
      %p45 = scmp.ne.s32.totalorder %s31, %s32
      %p46 = scmp.eq.s32.totalorder %s24, 1
      %p47 = por %p45, %p46
      %p49 = scmp.ne.s32.totalorder %s32, %s48
      %p50 = scmp.eq.s32.totalorder %s24, 0
      %p51 = por %p49, %p50
      %s53 = sadd.s32 %s52, 1
      %p56 = scmp.eq.s32.totalorder %s18, 1
      %p57 = scmp.ne.s32.totalorder %s52, %s54
      %p58 = scmp.eq.s32.totalorder %s18, 0
      %p59 = por %p57, %p58
      %p60 = scmp.ne.s32.totalorder %s52, %s54
      %p61 = scmp.eq.s32.totalorder %s23, 1
      %p62 = por %p60, %p61
      %p63 = scmp.ne.s32.totalorder %s54, %s55
      %p64 = scmp.eq.s32.totalorder %s23, 0
      %p65 = por %p63, %p64
      %p66 = scmp.ne.s32.totalorder %s54, %s55
      %p67 = scmp.eq.s32.totalorder %s24, 1
      %p68 = por %p66, %p67
      %p70 = scmp.ne.s32.totalorder %s55, %s69
      %p71 = scmp.eq.s32.totalorder %s24, 0
      %p72 = por %p70, %p71
      %s74 = sadd.s32 %s73, 1
      %p77 = scmp.eq.s32.totalorder %s18, 1
      %p78 = scmp.ne.s32.totalorder %s73, %s75
      %p79 = scmp.eq.s32.totalorder %s18, 0
      %p80 = por %p78, %p79
      %p81 = scmp.ne.s32.totalorder %s73, %s75
      %p82 = scmp.eq.s32.totalorder %s23, 1
      %p83 = por %p81, %p82
      %p84 = scmp.ne.s32.totalorder %s75, %s76
      %p85 = scmp.eq.s32.totalorder %s23, 0
      %p86 = por %p84, %p85
      %p87 = scmp.ne.s32.totalorder %s75, %s76
      %p88 = scmp.eq.s32.totalorder %s24, 1
      %p89 = por %p87, %p88
      %p91 = scmp.ne.s32.totalorder %s76, %s90
      %p92 = scmp.eq.s32.totalorder %s24, 0
      %p93 = por %p91, %p92
      %s95 = sadd.s32 %s94, 1
      %p98 = scmp.eq.s32.totalorder %s18, 1
      %p99 = scmp.ne.s32.totalorder %s94, %s96
      %p100 = scmp.eq.s32.totalorder %s18, 0
      %p101 = por %p99, %p100
      %p102 = scmp.ne.s32.totalorder %s94, %s96
      %p103 = scmp.eq.s32.totalorder %s23, 1
      %p104 = por %p102, %p103
      %p105 = scmp.ne.s32.totalorder %s96, %s97
      %p106 = scmp.eq.s32.totalorder %s23, 0
      %p107 = por %p105, %p106
      %p108 = scmp.ne.s32.totalorder %s96, %s97
      %p109 = scmp.eq.s32.totalorder %s24, 1
      %p110 = por %p108, %p109
      %p112 = scmp.ne.s32.totalorder %s97, %s111
      %p113 = scmp.eq.s32.totalorder %s24, 0
      %p114 = por %p112, %p113
      %s116 = sadd.s32 %s115, 1
      %p119 = scmp.eq.s32.totalorder %s18, 1
      %p120 = scmp.ne.s32.totalorder %s115, %s117
      %p121 = scmp.eq.s32.totalorder %s18, 0
      %p122 = por %p120, %p121
      %p123 = scmp.ne.s32.totalorder %s115, %s117
      %p124 = scmp.eq.s32.totalorder %s23, 1
      %p125 = por %p123, %p124
      %p126 = scmp.ne.s32.totalorder %s117, %s118
      %p127 = scmp.eq.s32.totalorder %s23, 0
      %p128 = por %p126, %p127
      %p129 = scmp.ne.s32.totalorder %s117, %s118
      %p130 = scmp.eq.s32.totalorder %s24, 1
      %p131 = por %p129, %p130
      %p133 = scmp.ne.s32.totalorder %s118, %s132
      %p134 = scmp.eq.s32.totalorder %s24, 0
      %p135 = por %p133, %p134
      %s137 = sadd.s32 %s136, 1
      %p140 = scmp.eq.s32.totalorder %s18, 1
      %p141 = scmp.ne.s32.totalorder %s136, %s138
      %p142 = scmp.eq.s32.totalorder %s18, 0
      %p143 = por %p141, %p142
      %p144 = scmp.ne.s32.totalorder %s136, %s138
      %p145 = scmp.eq.s32.totalorder %s23, 1
      %p146 = por %p144, %p145
      %p147 = scmp.ne.s32.totalorder %s138, %s139
      %p148 = scmp.eq.s32.totalorder %s23, 0
      %p149 = por %p147, %p148
      %p150 = scmp.ne.s32.totalorder %s138, %s139
      %p151 = scmp.eq.s32.totalorder %s24, 1
      %p152 = por %p150, %p151
      %p154 = scmp.ne.s32.totalorder %s139, %s153
      %p155 = scmp.eq.s32.totalorder %s24, 0
      %p156 = por %p154, %p155
      %s158 = sadd.s32 %s157, 1
      %p161 = scmp.eq.s32.totalorder %s18, 1
      %p162 = scmp.ne.s32.totalorder %s157, %s159
      %p163 = scmp.eq.s32.totalorder %s18, 0
      %p164 = por %p162, %p163
      %p165 = scmp.ne.s32.totalorder %s157, %s159
      %p166 = scmp.eq.s32.totalorder %s23, 1
      %p167 = por %p165, %p166
      %p168 = scmp.ne.s32.totalorder %s159, %s160
      %p169 = scmp.eq.s32.totalorder %s23, 0
      %p170 = por %p168, %p169
      %p171 = scmp.ne.s32.totalorder %s159, %s160
      %p172 = scmp.eq.s32.totalorder %s24, 1
      %p173 = por %p171, %p172
      %p175 = scmp.ne.s32.totalorder %s160, %s174
      %p176 = scmp.eq.s32.totalorder %s24, 0
      %p177 = por %p175, %p176
      %s179 = sadd.s32 %s178, 1
      %p182 = scmp.eq.s32.totalorder %s18, 1
      %p183 = scmp.ne.s32.totalorder %s178, %s180
      %p184 = scmp.eq.s32.totalorder %s18, 0
      %p185 = por %p183, %p184
      %p186 = scmp.ne.s32.totalorder %s178, %s180
      %p187 = scmp.eq.s32.totalorder %s23, 1
      %p188 = por %p186, %p187
      %p189 = scmp.ne.s32.totalorder %s180, %s181
      %p190 = scmp.eq.s32.totalorder %s23, 0
      %p191 = por %p189, %p190
      %p192 = scmp.ne.s32.totalorder %s180, %s181
      %p193 = scmp.eq.s32.totalorder %s24, 1
      %p194 = por %p192, %p193
      %p196 = scmp.ne.s32.totalorder %s181, %s195
      %p197 = scmp.eq.s32.totalorder %s24, 0
      %p198 = por %p196, %p197
      %s200 = sadd.s32 %s199, 1
      %p203 = scmp.eq.s32.totalorder %s18, 1
      %p204 = scmp.ne.s32.totalorder %s199, %s201
      %p205 = scmp.eq.s32.totalorder %s18, 0
      %p206 = por %p204, %p205
      %p207 = scmp.ne.s32.totalorder %s199, %s201
      %p208 = scmp.eq.s32.totalorder %s23, 1
      %p209 = por %p207, %p208
      %p210 = scmp.ne.s32.totalorder %s201, %s202
      %p211 = scmp.eq.s32.totalorder %s23, 0
      %p212 = por %p210, %p211
      %p213 = scmp.ne.s32.totalorder %s201, %s202
      %p214 = scmp.eq.s32.totalorder %s24, 1
      %p215 = por %p213, %p214
      %p217 = scmp.ne.s32.totalorder %s202, %s216
      %p218 = scmp.eq.s32.totalorder %s24, 0
      %p219 = por %p217, %p218
      %s220 = ssub.s32 %s18, %s25
      %p221 = scmp.eq.s32.totalorder %s220, 0
      %s223 = sadd.s32 %s222, 1
      %s224 = scalar_select %p221, %s222, %s223
      %p227 = pneg %p221
      %p228 = scmp.eq.s32.totalorder %s18, 1
      %p229 = por %p227, %p228
      %p230 = scmp.ne.s32.totalorder %s222, %s225
      %p231 = scmp.eq.s32.totalorder %s18, 0
      %p232 = por %p230, %p231
      %p233 = scmp.ne.s32.totalorder %s222, %s225
      %p234 = scmp.eq.s32.totalorder %s23, 1
      %p235 = por %p233, %p234
      %p236 = scmp.ne.s32.totalorder %s225, %s226
      %p237 = scmp.eq.s32.totalorder %s23, 0
      %p238 = por %p236, %p237
      %p239 = scmp.ne.s32.totalorder %s225, %s226
      %p240 = scmp.eq.s32.totalorder %s24, 1
      %p241 = por %p239, %p240
      %p243 = scmp.ne.s32.totalorder %s226, %s242
      %p244 = scmp.eq.s32.totalorder %s24, 0
      %p245 = por %p243, %p244
      %p246 = scmp.le.s32.totalorder 1, %s18
      %p247 = scmp.lt.s32.totalorder %s18, 3
      %p248 = pnand %p246, %p247
      %p249 = pneg %p248
      // Predicated region
      $region9: #{tpu_custom_call.1} parent=5 // pred_check
        _
      $region10: #{tpu_custom_call.1} parent=5 // pred_check_branch
        %251 = sbr.rel (%p248) target = $region12
      $region11: #{tpu_custom_call.1} parent=5 // pred_region
        %s252 = ssub.s32 %s18, 1
        // Predicated region
        $region13: #{tpu_custom_call.1} parent=11 // pred_check
          %p253 = pneg %p65
        $region14: #{tpu_custom_call.1} parent=11 // pred_check_branch
          %255 = sbr.rel (%p253) target = $region16
        $region15: #{tpu_custom_call.1} parent=11 // pred_region
          _
        $region16: #{tpu_custom_call.1} parent=11 // pred_fallthru
          _
        // Predicated region
        $region17: #{tpu_custom_call.1} parent=11 // pred_check
          %p256 = pneg %p86
        $region18: #{tpu_custom_call.1} parent=11 // pred_check_branch
          %258 = sbr.rel (%p256) target = $region20
        $region19: #{tpu_custom_call.1} parent=11 // pred_region
          _
        $region20: #{tpu_custom_call.1} parent=11 // pred_fallthru
          _
        // Predicated region
        $region21: #{tpu_custom_call.1} parent=11 // pred_check
          %p259 = pneg %p107
        $region22: #{tpu_custom_call.1} parent=11 // pred_check_branch
          %261 = sbr.rel (%p259) target = $region24
        $region23: #{tpu_custom_call.1} parent=11 // pred_region
          _
        $region24: #{tpu_custom_call.1} parent=11 // pred_fallthru
          _
        // Predicated region
        $region25: #{tpu_custom_call.1} parent=11 // pred_check
          %p262 = pneg %p128
        $region26: #{tpu_custom_call.1} parent=11 // pred_check_branch
          %264 = sbr.rel (%p262) target = $region28
        $region27: #{tpu_custom_call.1} parent=11 // pred_region
          _
        $region28: #{tpu_custom_call.1} parent=11 // pred_fallthru
          _
        // Predicated region
        $region29: #{tpu_custom_call.1} parent=11 // pred_check
          %p265 = pneg %p149
        $region30: #{tpu_custom_call.1} parent=11 // pred_check_branch
          %267 = sbr.rel (%p265) target = $region32
        $region31: #{tpu_custom_call.1} parent=11 // pred_region
          _
        $region32: #{tpu_custom_call.1} parent=11 // pred_fallthru
          _
        // Predicated region
        $region33: #{tpu_custom_call.1} parent=11 // pred_check
          %p268 = pneg %p170
        $region34: #{tpu_custom_call.1} parent=11 // pred_check_branch
          %270 = sbr.rel (%p268) target = $region36
        $region35: #{tpu_custom_call.1} parent=11 // pred_region
          _
        $region36: #{tpu_custom_call.1} parent=11 // pred_fallthru
          _
        // Predicated region
        $region37: #{tpu_custom_call.1} parent=11 // pred_check
          %p271 = pneg %p191
        $region38: #{tpu_custom_call.1} parent=11 // pred_check_branch
          %273 = sbr.rel (%p271) target = $region40
        $region39: #{tpu_custom_call.1} parent=11 // pred_region
          _
        $region40: #{tpu_custom_call.1} parent=11 // pred_fallthru
          _
        // Predicated region
        $region41: #{tpu_custom_call.1} parent=11 // pred_check
          %p274 = pneg %p212
        $region42: #{tpu_custom_call.1} parent=11 // pred_check_branch
          %276 = sbr.rel (%p274) target = $region44
        $region43: #{tpu_custom_call.1} parent=11 // pred_region
          _
        $region44: #{tpu_custom_call.1} parent=11 // pred_fallthru
          _
      $region12: #{tpu_custom_call.1} parent=5 // pred_fallthru
        _
      %p277 = scmp.lt.s32.totalorder %s18, 2
      // Predicated region
      $region45: #{tpu_custom_call.1} parent=5 // pred_check
        %p278 = pneg %p277
      $region46: #{tpu_custom_call.1} parent=5 // pred_check_branch
        %280 = sbr.rel (%p278) target = $region48
      $region47: #{tpu_custom_call.1} parent=5 // pred_region
        // Predicated region
        $region49: #{tpu_custom_call.1} parent=47 // pred_check
          %p281 = pneg %p38
        $region50: #{tpu_custom_call.1} parent=47 // pred_check_branch
          %283 = sbr.rel (%p281) target = $region52
        $region51: #{tpu_custom_call.1} parent=47 // pred_region
          %p284 = scmp.lt.s32.totalorder %s18, 1
          %s285 = scalar_select %p284, %s18, 1
          %s286 = smul.addr %s285, 4
          %s287 = smul.addr %s286, 4
          %s288 = scalar_lea.vmem %s0, %s287
        $region52: #{tpu_custom_call.1} parent=47 // pred_fallthru
          _
      $region48: #{tpu_custom_call.1} parent=5 // pred_fallthru
        _
      %p289 = scmp.le.s32.totalorder 1, %s18
      %p290 = scmp.lt.s32.totalorder %s18, 3
      %p291 = pnand %p289, %p290
      %p292 = pneg %p291
      // Predicated region
      $region53: #{tpu_custom_call.1} parent=5 // pred_check
        _
      $region54: #{tpu_custom_call.1} parent=5 // pred_check_branch
        %294 = sbr.rel (%p291) target = $region56
      $region55: #{tpu_custom_call.1} parent=5 // pred_region
        %s295 = ssub.s32 %s18, 1
        %p296 = scmp.lt.s32.totalorder %s23, 1
        %s297 = scalar_select %p296, %s23, 1
        %s298 = smul.addr %s297, 4
        %s299 = smul.addr %s298, 4
        %s300 = scalar_lea.vmem %s0, %s299
        %p301 = pneg %p44
        %p302 = pneg %p41
        %p303 = pneg %p65
        %p304 = pneg %p62
        %p305 = pneg %p86
        %p306 = pneg %p83
        %p307 = pneg %p107
        %p308 = pneg %p104
        %p309 = pneg %p128
        %p310 = pneg %p125
        %p311 = pneg %p149
        %p312 = pneg %p146
        %p313 = pneg %p170
        %p314 = pneg %p167
        %p315 = pneg %p191
        %p316 = pneg %p188
        %p317 = pneg %p212
        %p318 = pneg %p209
        %p319 = pneg %p238
        %p320 = pneg %p235
        %s321 = sand.u32 %s225, 1
        %s322 = scalar_lea.sflag [#allocation5], %s321
        %s323 = sand.u32 %s225, 1
        %s324 = smul.addr %s323, 16
        %s325 = scalar_lea.vmem [#allocation4], %s324
        %p326 = scmp.lt.s32.totalorder %s23, 1
        %s327 = scalar_select %p326, %s23, 1
        %s328 = smul.addr %s327, 4
        %s329 = smul.addr %s328, 4
        %s330 = scalar_lea.vmem %s0, %s329
        %v334 = vlaneseq
        %v335 = vand.u32 %v334, 127
        %v336 = vadd.s32 %v335, 128
        %vm337 = vcmp.lt.s32.totalorder %v335, 0
        %v338 = vsub.s32 0, %v335
        %v339 = vsel %vm337, %v338, %v335
        %v340 = vshrl.u32 %v339, 4
        %v341 = vand.u32 %v339, 15
        %v342 = vsub.s32 0, %v341
        %v343 = vsel %vm337, %v342, %v341
        %vm344 = vcmp.lt.s32.totalorder %v336, 0
        %v345 = vsub.s32 0, %v336
        %v346 = vsel %vm344, %v345, %v336
        %v347 = vshrl.u32 %v346, 4
        %v348 = vand.u32 %v346, 15
        %v349 = vsub.s32 0, %v348
        %v350 = vsel %vm344, %v349, %v348
        %vm351 = vcmp.ne.s32.totalorder %v343, 0
        %vm352 = vcmp.ne.s32.totalorder %v350, 0
        %vm353 = vcmp.lt.s32.totalorder %v343, 0
        %vm354 = vcmp.lt.s32.totalorder %v350, 0
        %vm355 = vmand %vm353, %vm351
        %vm356 = vmand %vm354, %vm352
        %v357 = vadd.s32 %v343, 16
        %v358 = vadd.s32 %v350, 16
        %v359 = vsel %vm355, %v357, %v343
        %v360 = vsel %vm356, %v358, %v350
        %vm361 = vcmp.ge.s32.totalorder %v359, 1
        %vm362 = vcmp.ge.s32.totalorder %v360, 1
        %vm363 = vcmp.le.s32.totalorder %v359, 14
        %vm364 = vcmp.le.s32.totalorder %v360, 14
        %365 = vst [vmem:[#allocation2] sm:$0xff] 0
        %366 = vst [vmem:[#allocation2 + $0x18] sm:$0xff] 0
        %v367 = vld [vmem:[%s330] sm:$0xff]
        %v368 = vld [vmem:[%s330 + $0x8] sm:$0xff]
        %369 = vst [vmem:[#allocation3] sm:$0xff] %v367
        %370 = vst [vmem:[#allocation3 + $0x8] sm:$0xff] %v368
        %v373 = vunpack.c.l.b16 %v367
        %v374 = vunpack.c.h.b16 %v367
        %v375 = vunpack.c.l.b16 %v368
        %v376 = vunpack.c.h.b16 %v368
        %v377 = vpack.c.b16 %v375, %v373
        %v378 = vpack.c.b16 %v376, %v374
        %381 = vst [vmem:[#allocation2 + $0x8] sm:$0xff] %v377
        %382 = vst [vmem:[#allocation2 + $0x10] sm:$0xff] %v378
        %v383 = vld [vmem:[#allocation2] sm:$0xff]
        %v384 = vld [vmem:[#allocation2 + $0x8] sm:$0xff]
        %v385 = vld [vmem:[#allocation2 + $0x10] sm:$0xff]
        %v386 = vsel %vm361, 1, 0
        %v387 = vsel %vm362, 1, 0
        %vm388 = vcmp.eq.s32.totalorder %v386, 1
        %vm389 = vcmp.eq.s32.totalorder %v387, 1
        %vm390 = vmpackc.low %vm389, %vm388
        %v391 = vsel %vm390, 65537, 0
        %v392 = vlaneseq
        %v393 = vshrl.u32 %v392, 7
        %v394 = vsub.s32 0, %v393
        %v395 = vrot.slane %v391, %v394
        %v396 = vlaneseq
        %v397 = vshrl.u32 %v396, 7
        %v398 = vsub.s32 4, %v397
        %v399 = vrot.slane %v391, %v398
        %400 = vrot.lane.b32.xlu0 %v395, 111
        %v401 = vpop.permute.xlu0 %400
        %402 = vrot.lane.b32.xlu0 %v399, 111
        %v403 = vpop.permute.xlu0 %402
        %vm404 = vcmask 908288
        %v405 = vsel %vm404, %v401, %v403
        %vm406 = vcmp.ne.s16.totalorder %v401, 0
        %vm407 = vcmp.ne.s16.totalorder %v405, 0
        %vm408 = vcmp.ne.s16.totalorder %v403, 0
        %v409 = vsel %vm406, %v383, 0
        %v410 = vsel %vm407, %v384, 0
        %v411 = vsel %vm408, %v385, 0
        %v412 = vld [vmem:[%s1] sm:$0xf]
        %s413 = scalar_lea.vmem %s1, 4
        %v414 = vld [vmem:[%s413] sm:$0xf]
        %418 = vrot.lane.b32.xlu0 %v383, 16
        %v419 = vpop.permute.xlu0 %418
        %420 = vrot.lane.b32.xlu0 %v384, 16
        %v421 = vpop.permute.xlu0 %420
        %422 = vrot.lane.b32.xlu0 %v385, 16
        %v423 = vpop.permute.xlu0 %422
        %vm424 = vcmask 130048
        %v425 = vsel %vm424, %v419, %v421
        %v426 = vsel %vm424, %v421, %v423
        %vm429 = vcmask 130048
        %v431 = vsel %vm429, %v414, 0
        %433 = vmatprep.subr.bf16.mxu0 %v426
        %434 = vmatpush1.bf16.msra.mxu0 %v425
        %435 = vmatprep.subr.bf16.mxu0 0
        %436 = vmatpush1.bf16.msra.mxu0 0
        %437 = vmatprep.subr.bf16.mxu0 0
        %438 = vmatpush1.bf16.msra.mxu0 0
        %439 = vmatprep.subr.bf16.mxu0 0
        %440 = vmatpush1.bf16.msra.mxu0 0
        %441 = vmatprep.subr.bf16.mxu0 0
        %442 = vmatpush1.bf16.msra.mxu0 0
        %443 = vmatprep.subr.bf16.mxu0 0
        %444 = vmatpush1.bf16.msra.mxu0 0
        %445 = vmatprep.subr.bf16.mxu0 0
        %446 = vmatpush1.bf16.msra.mxu0 0
        %447 = vmatprep.subr.bf16.mxu0 0
        %448 = vmatpush1.bf16.msra.mxu0 0
        %449 = vmatprep.subr.bf16.mxu0 0
        %450 = vmatpush1.bf16.msra.mxu0 0
        %451 = vmatprep.subr.bf16.mxu0 0
        %452 = vmatpush1.bf16.msra.mxu0 0
        %453 = vmatprep.subr.bf16.mxu0 0
        %454 = vmatpush1.bf16.msra.mxu0 0
        %455 = vmatprep.subr.bf16.mxu0 0
        %456 = vmatpush1.bf16.msra.mxu0 0
        %457 = vmatprep.subr.bf16.mxu0 0
        %458 = vmatpush1.bf16.msra.mxu0 0
        %459 = vmatprep.subr.bf16.mxu0 0
        %460 = vmatpush1.bf16.msra.mxu0 0
        %461 = vmatprep.subr.bf16.mxu0 0
        %462 = vmatpush1.bf16.msra.mxu0 0
        %463 = vmatprep.subr.bf16.mxu0 0
        %464 = vmatpush1.bf16.msra.mxu0 0
        %465 = vmatprep.mubr.bf16.mxu0 0
        %466 = vmatmul.mubr.bf16.gmra.mrb[0].mxu0 %v431
        %v467 = vpop.f32.mrb[0].mxu0
        %v468 = vadd.f32 0.0, %v467
        %v469 = vpop.f32.mrb[0].mxu0
        %v470 = vadd.f32 0.0, %v469
        %v471 = vpop.f32.mrb[0].mxu0
        %v472 = vpop.f32.mrb[0].mxu0
        %473 = vdwg.mxu0
        %477 = vrot.lane.b32.xlu0 %v409, 17
        %v478 = vpop.permute.xlu0 %477
        %479 = vrot.lane.b32.xlu0 %v410, 17
        %v480 = vpop.permute.xlu0 %479
        %481 = vrot.lane.b32.xlu0 %v411, 17
        %v482 = vpop.permute.xlu0 %481
        %vm483 = vcmask 138240
        %v484 = vsel %vm483, %v478, %v480
        %v485 = vsel %vm483, %v480, %v482
        %v489 = vsel %vm429, %v412, 0
        %491 = vmatprep.subr.bf16.mxu0 %v485
        %492 = vmatpush1.bf16.msra.mxu0 %v484
        %493 = vmatprep.subr.bf16.mxu0 0
        %494 = vmatpush1.bf16.msra.mxu0 0
        %495 = vmatprep.subr.bf16.mxu0 0
        %496 = vmatpush1.bf16.msra.mxu0 0
        %497 = vmatprep.subr.bf16.mxu0 0
        %498 = vmatpush1.bf16.msra.mxu0 0
        %499 = vmatprep.subr.bf16.mxu0 0
        %500 = vmatpush1.bf16.msra.mxu0 0
        %501 = vmatprep.subr.bf16.mxu0 0
        %502 = vmatpush1.bf16.msra.mxu0 0
        %503 = vmatprep.subr.bf16.mxu0 0
        %504 = vmatpush1.bf16.msra.mxu0 0
        %505 = vmatprep.subr.bf16.mxu0 0
        %506 = vmatpush1.bf16.msra.mxu0 0
        %507 = vmatprep.subr.bf16.mxu0 0
        %508 = vmatpush1.bf16.msra.mxu0 0
        %509 = vmatprep.subr.bf16.mxu0 0
        %510 = vmatpush1.bf16.msra.mxu0 0
        %511 = vmatprep.subr.bf16.mxu0 0
        %512 = vmatpush1.bf16.msra.mxu0 0
        %513 = vmatprep.subr.bf16.mxu0 0
        %514 = vmatpush1.bf16.msra.mxu0 0
        %515 = vmatprep.subr.bf16.mxu0 0
        %516 = vmatpush1.bf16.msra.mxu0 0
        %517 = vmatprep.subr.bf16.mxu0 0
        %518 = vmatpush1.bf16.msra.mxu0 0
        %519 = vmatprep.subr.bf16.mxu0 0
        %520 = vmatpush1.bf16.msra.mxu0 0
        %521 = vmatprep.subr.bf16.mxu0 0
        %522 = vmatpush1.bf16.msra.mxu0 0
        %523 = vmatprep.mubr.bf16.mxu0 0
        %524 = vmatmul.mubr.bf16.gmra.mrb[0].mxu0 %v489
        %v525 = vpop.f32.mrb[0].mxu0
        %v526 = vadd.f32 %v468, %v525
        %v527 = vpop.f32.mrb[0].mxu0
        %v528 = vadd.f32 %v470, %v527
        %v529 = vpop.f32.mrb[0].mxu0
        %v530 = vpop.f32.mrb[0].mxu0
        %531 = vdwg.mxu0
        %v532 = vsel %vm363, 1, 0
        %v533 = vsel %vm364, 1, 0
        %vm534 = vcmp.eq.s32.totalorder %v532, 1
        %vm535 = vcmp.eq.s32.totalorder %v533, 1
        %vm536 = vmpackc.low %vm535, %vm534
        %v537 = vsel %vm536, 65537, 0
        %v538 = vlaneseq
        %v539 = vshrl.u32 %v538, 7
        %v540 = vsub.s32 0, %v539
        %v541 = vrot.slane %v537, %v540
        %v542 = vlaneseq
        %v543 = vshrl.u32 %v542, 7
        %v544 = vsub.s32 4, %v543
        %v545 = vrot.slane %v537, %v544
        %546 = vrot.lane.b32.xlu0 %v541, 113
        %v547 = vpop.permute.xlu0 %546
        %548 = vrot.lane.b32.xlu0 %v545, 113
        %v549 = vpop.permute.xlu0 %548
        %vm550 = vcmask 924672
        %v551 = vsel %vm550, %v547, %v549
        %vm552 = vcmp.ne.s16.totalorder %v547, 0
        %vm553 = vcmp.ne.s16.totalorder %v551, 0
        %vm554 = vcmp.ne.s16.totalorder %v549, 0
        %v555 = vsel %vm552, %v383, 0
        %v556 = vsel %vm553, %v384, 0
        %v557 = vsel %vm554, %v385, 0
        %s558 = scalar_lea.vmem %s1, 8
        %v559 = vld [vmem:[%s558] sm:$0xf]
        %563 = vrot.lane.b32.xlu0 %v555, 15
        %v564 = vpop.permute.xlu0 %563
        %565 = vrot.lane.b32.xlu0 %v556, 15
        %v566 = vpop.permute.xlu0 %565
        %567 = vrot.lane.b32.xlu0 %v557, 15
        %v568 = vpop.permute.xlu0 %567
        %vm569 = vcmask 121856
        %v570 = vsel %vm569, %v564, %v566
        %v571 = vsel %vm569, %v566, %v568
        %v575 = vsel %vm429, %v559, 0
        %577 = vmatprep.subr.bf16.mxu0 %v571
        %578 = vmatpush1.bf16.msra.mxu0 %v570
        %579 = vmatprep.subr.bf16.mxu0 0
        %580 = vmatpush1.bf16.msra.mxu0 0
        %581 = vmatprep.subr.bf16.mxu0 0
        %582 = vmatpush1.bf16.msra.mxu0 0
        %583 = vmatprep.subr.bf16.mxu0 0
        %584 = vmatpush1.bf16.msra.mxu0 0
        %585 = vmatprep.subr.bf16.mxu0 0
        %586 = vmatpush1.bf16.msra.mxu0 0
        %587 = vmatprep.subr.bf16.mxu0 0
        %588 = vmatpush1.bf16.msra.mxu0 0
        %589 = vmatprep.subr.bf16.mxu0 0
        %590 = vmatpush1.bf16.msra.mxu0 0
        %591 = vmatprep.subr.bf16.mxu0 0
        %592 = vmatpush1.bf16.msra.mxu0 0
        %593 = vmatprep.subr.bf16.mxu0 0
        %594 = vmatpush1.bf16.msra.mxu0 0
        %595 = vmatprep.subr.bf16.mxu0 0
        %596 = vmatpush1.bf16.msra.mxu0 0
        %597 = vmatprep.subr.bf16.mxu0 0
        %598 = vmatpush1.bf16.msra.mxu0 0
        %599 = vmatprep.subr.bf16.mxu0 0
        %600 = vmatpush1.bf16.msra.mxu0 0
        %601 = vmatprep.subr.bf16.mxu0 0
        %602 = vmatpush1.bf16.msra.mxu0 0
        %603 = vmatprep.subr.bf16.mxu0 0
        %604 = vmatpush1.bf16.msra.mxu0 0
        %605 = vmatprep.subr.bf16.mxu0 0
        %606 = vmatpush1.bf16.msra.mxu0 0
        %607 = vmatprep.subr.bf16.mxu0 0
        %608 = vmatpush1.bf16.msra.mxu0 0
        %609 = vmatprep.mubr.bf16.mxu0 0
        %610 = vmatmul.mubr.bf16.gmra.mrb[0].mxu0 %v575
        %v611 = vpop.f32.mrb[0].mxu0
        %v612 = vadd.f32 0.0, %v611
        %v613 = vpop.f32.mrb[0].mxu0
        %v614 = vadd.f32 0.0, %v613
        %v615 = vpop.f32.mrb[0].mxu0
        %v616 = vpop.f32.mrb[0].mxu0
        %617 = vdwg.mxu0
        %v618 = vadd.f32 %v526, %v612
        %v619 = vadd.f32 %v528, %v614
        %620 = vrot.lane.b32.xlu0 %v395, 127
        %v621 = vpop.permute.xlu0 %620
        %622 = vrot.lane.b32.xlu0 %v399, 127
        %v623 = vpop.permute.xlu0 %622
        %vm624 = vcmask 1039360
        %v625 = vsel %vm624, %v621, %v623
        %vm626 = vcmp.ne.s16.totalorder %v621, 0
        %vm627 = vcmp.ne.s16.totalorder %v625, 0
        %vm628 = vcmp.ne.s16.totalorder %v623, 0
        %v629 = vsel %vm626, %v383, 0
        %v630 = vsel %vm627, %v384, 0
        %v631 = vsel %vm628, %v385, 0
        %s632 = scalar_lea.vmem %s1, 12
        %v633 = vld [vmem:[%s632] sm:$0xf]
        %637 = vrot.lane.b32.xlu0 %v629, 1
        %v638 = vpop.permute.xlu0 %637
        %639 = vrot.lane.b32.xlu0 %v630, 1
        %v640 = vpop.permute.xlu0 %639
        %641 = vrot.lane.b32.xlu0 %v631, 1
        %v642 = vpop.permute.xlu0 %641
        %vm643 = vcmask 7168
        %v644 = vsel %vm643, %v638, %v640
        %v645 = vsel %vm643, %v640, %v642
        %v649 = vsel %vm429, %v633, 0
        %651 = vmatprep.subr.bf16.mxu0 %v645
        %652 = vmatpush1.bf16.msra.mxu0 %v644
        %653 = vmatprep.subr.bf16.mxu0 0
        %654 = vmatpush1.bf16.msra.mxu0 0
        %655 = vmatprep.subr.bf16.mxu0 0
        %656 = vmatpush1.bf16.msra.mxu0 0
        %657 = vmatprep.subr.bf16.mxu0 0
        %658 = vmatpush1.bf16.msra.mxu0 0
        %659 = vmatprep.subr.bf16.mxu0 0
        %660 = vmatpush1.bf16.msra.mxu0 0
        %661 = vmatprep.subr.bf16.mxu0 0
        %662 = vmatpush1.bf16.msra.mxu0 0
        %663 = vmatprep.subr.bf16.mxu0 0
        %664 = vmatpush1.bf16.msra.mxu0 0
        %665 = vmatprep.subr.bf16.mxu0 0
        %666 = vmatpush1.bf16.msra.mxu0 0
        %667 = vmatprep.subr.bf16.mxu0 0
        %668 = vmatpush1.bf16.msra.mxu0 0
        %669 = vmatprep.subr.bf16.mxu0 0
        %670 = vmatpush1.bf16.msra.mxu0 0
        %671 = vmatprep.subr.bf16.mxu0 0
        %672 = vmatpush1.bf16.msra.mxu0 0
        %673 = vmatprep.subr.bf16.mxu0 0
        %674 = vmatpush1.bf16.msra.mxu0 0
        %675 = vmatprep.subr.bf16.mxu0 0
        %676 = vmatpush1.bf16.msra.mxu0 0
        %677 = vmatprep.subr.bf16.mxu0 0
        %678 = vmatpush1.bf16.msra.mxu0 0
        %679 = vmatprep.subr.bf16.mxu0 0
        %680 = vmatpush1.bf16.msra.mxu0 0
        %681 = vmatprep.subr.bf16.mxu0 0
        %682 = vmatpush1.bf16.msra.mxu0 0
        %683 = vmatprep.mubr.bf16.mxu0 0
        %684 = vmatmul.mubr.bf16.gmra.mrb[0].mxu0 %v649
        %v685 = vpop.f32.mrb[0].mxu0
        %v686 = vadd.f32 0.0, %v685
        %v687 = vpop.f32.mrb[0].mxu0
        %v688 = vadd.f32 0.0, %v687
        %v689 = vpop.f32.mrb[0].mxu0
        %v690 = vpop.f32.mrb[0].mxu0
        %691 = vdwg.mxu0
        %v692 = vadd.f32 %v618, %v686
        %v693 = vadd.f32 %v619, %v688
        %s694 = scalar_lea.vmem %s1, 16
        %v695 = vld [vmem:[%s694] sm:$0xf]
        %v697 = vsel %vm429, %v695, 0
        %699 = vmatprep.subr.bf16.mxu0 %v385
        %700 = vmatpush1.bf16.msra.mxu0 %v384
        %701 = vmatprep.subr.bf16.mxu0 0
        %702 = vmatpush1.bf16.msra.mxu0 0
        %703 = vmatprep.subr.bf16.mxu0 0
        %704 = vmatpush1.bf16.msra.mxu0 0
        %705 = vmatprep.subr.bf16.mxu0 0
        %706 = vmatpush1.bf16.msra.mxu0 0
        %707 = vmatprep.subr.bf16.mxu0 0
        %708 = vmatpush1.bf16.msra.mxu0 0
        %709 = vmatprep.subr.bf16.mxu0 0
        %710 = vmatpush1.bf16.msra.mxu0 0
        %711 = vmatprep.subr.bf16.mxu0 0
        %712 = vmatpush1.bf16.msra.mxu0 0
        %713 = vmatprep.subr.bf16.mxu0 0
        %714 = vmatpush1.bf16.msra.mxu0 0
        %715 = vmatprep.subr.bf16.mxu0 0
        %716 = vmatpush1.bf16.msra.mxu0 0
        %717 = vmatprep.subr.bf16.mxu0 0
        %718 = vmatpush1.bf16.msra.mxu0 0
        %719 = vmatprep.subr.bf16.mxu0 0
        %720 = vmatpush1.bf16.msra.mxu0 0
        %721 = vmatprep.subr.bf16.mxu0 0
        %722 = vmatpush1.bf16.msra.mxu0 0
        %723 = vmatprep.subr.bf16.mxu0 0
        %724 = vmatpush1.bf16.msra.mxu0 0
        %725 = vmatprep.subr.bf16.mxu0 0
        %726 = vmatpush1.bf16.msra.mxu0 0
        %727 = vmatprep.subr.bf16.mxu0 0
        %728 = vmatpush1.bf16.msra.mxu0 0
        %729 = vmatprep.subr.bf16.mxu0 0
        %730 = vmatpush1.bf16.msra.mxu0 0
        %731 = vmatprep.mubr.bf16.mxu0 0
        %732 = vmatmul.mubr.bf16.gmra.mrb[0].mxu0 %v697
        %v733 = vpop.f32.mrb[0].mxu0
        %v734 = vadd.f32 0.0, %v733
        %v735 = vpop.f32.mrb[0].mxu0
        %v736 = vadd.f32 0.0, %v735
        %v737 = vpop.f32.mrb[0].mxu0
        %v738 = vpop.f32.mrb[0].mxu0
        %739 = vdwg.mxu0
        %v740 = vadd.f32 %v692, %v734
        %v741 = vadd.f32 %v693, %v736
        %v742 = vld [vmem:[#allocation2 + $0x8] sm:$0xff]
        %v743 = vld [vmem:[#allocation2 + $0x10] sm:$0xff]
        %v744 = vld [vmem:[#allocation2 + $0x18] sm:$0xff]
        %745 = vrot.lane.b32.xlu0 %v541, 1
        %v746 = vpop.permute.xlu0 %745
        %747 = vrot.lane.b32.xlu0 %v545, 1
        %v748 = vpop.permute.xlu0 %747
        %v749 = vsel %vm643, %v746, %v748
        %vm750 = vcmp.ne.s16.totalorder %v746, 0
        %vm751 = vcmp.ne.s16.totalorder %v749, 0
        %vm752 = vcmp.ne.s16.totalorder %v748, 0
        %v753 = vsel %vm750, %v742, 0
        %v754 = vsel %vm751, %v743, 0
        %v755 = vsel %vm752, %v744, 0
        %s756 = scalar_lea.vmem %s1, 20
        %v757 = vld [vmem:[%s756] sm:$0xf]
        %761 = vrot.lane.b32.xlu0 %v753, 127
        %v762 = vpop.permute.xlu0 %761
        %763 = vrot.lane.b32.xlu0 %v754, 127
        %v764 = vpop.permute.xlu0 %763
        %765 = vrot.lane.b32.xlu0 %v755, 127
        %v766 = vpop.permute.xlu0 %765
        %v767 = vsel %vm624, %v762, %v764
        %v768 = vsel %vm624, %v764, %v766
        %v772 = vsel %vm429, %v757, 0
        %774 = vmatprep.subr.bf16.mxu0 %v768
        %775 = vmatpush1.bf16.msra.mxu0 %v767
        %776 = vmatprep.subr.bf16.mxu0 0
        %777 = vmatpush1.bf16.msra.mxu0 0
        %778 = vmatprep.subr.bf16.mxu0 0
        %779 = vmatpush1.bf16.msra.mxu0 0
        %780 = vmatprep.subr.bf16.mxu0 0
        %781 = vmatpush1.bf16.msra.mxu0 0
        %782 = vmatprep.subr.bf16.mxu0 0
        %783 = vmatpush1.bf16.msra.mxu0 0
        %784 = vmatprep.subr.bf16.mxu0 0
        %785 = vmatpush1.bf16.msra.mxu0 0
        %786 = vmatprep.subr.bf16.mxu0 0
        %787 = vmatpush1.bf16.msra.mxu0 0
        %788 = vmatprep.subr.bf16.mxu0 0
        %789 = vmatpush1.bf16.msra.mxu0 0
        %790 = vmatprep.subr.bf16.mxu0 0
        %791 = vmatpush1.bf16.msra.mxu0 0
        %792 = vmatprep.subr.bf16.mxu0 0
        %793 = vmatpush1.bf16.msra.mxu0 0
        %794 = vmatprep.subr.bf16.mxu0 0
        %795 = vmatpush1.bf16.msra.mxu0 0
        %796 = vmatprep.subr.bf16.mxu0 0
        %797 = vmatpush1.bf16.msra.mxu0 0
        %798 = vmatprep.subr.bf16.mxu0 0
        %799 = vmatpush1.bf16.msra.mxu0 0
        %800 = vmatprep.subr.bf16.mxu0 0
        %801 = vmatpush1.bf16.msra.mxu0 0
        %802 = vmatprep.subr.bf16.mxu0 0
        %803 = vmatpush1.bf16.msra.mxu0 0
        %804 = vmatprep.subr.bf16.mxu0 0
        %805 = vmatpush1.bf16.msra.mxu0 0
        %806 = vmatprep.mubr.bf16.mxu0 0
        %807 = vmatmul.mubr.bf16.gmra.mrb[0].mxu0 %v772
        %v808 = vpop.f32.mrb[0].mxu0
        %v809 = vadd.f32 0.0, %v808
        %v810 = vpop.f32.mrb[0].mxu0
        %v811 = vadd.f32 0.0, %v810
        %v812 = vpop.f32.mrb[0].mxu0
        %v813 = vpop.f32.mrb[0].mxu0
        %814 = vdwg.mxu0
        %v815 = vadd.f32 %v740, %v809
        %v816 = vadd.f32 %v741, %v811
        %817 = vrot.lane.b32.xlu0 %v395, 15
        %v818 = vpop.permute.xlu0 %817
        %819 = vrot.lane.b32.xlu0 %v399, 15
        %v820 = vpop.permute.xlu0 %819
        %v821 = vsel %vm569, %v818, %v820
        %vm822 = vcmp.ne.s16.totalorder %v818, 0
        %vm823 = vcmp.ne.s16.totalorder %v821, 0
        %vm824 = vcmp.ne.s16.totalorder %v820, 0
        %v825 = vsel %vm822, %v742, 0
        %v826 = vsel %vm823, %v743, 0
        %v827 = vsel %vm824, %v744, 0
        %s828 = scalar_lea.vmem %s1, 24
        %v829 = vld [vmem:[%s828] sm:$0xf]
        %833 = vrot.lane.b32.xlu0 %v825, 113
        %v834 = vpop.permute.xlu0 %833
        %835 = vrot.lane.b32.xlu0 %v826, 113
        %v836 = vpop.permute.xlu0 %835
        %837 = vrot.lane.b32.xlu0 %v827, 113
        %v838 = vpop.permute.xlu0 %837
        %v839 = vsel %vm550, %v834, %v836
        %v840 = vsel %vm550, %v836, %v838
        %v844 = vsel %vm429, %v829, 0
        %846 = vmatprep.subr.bf16.mxu0 %v840
        %847 = vmatpush1.bf16.msra.mxu0 %v839
        %848 = vmatprep.subr.bf16.mxu0 0
        %849 = vmatpush1.bf16.msra.mxu0 0
        %850 = vmatprep.subr.bf16.mxu0 0
        %851 = vmatpush1.bf16.msra.mxu0 0
        %852 = vmatprep.subr.bf16.mxu0 0
        %853 = vmatpush1.bf16.msra.mxu0 0
        %854 = vmatprep.subr.bf16.mxu0 0
        %855 = vmatpush1.bf16.msra.mxu0 0
        %856 = vmatprep.subr.bf16.mxu0 0
        %857 = vmatpush1.bf16.msra.mxu0 0
        %858 = vmatprep.subr.bf16.mxu0 0
        %859 = vmatpush1.bf16.msra.mxu0 0
        %860 = vmatprep.subr.bf16.mxu0 0
        %861 = vmatpush1.bf16.msra.mxu0 0
        %862 = vmatprep.subr.bf16.mxu0 0
        %863 = vmatpush1.bf16.msra.mxu0 0
        %864 = vmatprep.subr.bf16.mxu0 0
        %865 = vmatpush1.bf16.msra.mxu0 0
        %866 = vmatprep.subr.bf16.mxu0 0
        %867 = vmatpush1.bf16.msra.mxu0 0
        %868 = vmatprep.subr.bf16.mxu0 0
        %869 = vmatpush1.bf16.msra.mxu0 0
        %870 = vmatprep.subr.bf16.mxu0 0
        %871 = vmatpush1.bf16.msra.mxu0 0
        %872 = vmatprep.subr.bf16.mxu0 0
        %873 = vmatpush1.bf16.msra.mxu0 0
        %874 = vmatprep.subr.bf16.mxu0 0
        %875 = vmatpush1.bf16.msra.mxu0 0
        %876 = vmatprep.subr.bf16.mxu0 0
        %877 = vmatpush1.bf16.msra.mxu0 0
        %878 = vmatprep.mubr.bf16.mxu0 0
        %879 = vmatmul.mubr.bf16.gmra.mrb[0].mxu0 %v844
        %v880 = vpop.f32.mrb[0].mxu0
        %v881 = vadd.f32 0.0, %v880
        %v882 = vpop.f32.mrb[0].mxu0
        %v883 = vadd.f32 0.0, %v882
        %v884 = vpop.f32.mrb[0].mxu0
        %v885 = vpop.f32.mrb[0].mxu0
        %886 = vdwg.mxu0
        %v887 = vadd.f32 %v815, %v881
        %v888 = vadd.f32 %v816, %v883
        %s889 = scalar_lea.vmem %s1, 28
        %v890 = vld [vmem:[%s889] sm:$0xf]
        %894 = vrot.lane.b32.xlu0 %v742, 112
        %v895 = vpop.permute.xlu0 %894
        %896 = vrot.lane.b32.xlu0 %v743, 112
        %v897 = vpop.permute.xlu0 %896
        %898 = vrot.lane.b32.xlu0 %v744, 112
        %v899 = vpop.permute.xlu0 %898
        %vm900 = vcmask 916480
        %v901 = vsel %vm900, %v895, %v897
        %v902 = vsel %vm900, %v897, %v899
        %v906 = vsel %vm429, %v890, 0
        %908 = vmatprep.subr.bf16.mxu0 %v902
        %909 = vmatpush1.bf16.msra.mxu0 %v901
        %910 = vmatprep.subr.bf16.mxu0 0
        %911 = vmatpush1.bf16.msra.mxu0 0
        %912 = vmatprep.subr.bf16.mxu0 0
        %913 = vmatpush1.bf16.msra.mxu0 0
        %914 = vmatprep.subr.bf16.mxu0 0
        %915 = vmatpush1.bf16.msra.mxu0 0
        %916 = vmatprep.subr.bf16.mxu0 0
        %917 = vmatpush1.bf16.msra.mxu0 0
        %918 = vmatprep.subr.bf16.mxu0 0
        %919 = vmatpush1.bf16.msra.mxu0 0
        %920 = vmatprep.subr.bf16.mxu0 0
        %921 = vmatpush1.bf16.msra.mxu0 0
        %922 = vmatprep.subr.bf16.mxu0 0
        %923 = vmatpush1.bf16.msra.mxu0 0
        %924 = vmatprep.subr.bf16.mxu0 0
        %925 = vmatpush1.bf16.msra.mxu0 0
        %926 = vmatprep.subr.bf16.mxu0 0
        %927 = vmatpush1.bf16.msra.mxu0 0
        %928 = vmatprep.subr.bf16.mxu0 0
        %929 = vmatpush1.bf16.msra.mxu0 0
        %930 = vmatprep.subr.bf16.mxu0 0
        %931 = vmatpush1.bf16.msra.mxu0 0
        %932 = vmatprep.subr.bf16.mxu0 0
        %933 = vmatpush1.bf16.msra.mxu0 0
        %934 = vmatprep.subr.bf16.mxu0 0
        %935 = vmatpush1.bf16.msra.mxu0 0
        %936 = vmatprep.subr.bf16.mxu0 0
        %937 = vmatpush1.bf16.msra.mxu0 0
        %938 = vmatprep.subr.bf16.mxu0 0
        %939 = vmatpush1.bf16.msra.mxu0 0
        %940 = vmatprep.mubr.bf16.mxu0 0
        %941 = vmatmul.mubr.bf16.gmra.mrb[0].mxu0 %v906
        %v942 = vpop.f32.mrb[0].mxu0
        %v943 = vadd.f32 0.0, %v942
        %v944 = vpop.f32.mrb[0].mxu0
        %v945 = vadd.f32 0.0, %v944
        %v946 = vpop.f32.mrb[0].mxu0
        %v947 = vpop.f32.mrb[0].mxu0
        %948 = vdwg.mxu0
        %v949 = vadd.f32 %v887, %v943
        %v950 = vadd.f32 %v888, %v945
        %951 = vrot.lane.b32.xlu0 %v541, 17
        %v952 = vpop.permute.xlu0 %951
        %953 = vrot.lane.b32.xlu0 %v545, 17
        %v954 = vpop.permute.xlu0 %953
        %v955 = vsel %vm483, %v952, %v954
        %vm956 = vcmp.ne.s16.totalorder %v952, 0
        %vm957 = vcmp.ne.s16.totalorder %v955, 0
        %vm958 = vcmp.ne.s16.totalorder %v954, 0
        %v959 = vsel %vm956, %v742, 0
        %v960 = vsel %vm957, %v743, 0
        %v961 = vsel %vm958, %v744, 0
        %s962 = scalar_lea.vmem %s1, 32
        %v963 = vld [vmem:[%s962] sm:$0xf]
        %967 = vrot.lane.b32.xlu0 %v959, 111
        %v968 = vpop.permute.xlu0 %967
        %969 = vrot.lane.b32.xlu0 %v960, 111
        %v970 = vpop.permute.xlu0 %969
        %971 = vrot.lane.b32.xlu0 %v961, 111
        %v972 = vpop.permute.xlu0 %971
        %v973 = vsel %vm404, %v968, %v970
        %v974 = vsel %vm404, %v970, %v972
        %v978 = vsel %vm429, %v963, 0
        %980 = vmatprep.subr.bf16.mxu0 %v974
        %981 = vmatpush1.bf16.msra.mxu0 %v973
        %982 = vmatprep.subr.bf16.mxu0 0
        %983 = vmatpush1.bf16.msra.mxu0 0
        %984 = vmatprep.subr.bf16.mxu0 0
        %985 = vmatpush1.bf16.msra.mxu0 0
        %986 = vmatprep.subr.bf16.mxu0 0
        %987 = vmatpush1.bf16.msra.mxu0 0
        %988 = vmatprep.subr.bf16.mxu0 0
        %989 = vmatpush1.bf16.msra.mxu0 0
        %990 = vmatprep.subr.bf16.mxu0 0
        %991 = vmatpush1.bf16.msra.mxu0 0
        %992 = vmatprep.subr.bf16.mxu0 0
        %993 = vmatpush1.bf16.msra.mxu0 0
        %994 = vmatprep.subr.bf16.mxu0 0
        %995 = vmatpush1.bf16.msra.mxu0 0
        %996 = vmatprep.subr.bf16.mxu0 0
        %997 = vmatpush1.bf16.msra.mxu0 0
        %998 = vmatprep.subr.bf16.mxu0 0
        %999 = vmatpush1.bf16.msra.mxu0 0
        %1000 = vmatprep.subr.bf16.mxu0 0
        %1001 = vmatpush1.bf16.msra.mxu0 0
        %1002 = vmatprep.subr.bf16.mxu0 0
        %1003 = vmatpush1.bf16.msra.mxu0 0
        %1004 = vmatprep.subr.bf16.mxu0 0
        %1005 = vmatpush1.bf16.msra.mxu0 0
        %1006 = vmatprep.subr.bf16.mxu0 0
        %1007 = vmatpush1.bf16.msra.mxu0 0
        %1008 = vmatprep.subr.bf16.mxu0 0
        %1009 = vmatpush1.bf16.msra.mxu0 0
        %1010 = vmatprep.subr.bf16.mxu0 0
        %1011 = vmatpush1.bf16.msra.mxu0 0
        %1012 = vmatprep.mubr.bf16.mxu0 0
        %1013 = vmatmul.mubr.bf16.gmra.mrb[0].mxu0 %v978
        %v1014 = vpop.f32.mrb[0].mxu0
        %v1015 = vadd.f32 0.0, %v1014
        %v1016 = vpop.f32.mrb[0].mxu0
        %v1017 = vadd.f32 0.0, %v1016
        %v1018 = vpop.f32.mrb[0].mxu0
        %v1019 = vpop.f32.mrb[0].mxu0
        %1020 = vdwg.mxu0
        %v1021 = vadd.f32 %v949, %v1015
        %v1022 = vadd.f32 %v950, %v1017
        %v1023 = vld [vmem:[%s2] sm:$0xff]
        %1025 = vset.pattern.permute.xlu0 0
        %1026 = vperm.xlu0 %1025, %v1023
        %v1027 = vpop.permute.xlu0 %1026
        %v1029 = vadd.f32 %v1021, %v1027
        %v1030 = vadd.f32 %v1022, %v1027
        %v1031 = vmax.f32 %v1029, 0.0
        %v1032 = vmax.f32 %v1030, 0.0
        %v1033 = vpack.c.bf16 %v1031, %v1031
        %v1034 = vpack.c.bf16 %v1032, %v1032
        %v1037 = vunpack.c.l.b16 %v1033
        %v1038 = vunpack.c.l.b16 %v1034
        %v1039 = vpack.c.b16 %v1038, %v1037
        %1041 = vst [vmem:[#allocation3 + $0x10] sm:$0xff] %v1039
        %1042 = vst [vmem:[#allocation2 + $0x8] sm:$0xf] %v1033
        %1043 = vst [vmem:[#allocation2 + $0x10] sm:$0xf] %v1034
        %v1044 = vld [vmem:[#allocation2] sm:$0xf]
        %v1045 = vld [vmem:[#allocation2 + $0x8] sm:$0xf]
        %v1046 = vld [vmem:[#allocation2 + $0x10] sm:$0xf]
        %v1047 = vsel %vm406, %v1044, 0
        %v1048 = vsel %vm407, %v1045, 0
        %v1049 = vsel %vm408, %v1046, 0
        %v1050 = vld [vmem:[%s3] sm:$0xf]
        %s1051 = scalar_lea.vmem %s3, 4
        %v1052 = vld [vmem:[%s1051] sm:$0xf]
        %1056 = vrot.lane.b32.xlu0 %v1044, 16
        %v1057 = vpop.permute.xlu0 %1056
        %1058 = vrot.lane.b32.xlu0 %v1045, 16
        %v1059 = vpop.permute.xlu0 %1058
        %1060 = vrot.lane.b32.xlu0 %v1046, 16
        %v1061 = vpop.permute.xlu0 %1060
        %v1062 = vsel %vm424, %v1057, %v1059
        %v1063 = vsel %vm424, %v1059, %v1061
        %vm1064 = vcmask 64512
        %v1066 = vsel %vm1064, %v1052, 0
        %vm1068 = vcmask 1043456
        %v1070 = vsel %vm1068, %v1062, 0
        %v1073 = vsel %vm1068, %v1063, 0
        %1075 = vmatprep.subr.bf16.mxu0 %v1073
        %1076 = vmatpush1.bf16.msra.mxu0 %v1070
        %1077 = vmatprep.subr.bf16.mxu0 0
        %1078 = vmatpush1.bf16.msra.mxu0 0
        %1079 = vmatprep.subr.bf16.mxu0 0
        %1080 = vmatpush1.bf16.msra.mxu0 0
        %1081 = vmatprep.subr.bf16.mxu0 0
        %1082 = vmatpush1.bf16.msra.mxu0 0
        %1083 = vmatprep.subr.bf16.mxu0 0
        %1084 = vmatpush1.bf16.msra.mxu0 0
        %1085 = vmatprep.subr.bf16.mxu0 0
        %1086 = vmatpush1.bf16.msra.mxu0 0
        %1087 = vmatprep.subr.bf16.mxu0 0
        %1088 = vmatpush1.bf16.msra.mxu0 0
        %1089 = vmatprep.subr.bf16.mxu0 0
        %1090 = vmatpush1.bf16.msra.mxu0 0
        %1091 = vmatprep.subr.bf16.mxu0 0
        %1092 = vmatpush1.bf16.msra.mxu0 0
        %1093 = vmatprep.subr.bf16.mxu0 0
        %1094 = vmatpush1.bf16.msra.mxu0 0
        %1095 = vmatprep.subr.bf16.mxu0 0
        %1096 = vmatpush1.bf16.msra.mxu0 0
        %1097 = vmatprep.subr.bf16.mxu0 0
        %1098 = vmatpush1.bf16.msra.mxu0 0
        %1099 = vmatprep.subr.bf16.mxu0 0
        %1100 = vmatpush1.bf16.msra.mxu0 0
        %1101 = vmatprep.subr.bf16.mxu0 0
        %1102 = vmatpush1.bf16.msra.mxu0 0
        %1103 = vmatprep.subr.bf16.mxu0 0
        %1104 = vmatpush1.bf16.msra.mxu0 0
        %1105 = vmatprep.subr.bf16.mxu0 0
        %1106 = vmatpush1.bf16.msra.mxu0 0
        %1107 = vmatprep.mubr.bf16.mxu0 0
        %1108 = vmatmul.mubr.bf16.gmra.mrb[0].mxu0 %v1066
        %v1109 = vpop.f32.mrb[0].mxu0
        %v1110 = vadd.f32 0.0, %v1109
        %v1111 = vpop.f32.mrb[0].mxu0
        %v1112 = vadd.f32 0.0, %v1111
        %v1113 = vpop.f32.mrb[0].mxu0
        %v1114 = vpop.f32.mrb[0].mxu0
        %1115 = vdwg.mxu0
        %1119 = vrot.lane.b32.xlu0 %v1047, 17
        %v1120 = vpop.permute.xlu0 %1119
        %1121 = vrot.lane.b32.xlu0 %v1048, 17
        %v1122 = vpop.permute.xlu0 %1121
        %1123 = vrot.lane.b32.xlu0 %v1049, 17
        %v1124 = vpop.permute.xlu0 %1123
        %v1125 = vsel %vm483, %v1120, %v1122
        %v1126 = vsel %vm483, %v1122, %v1124
        %v1128 = vsel %vm1064, %v1050, 0
        %v1131 = vsel %vm1068, %v1125, 0
        %v1134 = vsel %vm1068, %v1126, 0
        %1136 = vmatprep.subr.bf16.mxu0 %v1134
        %1137 = vmatpush1.bf16.msra.mxu0 %v1131
        %1138 = vmatprep.subr.bf16.mxu0 0
        %1139 = vmatpush1.bf16.msra.mxu0 0
        %1140 = vmatprep.subr.bf16.mxu0 0
        %1141 = vmatpush1.bf16.msra.mxu0 0
        %1142 = vmatprep.subr.bf16.mxu0 0
        %1143 = vmatpush1.bf16.msra.mxu0 0
        %1144 = vmatprep.subr.bf16.mxu0 0
        %1145 = vmatpush1.bf16.msra.mxu0 0
        %1146 = vmatprep.subr.bf16.mxu0 0
        %1147 = vmatpush1.bf16.msra.mxu0 0
        %1148 = vmatprep.subr.bf16.mxu0 0
        %1149 = vmatpush1.bf16.msra.mxu0 0
        %1150 = vmatprep.subr.bf16.mxu0 0
        %1151 = vmatpush1.bf16.msra.mxu0 0
        %1152 = vmatprep.subr.bf16.mxu0 0
        %1153 = vmatpush1.bf16.msra.mxu0 0
        %1154 = vmatprep.subr.bf16.mxu0 0
        %1155 = vmatpush1.bf16.msra.mxu0 0
        %1156 = vmatprep.subr.bf16.mxu0 0
        %1157 = vmatpush1.bf16.msra.mxu0 0
        %1158 = vmatprep.subr.bf16.mxu0 0
        %1159 = vmatpush1.bf16.msra.mxu0 0
        %1160 = vmatprep.subr.bf16.mxu0 0
        %1161 = vmatpush1.bf16.msra.mxu0 0
        %1162 = vmatprep.subr.bf16.mxu0 0
        %1163 = vmatpush1.bf16.msra.mxu0 0
        %1164 = vmatprep.subr.bf16.mxu0 0
        %1165 = vmatpush1.bf16.msra.mxu0 0
        %1166 = vmatprep.subr.bf16.mxu0 0
        %1167 = vmatpush1.bf16.msra.mxu0 0
        %1168 = vmatprep.mubr.bf16.mxu0 0
        %1169 = vmatmul.mubr.bf16.gmra.mrb[0].mxu0 %v1128
        %v1170 = vpop.f32.mrb[0].mxu0
        %v1171 = vadd.f32 %v1110, %v1170
        %v1172 = vpop.f32.mrb[0].mxu0
        %v1173 = vadd.f32 %v1112, %v1172
        %v1174 = vpop.f32.mrb[0].mxu0
        %v1175 = vpop.f32.mrb[0].mxu0
        %1176 = vdwg.mxu0
        %v1177 = vsel %vm552, %v1044, 0
        %v1178 = vsel %vm553, %v1045, 0
        %v1179 = vsel %vm554, %v1046, 0
        %s1180 = scalar_lea.vmem %s3, 8
        %v1181 = vld [vmem:[%s1180] sm:$0xf]
        %1185 = vrot.lane.b32.xlu0 %v1177, 15
        %v1186 = vpop.permute.xlu0 %1185
        %1187 = vrot.lane.b32.xlu0 %v1178, 15
        %v1188 = vpop.permute.xlu0 %1187
        %1189 = vrot.lane.b32.xlu0 %v1179, 15
        %v1190 = vpop.permute.xlu0 %1189
        %v1191 = vsel %vm569, %v1186, %v1188
        %v1192 = vsel %vm569, %v1188, %v1190
        %v1194 = vsel %vm1064, %v1181, 0
        %v1197 = vsel %vm1068, %v1191, 0
        %v1200 = vsel %vm1068, %v1192, 0
        %1202 = vmatprep.subr.bf16.mxu0 %v1200
        %1203 = vmatpush1.bf16.msra.mxu0 %v1197
        %1204 = vmatprep.subr.bf16.mxu0 0
        %1205 = vmatpush1.bf16.msra.mxu0 0
        %1206 = vmatprep.subr.bf16.mxu0 0
        %1207 = vmatpush1.bf16.msra.mxu0 0
        %1208 = vmatprep.subr.bf16.mxu0 0
        %1209 = vmatpush1.bf16.msra.mxu0 0
        %1210 = vmatprep.subr.bf16.mxu0 0
        %1211 = vmatpush1.bf16.msra.mxu0 0
        %1212 = vmatprep.subr.bf16.mxu0 0
        %1213 = vmatpush1.bf16.msra.mxu0 0
        %1214 = vmatprep.subr.bf16.mxu0 0
        %1215 = vmatpush1.bf16.msra.mxu0 0
        %1216 = vmatprep.subr.bf16.mxu0 0
        %1217 = vmatpush1.bf16.msra.mxu0 0
        %1218 = vmatprep.subr.bf16.mxu0 0
        %1219 = vmatpush1.bf16.msra.mxu0 0
        %1220 = vmatprep.subr.bf16.mxu0 0
        %1221 = vmatpush1.bf16.msra.mxu0 0
        %1222 = vmatprep.subr.bf16.mxu0 0
        %1223 = vmatpush1.bf16.msra.mxu0 0
        %1224 = vmatprep.subr.bf16.mxu0 0
        %1225 = vmatpush1.bf16.msra.mxu0 0
        %1226 = vmatprep.subr.bf16.mxu0 0
        %1227 = vmatpush1.bf16.msra.mxu0 0
        %1228 = vmatprep.subr.bf16.mxu0 0
        %1229 = vmatpush1.bf16.msra.mxu0 0
        %1230 = vmatprep.subr.bf16.mxu0 0
        %1231 = vmatpush1.bf16.msra.mxu0 0
        %1232 = vmatprep.subr.bf16.mxu0 0
        %1233 = vmatpush1.bf16.msra.mxu0 0
        %1234 = vmatprep.mubr.bf16.mxu0 0
        %1235 = vmatmul.mubr.bf16.gmra.mrb[0].mxu0 %v1194
        %v1236 = vpop.f32.mrb[0].mxu0
        %v1237 = vadd.f32 0.0, %v1236
        %v1238 = vpop.f32.mrb[0].mxu0
        %v1239 = vadd.f32 0.0, %v1238
        %v1240 = vpop.f32.mrb[0].mxu0
        %v1241 = vpop.f32.mrb[0].mxu0
        %1242 = vdwg.mxu0
        %v1243 = vadd.f32 %v1171, %v1237
        %v1244 = vadd.f32 %v1173, %v1239
        %v1245 = vsel %vm626, %v1044, 0
        %v1246 = vsel %vm627, %v1045, 0
        %v1247 = vsel %vm628, %v1046, 0
        %s1248 = scalar_lea.vmem %s3, 12
        %v1249 = vld [vmem:[%s1248] sm:$0xf]
        %1253 = vrot.lane.b32.xlu0 %v1245, 1
        %v1254 = vpop.permute.xlu0 %1253
        %1255 = vrot.lane.b32.xlu0 %v1246, 1
        %v1256 = vpop.permute.xlu0 %1255
        %1257 = vrot.lane.b32.xlu0 %v1247, 1
        %v1258 = vpop.permute.xlu0 %1257
        %v1259 = vsel %vm643, %v1254, %v1256
        %v1260 = vsel %vm643, %v1256, %v1258
        %v1262 = vsel %vm1064, %v1249, 0
        %v1265 = vsel %vm1068, %v1259, 0
        %v1268 = vsel %vm1068, %v1260, 0
        %1270 = vmatprep.subr.bf16.mxu0 %v1268
        %1271 = vmatpush1.bf16.msra.mxu0 %v1265
        %1272 = vmatprep.subr.bf16.mxu0 0
        %1273 = vmatpush1.bf16.msra.mxu0 0
        %1274 = vmatprep.subr.bf16.mxu0 0
        %1275 = vmatpush1.bf16.msra.mxu0 0
        %1276 = vmatprep.subr.bf16.mxu0 0
        %1277 = vmatpush1.bf16.msra.mxu0 0
        %1278 = vmatprep.subr.bf16.mxu0 0
        %1279 = vmatpush1.bf16.msra.mxu0 0
        %1280 = vmatprep.subr.bf16.mxu0 0
        %1281 = vmatpush1.bf16.msra.mxu0 0
        %1282 = vmatprep.subr.bf16.mxu0 0
        %1283 = vmatpush1.bf16.msra.mxu0 0
        %1284 = vmatprep.subr.bf16.mxu0 0
        %1285 = vmatpush1.bf16.msra.mxu0 0
        %1286 = vmatprep.subr.bf16.mxu0 0
        %1287 = vmatpush1.bf16.msra.mxu0 0
        %1288 = vmatprep.subr.bf16.mxu0 0
        %1289 = vmatpush1.bf16.msra.mxu0 0
        %1290 = vmatprep.subr.bf16.mxu0 0
        %1291 = vmatpush1.bf16.msra.mxu0 0
        %1292 = vmatprep.subr.bf16.mxu0 0
        %1293 = vmatpush1.bf16.msra.mxu0 0
        %1294 = vmatprep.subr.bf16.mxu0 0
        %1295 = vmatpush1.bf16.msra.mxu0 0
        %1296 = vmatprep.subr.bf16.mxu0 0
        %1297 = vmatpush1.bf16.msra.mxu0 0
        %1298 = vmatprep.subr.bf16.mxu0 0
        %1299 = vmatpush1.bf16.msra.mxu0 0
        %1300 = vmatprep.subr.bf16.mxu0 0
        %1301 = vmatpush1.bf16.msra.mxu0 0
        %1302 = vmatprep.mubr.bf16.mxu0 0
        %1303 = vmatmul.mubr.bf16.gmra.mrb[0].mxu0 %v1262
        %v1304 = vpop.f32.mrb[0].mxu0
        %v1305 = vadd.f32 0.0, %v1304
        %v1306 = vpop.f32.mrb[0].mxu0
        %v1307 = vadd.f32 0.0, %v1306
        %v1308 = vpop.f32.mrb[0].mxu0
        %v1309 = vpop.f32.mrb[0].mxu0
        %1310 = vdwg.mxu0
        %v1311 = vadd.f32 %v1243, %v1305
        %v1312 = vadd.f32 %v1244, %v1307
        %s1313 = scalar_lea.vmem %s3, 16
        %v1314 = vld [vmem:[%s1313] sm:$0xf]
        %v1316 = vsel %vm1064, %v1314, 0
        %v1319 = vsel %vm1068, %v1045, 0
        %v1322 = vsel %vm1068, %v1046, 0
        %1324 = vmatprep.subr.bf16.mxu0 %v1322
        %1325 = vmatpush1.bf16.msra.mxu0 %v1319
        %1326 = vmatprep.subr.bf16.mxu0 0
        %1327 = vmatpush1.bf16.msra.mxu0 0
        %1328 = vmatprep.subr.bf16.mxu0 0
        %1329 = vmatpush1.bf16.msra.mxu0 0
        %1330 = vmatprep.subr.bf16.mxu0 0
        %1331 = vmatpush1.bf16.msra.mxu0 0
        %1332 = vmatprep.subr.bf16.mxu0 0
        %1333 = vmatpush1.bf16.msra.mxu0 0
        %1334 = vmatprep.subr.bf16.mxu0 0
        %1335 = vmatpush1.bf16.msra.mxu0 0
        %1336 = vmatprep.subr.bf16.mxu0 0
        %1337 = vmatpush1.bf16.msra.mxu0 0
        %1338 = vmatprep.subr.bf16.mxu0 0
        %1339 = vmatpush1.bf16.msra.mxu0 0
        %1340 = vmatprep.subr.bf16.mxu0 0
        %1341 = vmatpush1.bf16.msra.mxu0 0
        %1342 = vmatprep.subr.bf16.mxu0 0
        %1343 = vmatpush1.bf16.msra.mxu0 0
        %1344 = vmatprep.subr.bf16.mxu0 0
        %1345 = vmatpush1.bf16.msra.mxu0 0
        %1346 = vmatprep.subr.bf16.mxu0 0
        %1347 = vmatpush1.bf16.msra.mxu0 0
        %1348 = vmatprep.subr.bf16.mxu0 0
        %1349 = vmatpush1.bf16.msra.mxu0 0
        %1350 = vmatprep.subr.bf16.mxu0 0
        %1351 = vmatpush1.bf16.msra.mxu0 0
        %1352 = vmatprep.subr.bf16.mxu0 0
        %1353 = vmatpush1.bf16.msra.mxu0 0
        %1354 = vmatprep.subr.bf16.mxu0 0
        %1355 = vmatpush1.bf16.msra.mxu0 0
        %1356 = vmatprep.mubr.bf16.mxu0 0
        %1357 = vmatmul.mubr.bf16.gmra.mrb[0].mxu0 %v1316
        %v1358 = vpop.f32.mrb[0].mxu0
        %v1359 = vadd.f32 0.0, %v1358
        %v1360 = vpop.f32.mrb[0].mxu0
        %v1361 = vadd.f32 0.0, %v1360
        %v1362 = vpop.f32.mrb[0].mxu0
        %v1363 = vpop.f32.mrb[0].mxu0
        %1364 = vdwg.mxu0
        %v1365 = vadd.f32 %v1311, %v1359
        %v1366 = vadd.f32 %v1312, %v1361
        %v1367 = vld [vmem:[#allocation2 + $0x8] sm:$0xf]
        %v1368 = vld [vmem:[#allocation2 + $0x10] sm:$0xf]
        %v1369 = vld [vmem:[#allocation2 + $0x18] sm:$0xf]
        %v1370 = vsel %vm750, %v1367, 0
        %v1371 = vsel %vm751, %v1368, 0
        %v1372 = vsel %vm752, %v1369, 0
        %s1373 = scalar_lea.vmem %s3, 20
        %v1374 = vld [vmem:[%s1373] sm:$0xf]
        %1378 = vrot.lane.b32.xlu0 %v1370, 127
        %v1379 = vpop.permute.xlu0 %1378
        %1380 = vrot.lane.b32.xlu0 %v1371, 127
        %v1381 = vpop.permute.xlu0 %1380
        %1382 = vrot.lane.b32.xlu0 %v1372, 127
        %v1383 = vpop.permute.xlu0 %1382
        %v1384 = vsel %vm624, %v1379, %v1381
        %v1385 = vsel %vm624, %v1381, %v1383
        %v1387 = vsel %vm1064, %v1374, 0
        %v1390 = vsel %vm1068, %v1384, 0
        %v1393 = vsel %vm1068, %v1385, 0
        %1395 = vmatprep.subr.bf16.mxu0 %v1393
        %1396 = vmatpush1.bf16.msra.mxu0 %v1390
        %1397 = vmatprep.subr.bf16.mxu0 0
        %1398 = vmatpush1.bf16.msra.mxu0 0
        %1399 = vmatprep.subr.bf16.mxu0 0
        %1400 = vmatpush1.bf16.msra.mxu0 0
        %1401 = vmatprep.subr.bf16.mxu0 0
        %1402 = vmatpush1.bf16.msra.mxu0 0
        %1403 = vmatprep.subr.bf16.mxu0 0
        %1404 = vmatpush1.bf16.msra.mxu0 0
        %1405 = vmatprep.subr.bf16.mxu0 0
        %1406 = vmatpush1.bf16.msra.mxu0 0
        %1407 = vmatprep.subr.bf16.mxu0 0
        %1408 = vmatpush1.bf16.msra.mxu0 0
        %1409 = vmatprep.subr.bf16.mxu0 0
        %1410 = vmatpush1.bf16.msra.mxu0 0
        %1411 = vmatprep.subr.bf16.mxu0 0
        %1412 = vmatpush1.bf16.msra.mxu0 0
        %1413 = vmatprep.subr.bf16.mxu0 0
        %1414 = vmatpush1.bf16.msra.mxu0 0
        %1415 = vmatprep.subr.bf16.mxu0 0
        %1416 = vmatpush1.bf16.msra.mxu0 0
        %1417 = vmatprep.subr.bf16.mxu0 0
        %1418 = vmatpush1.bf16.msra.mxu0 0
        %1419 = vmatprep.subr.bf16.mxu0 0
        %1420 = vmatpush1.bf16.msra.mxu0 0
        %1421 = vmatprep.subr.bf16.mxu0 0
        %1422 = vmatpush1.bf16.msra.mxu0 0
        %1423 = vmatprep.subr.bf16.mxu0 0
        %1424 = vmatpush1.bf16.msra.mxu0 0
        %1425 = vmatprep.subr.bf16.mxu0 0
        %1426 = vmatpush1.bf16.msra.mxu0 0
        %1427 = vmatprep.mubr.bf16.mxu0 0
        %1428 = vmatmul.mubr.bf16.gmra.mrb[0].mxu0 %v1387
        %v1429 = vpop.f32.mrb[0].mxu0
        %v1430 = vadd.f32 0.0, %v1429
        %v1431 = vpop.f32.mrb[0].mxu0
        %v1432 = vadd.f32 0.0, %v1431
        %v1433 = vpop.f32.mrb[0].mxu0
        %v1434 = vpop.f32.mrb[0].mxu0
        %1435 = vdwg.mxu0
        %v1436 = vadd.f32 %v1365, %v1430
        %v1437 = vadd.f32 %v1366, %v1432
        %v1438 = vsel %vm822, %v1367, 0
        %v1439 = vsel %vm823, %v1368, 0
        %v1440 = vsel %vm824, %v1369, 0
        %s1441 = scalar_lea.vmem %s3, 24
        %v1442 = vld [vmem:[%s1441] sm:$0xf]
        %1446 = vrot.lane.b32.xlu0 %v1438, 113
        %v1447 = vpop.permute.xlu0 %1446
        %1448 = vrot.lane.b32.xlu0 %v1439, 113
        %v1449 = vpop.permute.xlu0 %1448
        %1450 = vrot.lane.b32.xlu0 %v1440, 113
        %v1451 = vpop.permute.xlu0 %1450
        %v1452 = vsel %vm550, %v1447, %v1449
        %v1453 = vsel %vm550, %v1449, %v1451
        %v1455 = vsel %vm1064, %v1442, 0
        %v1458 = vsel %vm1068, %v1452, 0
        %v1461 = vsel %vm1068, %v1453, 0
        %1463 = vmatprep.subr.bf16.mxu0 %v1461
        %1464 = vmatpush1.bf16.msra.mxu0 %v1458
        %1465 = vmatprep.subr.bf16.mxu0 0
        %1466 = vmatpush1.bf16.msra.mxu0 0
        %1467 = vmatprep.subr.bf16.mxu0 0
        %1468 = vmatpush1.bf16.msra.mxu0 0
        %1469 = vmatprep.subr.bf16.mxu0 0
        %1470 = vmatpush1.bf16.msra.mxu0 0
        %1471 = vmatprep.subr.bf16.mxu0 0
        %1472 = vmatpush1.bf16.msra.mxu0 0
        %1473 = vmatprep.subr.bf16.mxu0 0
        %1474 = vmatpush1.bf16.msra.mxu0 0
        %1475 = vmatprep.subr.bf16.mxu0 0
        %1476 = vmatpush1.bf16.msra.mxu0 0
        %1477 = vmatprep.subr.bf16.mxu0 0
        %1478 = vmatpush1.bf16.msra.mxu0 0
        %1479 = vmatprep.subr.bf16.mxu0 0
        %1480 = vmatpush1.bf16.msra.mxu0 0
        %1481 = vmatprep.subr.bf16.mxu0 0
        %1482 = vmatpush1.bf16.msra.mxu0 0
        %1483 = vmatprep.subr.bf16.mxu0 0
        %1484 = vmatpush1.bf16.msra.mxu0 0
        %1485 = vmatprep.subr.bf16.mxu0 0
        %1486 = vmatpush1.bf16.msra.mxu0 0
        %1487 = vmatprep.subr.bf16.mxu0 0
        %1488 = vmatpush1.bf16.msra.mxu0 0
        %1489 = vmatprep.subr.bf16.mxu0 0
        %1490 = vmatpush1.bf16.msra.mxu0 0
        %1491 = vmatprep.subr.bf16.mxu0 0
        %1492 = vmatpush1.bf16.msra.mxu0 0
        %1493 = vmatprep.subr.bf16.mxu0 0
        %1494 = vmatpush1.bf16.msra.mxu0 0
        %1495 = vmatprep.mubr.bf16.mxu0 0
        %1496 = vmatmul.mubr.bf16.gmra.mrb[0].mxu0 %v1455
        %v1497 = vpop.f32.mrb[0].mxu0
        %v1498 = vadd.f32 0.0, %v1497
        %v1499 = vpop.f32.mrb[0].mxu0
        %v1500 = vadd.f32 0.0, %v1499
        %v1501 = vpop.f32.mrb[0].mxu0
        %v1502 = vpop.f32.mrb[0].mxu0
        %1503 = vdwg.mxu0
        %v1504 = vadd.f32 %v1436, %v1498
        %v1505 = vadd.f32 %v1437, %v1500
        %s1506 = scalar_lea.vmem %s3, 28
        %v1507 = vld [vmem:[%s1506] sm:$0xf]
        %1511 = vrot.lane.b32.xlu0 %v1367, 112
        %v1512 = vpop.permute.xlu0 %1511
        %1513 = vrot.lane.b32.xlu0 %v1368, 112
        %v1514 = vpop.permute.xlu0 %1513
        %1515 = vrot.lane.b32.xlu0 %v1369, 112
        %v1516 = vpop.permute.xlu0 %1515
        %v1517 = vsel %vm900, %v1512, %v1514
        %v1518 = vsel %vm900, %v1514, %v1516
        %v1520 = vsel %vm1064, %v1507, 0
        %v1523 = vsel %vm1068, %v1517, 0
        %v1526 = vsel %vm1068, %v1518, 0
        %1528 = vmatprep.subr.bf16.mxu0 %v1526
        %1529 = vmatpush1.bf16.msra.mxu0 %v1523
        %1530 = vmatprep.subr.bf16.mxu0 0
        %1531 = vmatpush1.bf16.msra.mxu0 0
        %1532 = vmatprep.subr.bf16.mxu0 0
        %1533 = vmatpush1.bf16.msra.mxu0 0
        %1534 = vmatprep.subr.bf16.mxu0 0
        %1535 = vmatpush1.bf16.msra.mxu0 0
        %1536 = vmatprep.subr.bf16.mxu0 0
        %1537 = vmatpush1.bf16.msra.mxu0 0
        %1538 = vmatprep.subr.bf16.mxu0 0
        %1539 = vmatpush1.bf16.msra.mxu0 0
        %1540 = vmatprep.subr.bf16.mxu0 0
        %1541 = vmatpush1.bf16.msra.mxu0 0
        %1542 = vmatprep.subr.bf16.mxu0 0
        %1543 = vmatpush1.bf16.msra.mxu0 0
        %1544 = vmatprep.subr.bf16.mxu0 0
        %1545 = vmatpush1.bf16.msra.mxu0 0
        %1546 = vmatprep.subr.bf16.mxu0 0
        %1547 = vmatpush1.bf16.msra.mxu0 0
        %1548 = vmatprep.subr.bf16.mxu0 0
        %1549 = vmatpush1.bf16.msra.mxu0 0
        %1550 = vmatprep.subr.bf16.mxu0 0
        %1551 = vmatpush1.bf16.msra.mxu0 0
        %1552 = vmatprep.subr.bf16.mxu0 0
        %1553 = vmatpush1.bf16.msra.mxu0 0
        %1554 = vmatprep.subr.bf16.mxu0 0
        %1555 = vmatpush1.bf16.msra.mxu0 0
        %1556 = vmatprep.subr.bf16.mxu0 0
        %1557 = vmatpush1.bf16.msra.mxu0 0
        %1558 = vmatprep.subr.bf16.mxu0 0
        %1559 = vmatpush1.bf16.msra.mxu0 0
        %1560 = vmatprep.mubr.bf16.mxu0 0
        %1561 = vmatmul.mubr.bf16.gmra.mrb[0].mxu0 %v1520
        %v1562 = vpop.f32.mrb[0].mxu0
        %v1563 = vadd.f32 0.0, %v1562
        %v1564 = vpop.f32.mrb[0].mxu0
        %v1565 = vadd.f32 0.0, %v1564
        %v1566 = vpop.f32.mrb[0].mxu0
        %v1567 = vpop.f32.mrb[0].mxu0
        %1568 = vdwg.mxu0
        %v1569 = vadd.f32 %v1504, %v1563
        %v1570 = vadd.f32 %v1505, %v1565
        %v1571 = vsel %vm956, %v1367, 0
        %v1572 = vsel %vm957, %v1368, 0
        %v1573 = vsel %vm958, %v1369, 0
        %s1574 = scalar_lea.vmem %s3, 32
        %v1575 = vld [vmem:[%s1574] sm:$0xf]
        %1579 = vrot.lane.b32.xlu0 %v1571, 111
        %v1580 = vpop.permute.xlu0 %1579
        %1581 = vrot.lane.b32.xlu0 %v1572, 111
        %v1582 = vpop.permute.xlu0 %1581
        %1583 = vrot.lane.b32.xlu0 %v1573, 111
        %v1584 = vpop.permute.xlu0 %1583
        %v1585 = vsel %vm404, %v1580, %v1582
        %v1586 = vsel %vm404, %v1582, %v1584
        %v1588 = vsel %vm1064, %v1575, 0
        %v1591 = vsel %vm1068, %v1585, 0
        %v1594 = vsel %vm1068, %v1586, 0
        %1596 = vmatprep.subr.bf16.mxu0 %v1594
        %1597 = vmatpush1.bf16.msra.mxu0 %v1591
        %1598 = vmatprep.subr.bf16.mxu0 0
        %1599 = vmatpush1.bf16.msra.mxu0 0
        %1600 = vmatprep.subr.bf16.mxu0 0
        %1601 = vmatpush1.bf16.msra.mxu0 0
        %1602 = vmatprep.subr.bf16.mxu0 0
        %1603 = vmatpush1.bf16.msra.mxu0 0
        %1604 = vmatprep.subr.bf16.mxu0 0
        %1605 = vmatpush1.bf16.msra.mxu0 0
        %1606 = vmatprep.subr.bf16.mxu0 0
        %1607 = vmatpush1.bf16.msra.mxu0 0
        %1608 = vmatprep.subr.bf16.mxu0 0
        %1609 = vmatpush1.bf16.msra.mxu0 0
        %1610 = vmatprep.subr.bf16.mxu0 0
        %1611 = vmatpush1.bf16.msra.mxu0 0
        %1612 = vmatprep.subr.bf16.mxu0 0
        %1613 = vmatpush1.bf16.msra.mxu0 0
        %1614 = vmatprep.subr.bf16.mxu0 0
        %1615 = vmatpush1.bf16.msra.mxu0 0
        %1616 = vmatprep.subr.bf16.mxu0 0
        %1617 = vmatpush1.bf16.msra.mxu0 0
        %1618 = vmatprep.subr.bf16.mxu0 0
        %1619 = vmatpush1.bf16.msra.mxu0 0
        %1620 = vmatprep.subr.bf16.mxu0 0
        %1621 = vmatpush1.bf16.msra.mxu0 0
        %1622 = vmatprep.subr.bf16.mxu0 0
        %1623 = vmatpush1.bf16.msra.mxu0 0
        %1624 = vmatprep.subr.bf16.mxu0 0
        %1625 = vmatpush1.bf16.msra.mxu0 0
        %1626 = vmatprep.subr.bf16.mxu0 0
        %1627 = vmatpush1.bf16.msra.mxu0 0
        %1628 = vmatprep.mubr.bf16.mxu0 0
        %1629 = vmatmul.mubr.bf16.gmra.mrb[0].mxu0 %v1588
        %v1630 = vpop.f32.mrb[0].mxu0
        %v1631 = vadd.f32 0.0, %v1630
        %v1632 = vpop.f32.mrb[0].mxu0
        %v1633 = vadd.f32 0.0, %v1632
        %v1634 = vpop.f32.mrb[0].mxu0
        %v1635 = vpop.f32.mrb[0].mxu0
        %1636 = vdwg.mxu0
        %v1637 = vadd.f32 %v1569, %v1631
        %v1638 = vadd.f32 %v1570, %v1633
        %v1639 = vld [vmem:[%s4] sm:$0xff]
        %1641 = vset.pattern.permute.xlu0 0
        %1642 = vperm.xlu0 %1641, %v1639
        %v1643 = vpop.permute.xlu0 %1642
        %v1645 = vadd.f32 %v1637, %v1643
        %v1646 = vadd.f32 %v1638, %v1643
        %v1647 = vmax.f32 %v1645, 0.0
        %v1648 = vmax.f32 %v1646, 0.0
        %v1649 = vpack.c.bf16 %v1647, %v1647
        %v1650 = vpack.c.bf16 %v1648, %v1648
        %v1653 = vunpack.c.l.b16 %v1649
        %v1654 = vunpack.c.l.b16 %v1650
        %v1655 = vpack.c.b16 %v1654, %v1653
        %1657 = vst [vmem:[#allocation3 + $0x18] sm:$0xff] %v1655
        %1658 = vst [vmem:[#allocation2 + $0x8] sm:$0xf] %v1649
        %1659 = vst [vmem:[#allocation2 + $0x10] sm:$0xf] %v1650
        %v1660 = vld [vmem:[#allocation2] sm:$0xf]
        %v1661 = vld [vmem:[#allocation2 + $0x8] sm:$0xf]
        %v1662 = vld [vmem:[#allocation2 + $0x10] sm:$0xf]
        %v1663 = vsel %vm406, %v1660, 0
        %v1664 = vsel %vm407, %v1661, 0
        %v1665 = vsel %vm408, %v1662, 0
        %v1666 = vld [vmem:[%s5] sm:$0xf]
        %s1667 = scalar_lea.vmem %s5, 4
        %v1668 = vld [vmem:[%s1667] sm:$0xf]
        %1672 = vrot.lane.b32.xlu0 %v1660, 16
        %v1673 = vpop.permute.xlu0 %1672
        %1674 = vrot.lane.b32.xlu0 %v1661, 16
        %v1675 = vpop.permute.xlu0 %1674
        %1676 = vrot.lane.b32.xlu0 %v1662, 16
        %v1677 = vpop.permute.xlu0 %1676
        %v1678 = vsel %vm424, %v1673, %v1675
        %v1679 = vsel %vm424, %v1675, %v1677
        %v1681 = vsel %vm1064, %v1668, 0
        %v1684 = vsel %vm1068, %v1678, 0
        %v1687 = vsel %vm1068, %v1679, 0
        %1689 = vmatprep.subr.bf16.mxu0 %v1687
        %1690 = vmatpush1.bf16.msra.mxu0 %v1684
        %1691 = vmatprep.subr.bf16.mxu0 0
        %1692 = vmatpush1.bf16.msra.mxu0 0
        %1693 = vmatprep.subr.bf16.mxu0 0
        %1694 = vmatpush1.bf16.msra.mxu0 0
        %1695 = vmatprep.subr.bf16.mxu0 0
        %1696 = vmatpush1.bf16.msra.mxu0 0
        %1697 = vmatprep.subr.bf16.mxu0 0
        %1698 = vmatpush1.bf16.msra.mxu0 0
        %1699 = vmatprep.subr.bf16.mxu0 0
        %1700 = vmatpush1.bf16.msra.mxu0 0
        %1701 = vmatprep.subr.bf16.mxu0 0
        %1702 = vmatpush1.bf16.msra.mxu0 0
        %1703 = vmatprep.subr.bf16.mxu0 0
        %1704 = vmatpush1.bf16.msra.mxu0 0
        %1705 = vmatprep.subr.bf16.mxu0 0
        %1706 = vmatpush1.bf16.msra.mxu0 0
        %1707 = vmatprep.subr.bf16.mxu0 0
        %1708 = vmatpush1.bf16.msra.mxu0 0
        %1709 = vmatprep.subr.bf16.mxu0 0
        %1710 = vmatpush1.bf16.msra.mxu0 0
        %1711 = vmatprep.subr.bf16.mxu0 0
        %1712 = vmatpush1.bf16.msra.mxu0 0
        %1713 = vmatprep.subr.bf16.mxu0 0
        %1714 = vmatpush1.bf16.msra.mxu0 0
        %1715 = vmatprep.subr.bf16.mxu0 0
        %1716 = vmatpush1.bf16.msra.mxu0 0
        %1717 = vmatprep.subr.bf16.mxu0 0
        %1718 = vmatpush1.bf16.msra.mxu0 0
        %1719 = vmatprep.subr.bf16.mxu0 0
        %1720 = vmatpush1.bf16.msra.mxu0 0
        %1721 = vmatprep.mubr.bf16.mxu0 0
        %1722 = vmatmul.mubr.bf16.gmra.mrb[0].mxu0 %v1681
        %v1723 = vpop.f32.mrb[0].mxu0
        %v1724 = vadd.f32 0.0, %v1723
        %v1725 = vpop.f32.mrb[0].mxu0
        %v1726 = vadd.f32 0.0, %v1725
        %v1727 = vpop.f32.mrb[0].mxu0
        %v1728 = vpop.f32.mrb[0].mxu0
        %1729 = vdwg.mxu0
        %1733 = vrot.lane.b32.xlu0 %v1663, 17
        %v1734 = vpop.permute.xlu0 %1733
        %1735 = vrot.lane.b32.xlu0 %v1664, 17
        %v1736 = vpop.permute.xlu0 %1735
        %1737 = vrot.lane.b32.xlu0 %v1665, 17
        %v1738 = vpop.permute.xlu0 %1737
        %v1739 = vsel %vm483, %v1734, %v1736
        %v1740 = vsel %vm483, %v1736, %v1738
        %v1742 = vsel %vm1064, %v1666, 0
        %v1745 = vsel %vm1068, %v1739, 0
        %v1748 = vsel %vm1068, %v1740, 0
        %1750 = vmatprep.subr.bf16.mxu0 %v1748
        %1751 = vmatpush1.bf16.msra.mxu0 %v1745
        %1752 = vmatprep.subr.bf16.mxu0 0
        %1753 = vmatpush1.bf16.msra.mxu0 0
        %1754 = vmatprep.subr.bf16.mxu0 0
        %1755 = vmatpush1.bf16.msra.mxu0 0
        %1756 = vmatprep.subr.bf16.mxu0 0
        %1757 = vmatpush1.bf16.msra.mxu0 0
        %1758 = vmatprep.subr.bf16.mxu0 0
        %1759 = vmatpush1.bf16.msra.mxu0 0
        %1760 = vmatprep.subr.bf16.mxu0 0
        %1761 = vmatpush1.bf16.msra.mxu0 0
        %1762 = vmatprep.subr.bf16.mxu0 0
        %1763 = vmatpush1.bf16.msra.mxu0 0
        %1764 = vmatprep.subr.bf16.mxu0 0
        %1765 = vmatpush1.bf16.msra.mxu0 0
        %1766 = vmatprep.subr.bf16.mxu0 0
        %1767 = vmatpush1.bf16.msra.mxu0 0
        %1768 = vmatprep.subr.bf16.mxu0 0
        %1769 = vmatpush1.bf16.msra.mxu0 0
        %1770 = vmatprep.subr.bf16.mxu0 0
        %1771 = vmatpush1.bf16.msra.mxu0 0
        %1772 = vmatprep.subr.bf16.mxu0 0
        %1773 = vmatpush1.bf16.msra.mxu0 0
        %1774 = vmatprep.subr.bf16.mxu0 0
        %1775 = vmatpush1.bf16.msra.mxu0 0
        %1776 = vmatprep.subr.bf16.mxu0 0
        %1777 = vmatpush1.bf16.msra.mxu0 0
        %1778 = vmatprep.subr.bf16.mxu0 0
        %1779 = vmatpush1.bf16.msra.mxu0 0
        %1780 = vmatprep.subr.bf16.mxu0 0
        %1781 = vmatpush1.bf16.msra.mxu0 0
        %1782 = vmatprep.mubr.bf16.mxu0 0
        %1783 = vmatmul.mubr.bf16.gmra.mrb[0].mxu0 %v1742
        %v1784 = vpop.f32.mrb[0].mxu0
        %v1785 = vadd.f32 %v1724, %v1784
        %v1786 = vpop.f32.mrb[0].mxu0
        %v1787 = vadd.f32 %v1726, %v1786
        %v1788 = vpop.f32.mrb[0].mxu0
        %v1789 = vpop.f32.mrb[0].mxu0
        %1790 = vdwg.mxu0
        %v1791 = vsel %vm552, %v1660, 0
        %v1792 = vsel %vm553, %v1661, 0
        %v1793 = vsel %vm554, %v1662, 0
        %s1794 = scalar_lea.vmem %s5, 8
        %v1795 = vld [vmem:[%s1794] sm:$0xf]
        %1799 = vrot.lane.b32.xlu0 %v1791, 15
        %v1800 = vpop.permute.xlu0 %1799
        %1801 = vrot.lane.b32.xlu0 %v1792, 15
        %v1802 = vpop.permute.xlu0 %1801
        %1803 = vrot.lane.b32.xlu0 %v1793, 15
        %v1804 = vpop.permute.xlu0 %1803
        %v1805 = vsel %vm569, %v1800, %v1802
        %v1806 = vsel %vm569, %v1802, %v1804
        %v1808 = vsel %vm1064, %v1795, 0
        %v1811 = vsel %vm1068, %v1805, 0
        %v1814 = vsel %vm1068, %v1806, 0
        %1816 = vmatprep.subr.bf16.mxu0 %v1814
        %1817 = vmatpush1.bf16.msra.mxu0 %v1811
        %1818 = vmatprep.subr.bf16.mxu0 0
        %1819 = vmatpush1.bf16.msra.mxu0 0
        %1820 = vmatprep.subr.bf16.mxu0 0
        %1821 = vmatpush1.bf16.msra.mxu0 0
        %1822 = vmatprep.subr.bf16.mxu0 0
        %1823 = vmatpush1.bf16.msra.mxu0 0
        %1824 = vmatprep.subr.bf16.mxu0 0
        %1825 = vmatpush1.bf16.msra.mxu0 0
        %1826 = vmatprep.subr.bf16.mxu0 0
        %1827 = vmatpush1.bf16.msra.mxu0 0
        %1828 = vmatprep.subr.bf16.mxu0 0
        %1829 = vmatpush1.bf16.msra.mxu0 0
        %1830 = vmatprep.subr.bf16.mxu0 0
        %1831 = vmatpush1.bf16.msra.mxu0 0
        %1832 = vmatprep.subr.bf16.mxu0 0
        %1833 = vmatpush1.bf16.msra.mxu0 0
        %1834 = vmatprep.subr.bf16.mxu0 0
        %1835 = vmatpush1.bf16.msra.mxu0 0
        %1836 = vmatprep.subr.bf16.mxu0 0
        %1837 = vmatpush1.bf16.msra.mxu0 0
        %1838 = vmatprep.subr.bf16.mxu0 0
        %1839 = vmatpush1.bf16.msra.mxu0 0
        %1840 = vmatprep.subr.bf16.mxu0 0
        %1841 = vmatpush1.bf16.msra.mxu0 0
        %1842 = vmatprep.subr.bf16.mxu0 0
        %1843 = vmatpush1.bf16.msra.mxu0 0
        %1844 = vmatprep.subr.bf16.mxu0 0
        %1845 = vmatpush1.bf16.msra.mxu0 0
        %1846 = vmatprep.subr.bf16.mxu0 0
        %1847 = vmatpush1.bf16.msra.mxu0 0
        %1848 = vmatprep.mubr.bf16.mxu0 0
        %1849 = vmatmul.mubr.bf16.gmra.mrb[0].mxu0 %v1808
        %v1850 = vpop.f32.mrb[0].mxu0
        %v1851 = vadd.f32 0.0, %v1850
        %v1852 = vpop.f32.mrb[0].mxu0
        %v1853 = vadd.f32 0.0, %v1852
        %v1854 = vpop.f32.mrb[0].mxu0
        %v1855 = vpop.f32.mrb[0].mxu0
        %1856 = vdwg.mxu0
        %v1857 = vadd.f32 %v1785, %v1851
        %v1858 = vadd.f32 %v1787, %v1853
        %v1859 = vsel %vm626, %v1660, 0
        %v1860 = vsel %vm627, %v1661, 0
        %v1861 = vsel %vm628, %v1662, 0
        %s1862 = scalar_lea.vmem %s5, 12
        %v1863 = vld [vmem:[%s1862] sm:$0xf]
        %1867 = vrot.lane.b32.xlu0 %v1859, 1
        %v1868 = vpop.permute.xlu0 %1867
        %1869 = vrot.lane.b32.xlu0 %v1860, 1
        %v1870 = vpop.permute.xlu0 %1869
        %1871 = vrot.lane.b32.xlu0 %v1861, 1
        %v1872 = vpop.permute.xlu0 %1871
        %v1873 = vsel %vm643, %v1868, %v1870
        %v1874 = vsel %vm643, %v1870, %v1872
        %v1876 = vsel %vm1064, %v1863, 0
        %v1879 = vsel %vm1068, %v1873, 0
        %v1882 = vsel %vm1068, %v1874, 0
        %1884 = vmatprep.subr.bf16.mxu0 %v1882
        %1885 = vmatpush1.bf16.msra.mxu0 %v1879
        %1886 = vmatprep.subr.bf16.mxu0 0
        %1887 = vmatpush1.bf16.msra.mxu0 0
        %1888 = vmatprep.subr.bf16.mxu0 0
        %1889 = vmatpush1.bf16.msra.mxu0 0
        %1890 = vmatprep.subr.bf16.mxu0 0
        %1891 = vmatpush1.bf16.msra.mxu0 0
        %1892 = vmatprep.subr.bf16.mxu0 0
        %1893 = vmatpush1.bf16.msra.mxu0 0
        %1894 = vmatprep.subr.bf16.mxu0 0
        %1895 = vmatpush1.bf16.msra.mxu0 0
        %1896 = vmatprep.subr.bf16.mxu0 0
        %1897 = vmatpush1.bf16.msra.mxu0 0
        %1898 = vmatprep.subr.bf16.mxu0 0
        %1899 = vmatpush1.bf16.msra.mxu0 0
        %1900 = vmatprep.subr.bf16.mxu0 0
        %1901 = vmatpush1.bf16.msra.mxu0 0
        %1902 = vmatprep.subr.bf16.mxu0 0
        %1903 = vmatpush1.bf16.msra.mxu0 0
        %1904 = vmatprep.subr.bf16.mxu0 0
        %1905 = vmatpush1.bf16.msra.mxu0 0
        %1906 = vmatprep.subr.bf16.mxu0 0
        %1907 = vmatpush1.bf16.msra.mxu0 0
        %1908 = vmatprep.subr.bf16.mxu0 0
        %1909 = vmatpush1.bf16.msra.mxu0 0
        %1910 = vmatprep.subr.bf16.mxu0 0
        %1911 = vmatpush1.bf16.msra.mxu0 0
        %1912 = vmatprep.subr.bf16.mxu0 0
        %1913 = vmatpush1.bf16.msra.mxu0 0
        %1914 = vmatprep.subr.bf16.mxu0 0
        %1915 = vmatpush1.bf16.msra.mxu0 0
        %1916 = vmatprep.mubr.bf16.mxu0 0
        %1917 = vmatmul.mubr.bf16.gmra.mrb[0].mxu0 %v1876
        %v1918 = vpop.f32.mrb[0].mxu0
        %v1919 = vadd.f32 0.0, %v1918
        %v1920 = vpop.f32.mrb[0].mxu0
        %v1921 = vadd.f32 0.0, %v1920
        %v1922 = vpop.f32.mrb[0].mxu0
        %v1923 = vpop.f32.mrb[0].mxu0
        %1924 = vdwg.mxu0
        %v1925 = vadd.f32 %v1857, %v1919
        %v1926 = vadd.f32 %v1858, %v1921
        %s1927 = scalar_lea.vmem %s5, 16
        %v1928 = vld [vmem:[%s1927] sm:$0xf]
        %v1930 = vsel %vm1064, %v1928, 0
        %v1933 = vsel %vm1068, %v1661, 0
        %v1936 = vsel %vm1068, %v1662, 0
        %1938 = vmatprep.subr.bf16.mxu0 %v1936
        %1939 = vmatpush1.bf16.msra.mxu0 %v1933
        %1940 = vmatprep.subr.bf16.mxu0 0
        %1941 = vmatpush1.bf16.msra.mxu0 0
        %1942 = vmatprep.subr.bf16.mxu0 0
        %1943 = vmatpush1.bf16.msra.mxu0 0
        %1944 = vmatprep.subr.bf16.mxu0 0
        %1945 = vmatpush1.bf16.msra.mxu0 0
        %1946 = vmatprep.subr.bf16.mxu0 0
        %1947 = vmatpush1.bf16.msra.mxu0 0
        %1948 = vmatprep.subr.bf16.mxu0 0
        %1949 = vmatpush1.bf16.msra.mxu0 0
        %1950 = vmatprep.subr.bf16.mxu0 0
        %1951 = vmatpush1.bf16.msra.mxu0 0
        %1952 = vmatprep.subr.bf16.mxu0 0
        %1953 = vmatpush1.bf16.msra.mxu0 0
        %1954 = vmatprep.subr.bf16.mxu0 0
        %1955 = vmatpush1.bf16.msra.mxu0 0
        %1956 = vmatprep.subr.bf16.mxu0 0
        %1957 = vmatpush1.bf16.msra.mxu0 0
        %1958 = vmatprep.subr.bf16.mxu0 0
        %1959 = vmatpush1.bf16.msra.mxu0 0
        %1960 = vmatprep.subr.bf16.mxu0 0
        %1961 = vmatpush1.bf16.msra.mxu0 0
        %1962 = vmatprep.subr.bf16.mxu0 0
        %1963 = vmatpush1.bf16.msra.mxu0 0
        %1964 = vmatprep.subr.bf16.mxu0 0
        %1965 = vmatpush1.bf16.msra.mxu0 0
        %1966 = vmatprep.subr.bf16.mxu0 0
        %1967 = vmatpush1.bf16.msra.mxu0 0
        %1968 = vmatprep.subr.bf16.mxu0 0
        %1969 = vmatpush1.bf16.msra.mxu0 0
        %1970 = vmatprep.mubr.bf16.mxu0 0
        %1971 = vmatmul.mubr.bf16.gmra.mrb[0].mxu0 %v1930
        %v1972 = vpop.f32.mrb[0].mxu0
        %v1973 = vadd.f32 0.0, %v1972
        %v1974 = vpop.f32.mrb[0].mxu0
        %v1975 = vadd.f32 0.0, %v1974
        %v1976 = vpop.f32.mrb[0].mxu0
        %v1977 = vpop.f32.mrb[0].mxu0
        %1978 = vdwg.mxu0
        %v1979 = vadd.f32 %v1925, %v1973
        %v1980 = vadd.f32 %v1926, %v1975
        %v1981 = vld [vmem:[#allocation2 + $0x8] sm:$0xf]
        %v1982 = vld [vmem:[#allocation2 + $0x10] sm:$0xf]
        %v1983 = vld [vmem:[#allocation2 + $0x18] sm:$0xf]
        %v1984 = vsel %vm750, %v1981, 0
        %v1985 = vsel %vm751, %v1982, 0
        %v1986 = vsel %vm752, %v1983, 0
        %s1987 = scalar_lea.vmem %s5, 20
        %v1988 = vld [vmem:[%s1987] sm:$0xf]
        %1992 = vrot.lane.b32.xlu0 %v1984, 127
        %v1993 = vpop.permute.xlu0 %1992
        %1994 = vrot.lane.b32.xlu0 %v1985, 127
        %v1995 = vpop.permute.xlu0 %1994
        %1996 = vrot.lane.b32.xlu0 %v1986, 127
        %v1997 = vpop.permute.xlu0 %1996
        %v1998 = vsel %vm624, %v1993, %v1995
        %v1999 = vsel %vm624, %v1995, %v1997
        %v2001 = vsel %vm1064, %v1988, 0
        %v2004 = vsel %vm1068, %v1998, 0
        %v2007 = vsel %vm1068, %v1999, 0
        %2009 = vmatprep.subr.bf16.mxu0 %v2007
        %2010 = vmatpush1.bf16.msra.mxu0 %v2004
        %2011 = vmatprep.subr.bf16.mxu0 0
        %2012 = vmatpush1.bf16.msra.mxu0 0
        %2013 = vmatprep.subr.bf16.mxu0 0
        %2014 = vmatpush1.bf16.msra.mxu0 0
        %2015 = vmatprep.subr.bf16.mxu0 0
        %2016 = vmatpush1.bf16.msra.mxu0 0
        %2017 = vmatprep.subr.bf16.mxu0 0
        %2018 = vmatpush1.bf16.msra.mxu0 0
        %2019 = vmatprep.subr.bf16.mxu0 0
        %2020 = vmatpush1.bf16.msra.mxu0 0
        %2021 = vmatprep.subr.bf16.mxu0 0
        %2022 = vmatpush1.bf16.msra.mxu0 0
        %2023 = vmatprep.subr.bf16.mxu0 0
        %2024 = vmatpush1.bf16.msra.mxu0 0
        %2025 = vmatprep.subr.bf16.mxu0 0
        %2026 = vmatpush1.bf16.msra.mxu0 0
        %2027 = vmatprep.subr.bf16.mxu0 0
        %2028 = vmatpush1.bf16.msra.mxu0 0
        %2029 = vmatprep.subr.bf16.mxu0 0
        %2030 = vmatpush1.bf16.msra.mxu0 0
        %2031 = vmatprep.subr.bf16.mxu0 0
        %2032 = vmatpush1.bf16.msra.mxu0 0
        %2033 = vmatprep.subr.bf16.mxu0 0
        %2034 = vmatpush1.bf16.msra.mxu0 0
        %2035 = vmatprep.subr.bf16.mxu0 0
        %2036 = vmatpush1.bf16.msra.mxu0 0
        %2037 = vmatprep.subr.bf16.mxu0 0
        %2038 = vmatpush1.bf16.msra.mxu0 0
        %2039 = vmatprep.subr.bf16.mxu0 0
        %2040 = vmatpush1.bf16.msra.mxu0 0
        %2041 = vmatprep.mubr.bf16.mxu0 0
        %2042 = vmatmul.mubr.bf16.gmra.mrb[0].mxu0 %v2001
        %v2043 = vpop.f32.mrb[0].mxu0
        %v2044 = vadd.f32 0.0, %v2043
        %v2045 = vpop.f32.mrb[0].mxu0
        %v2046 = vadd.f32 0.0, %v2045
        %v2047 = vpop.f32.mrb[0].mxu0
        %v2048 = vpop.f32.mrb[0].mxu0
        %2049 = vdwg.mxu0
        %v2050 = vadd.f32 %v1979, %v2044
        %v2051 = vadd.f32 %v1980, %v2046
        %v2052 = vsel %vm822, %v1981, 0
        %v2053 = vsel %vm823, %v1982, 0
        %v2054 = vsel %vm824, %v1983, 0
        %s2055 = scalar_lea.vmem %s5, 24
        %v2056 = vld [vmem:[%s2055] sm:$0xf]
        %2060 = vrot.lane.b32.xlu0 %v2052, 113
        %v2061 = vpop.permute.xlu0 %2060
        %2062 = vrot.lane.b32.xlu0 %v2053, 113
        %v2063 = vpop.permute.xlu0 %2062
        %2064 = vrot.lane.b32.xlu0 %v2054, 113
        %v2065 = vpop.permute.xlu0 %2064
        %v2066 = vsel %vm550, %v2061, %v2063
        %v2067 = vsel %vm550, %v2063, %v2065
        %v2069 = vsel %vm1064, %v2056, 0
        %v2072 = vsel %vm1068, %v2066, 0
        %v2075 = vsel %vm1068, %v2067, 0
        %2077 = vmatprep.subr.bf16.mxu0 %v2075
        %2078 = vmatpush1.bf16.msra.mxu0 %v2072
        %2079 = vmatprep.subr.bf16.mxu0 0
        %2080 = vmatpush1.bf16.msra.mxu0 0
        %2081 = vmatprep.subr.bf16.mxu0 0
        %2082 = vmatpush1.bf16.msra.mxu0 0
        %2083 = vmatprep.subr.bf16.mxu0 0
        %2084 = vmatpush1.bf16.msra.mxu0 0
        %2085 = vmatprep.subr.bf16.mxu0 0
        %2086 = vmatpush1.bf16.msra.mxu0 0
        %2087 = vmatprep.subr.bf16.mxu0 0
        %2088 = vmatpush1.bf16.msra.mxu0 0
        %2089 = vmatprep.subr.bf16.mxu0 0
        %2090 = vmatpush1.bf16.msra.mxu0 0
        %2091 = vmatprep.subr.bf16.mxu0 0
        %2092 = vmatpush1.bf16.msra.mxu0 0
        %2093 = vmatprep.subr.bf16.mxu0 0
        %2094 = vmatpush1.bf16.msra.mxu0 0
        %2095 = vmatprep.subr.bf16.mxu0 0
        %2096 = vmatpush1.bf16.msra.mxu0 0
        %2097 = vmatprep.subr.bf16.mxu0 0
        %2098 = vmatpush1.bf16.msra.mxu0 0
        %2099 = vmatprep.subr.bf16.mxu0 0
        %2100 = vmatpush1.bf16.msra.mxu0 0
        %2101 = vmatprep.subr.bf16.mxu0 0
        %2102 = vmatpush1.bf16.msra.mxu0 0
        %2103 = vmatprep.subr.bf16.mxu0 0
        %2104 = vmatpush1.bf16.msra.mxu0 0
        %2105 = vmatprep.subr.bf16.mxu0 0
        %2106 = vmatpush1.bf16.msra.mxu0 0
        %2107 = vmatprep.subr.bf16.mxu0 0
        %2108 = vmatpush1.bf16.msra.mxu0 0
        %2109 = vmatprep.mubr.bf16.mxu0 0
        %2110 = vmatmul.mubr.bf16.gmra.mrb[0].mxu0 %v2069
        %v2111 = vpop.f32.mrb[0].mxu0
        %v2112 = vadd.f32 0.0, %v2111
        %v2113 = vpop.f32.mrb[0].mxu0
        %v2114 = vadd.f32 0.0, %v2113
        %v2115 = vpop.f32.mrb[0].mxu0
        %v2116 = vpop.f32.mrb[0].mxu0
        %2117 = vdwg.mxu0
        %v2118 = vadd.f32 %v2050, %v2112
        %v2119 = vadd.f32 %v2051, %v2114
        %s2120 = scalar_lea.vmem %s5, 28
        %v2121 = vld [vmem:[%s2120] sm:$0xf]
        %2125 = vrot.lane.b32.xlu0 %v1981, 112
        %v2126 = vpop.permute.xlu0 %2125
        %2127 = vrot.lane.b32.xlu0 %v1982, 112
        %v2128 = vpop.permute.xlu0 %2127
        %2129 = vrot.lane.b32.xlu0 %v1983, 112
        %v2130 = vpop.permute.xlu0 %2129
        %v2131 = vsel %vm900, %v2126, %v2128
        %v2132 = vsel %vm900, %v2128, %v2130
        %v2134 = vsel %vm1064, %v2121, 0
        %v2137 = vsel %vm1068, %v2131, 0
        %v2140 = vsel %vm1068, %v2132, 0
        %2142 = vmatprep.subr.bf16.mxu0 %v2140
        %2143 = vmatpush1.bf16.msra.mxu0 %v2137
        %2144 = vmatprep.subr.bf16.mxu0 0
        %2145 = vmatpush1.bf16.msra.mxu0 0
        %2146 = vmatprep.subr.bf16.mxu0 0
        %2147 = vmatpush1.bf16.msra.mxu0 0
        %2148 = vmatprep.subr.bf16.mxu0 0
        %2149 = vmatpush1.bf16.msra.mxu0 0
        %2150 = vmatprep.subr.bf16.mxu0 0
        %2151 = vmatpush1.bf16.msra.mxu0 0
        %2152 = vmatprep.subr.bf16.mxu0 0
        %2153 = vmatpush1.bf16.msra.mxu0 0
        %2154 = vmatprep.subr.bf16.mxu0 0
        %2155 = vmatpush1.bf16.msra.mxu0 0
        %2156 = vmatprep.subr.bf16.mxu0 0
        %2157 = vmatpush1.bf16.msra.mxu0 0
        %2158 = vmatprep.subr.bf16.mxu0 0
        %2159 = vmatpush1.bf16.msra.mxu0 0
        %2160 = vmatprep.subr.bf16.mxu0 0
        %2161 = vmatpush1.bf16.msra.mxu0 0
        %2162 = vmatprep.subr.bf16.mxu0 0
        %2163 = vmatpush1.bf16.msra.mxu0 0
        %2164 = vmatprep.subr.bf16.mxu0 0
        %2165 = vmatpush1.bf16.msra.mxu0 0
        %2166 = vmatprep.subr.bf16.mxu0 0
        %2167 = vmatpush1.bf16.msra.mxu0 0
        %2168 = vmatprep.subr.bf16.mxu0 0
        %2169 = vmatpush1.bf16.msra.mxu0 0
        %2170 = vmatprep.subr.bf16.mxu0 0
        %2171 = vmatpush1.bf16.msra.mxu0 0
        %2172 = vmatprep.subr.bf16.mxu0 0
        %2173 = vmatpush1.bf16.msra.mxu0 0
        %2174 = vmatprep.mubr.bf16.mxu0 0
        %2175 = vmatmul.mubr.bf16.gmra.mrb[0].mxu0 %v2134
        %v2176 = vpop.f32.mrb[0].mxu0
        %v2177 = vadd.f32 0.0, %v2176
        %v2178 = vpop.f32.mrb[0].mxu0
        %v2179 = vadd.f32 0.0, %v2178
        %v2180 = vpop.f32.mrb[0].mxu0
        %v2181 = vpop.f32.mrb[0].mxu0
        %2182 = vdwg.mxu0
        %v2183 = vadd.f32 %v2118, %v2177
        %v2184 = vadd.f32 %v2119, %v2179
        %v2185 = vsel %vm956, %v1981, 0
        %v2186 = vsel %vm957, %v1982, 0
        %v2187 = vsel %vm958, %v1983, 0
        %s2188 = scalar_lea.vmem %s5, 32
        %v2189 = vld [vmem:[%s2188] sm:$0xf]
        %2193 = vrot.lane.b32.xlu0 %v2185, 111
        %v2194 = vpop.permute.xlu0 %2193
        %2195 = vrot.lane.b32.xlu0 %v2186, 111
        %v2196 = vpop.permute.xlu0 %2195
        %2197 = vrot.lane.b32.xlu0 %v2187, 111
        %v2198 = vpop.permute.xlu0 %2197
        %v2199 = vsel %vm404, %v2194, %v2196
        %v2200 = vsel %vm404, %v2196, %v2198
        %v2202 = vsel %vm1064, %v2189, 0
        %v2205 = vsel %vm1068, %v2199, 0
        %v2208 = vsel %vm1068, %v2200, 0
        %2210 = vmatprep.subr.bf16.mxu0 %v2208
        %2211 = vmatpush1.bf16.msra.mxu0 %v2205
        %2212 = vmatprep.subr.bf16.mxu0 0
        %2213 = vmatpush1.bf16.msra.mxu0 0
        %2214 = vmatprep.subr.bf16.mxu0 0
        %2215 = vmatpush1.bf16.msra.mxu0 0
        %2216 = vmatprep.subr.bf16.mxu0 0
        %2217 = vmatpush1.bf16.msra.mxu0 0
        %2218 = vmatprep.subr.bf16.mxu0 0
        %2219 = vmatpush1.bf16.msra.mxu0 0
        %2220 = vmatprep.subr.bf16.mxu0 0
        %2221 = vmatpush1.bf16.msra.mxu0 0
        %2222 = vmatprep.subr.bf16.mxu0 0
        %2223 = vmatpush1.bf16.msra.mxu0 0
        %2224 = vmatprep.subr.bf16.mxu0 0
        %2225 = vmatpush1.bf16.msra.mxu0 0
        %2226 = vmatprep.subr.bf16.mxu0 0
        %2227 = vmatpush1.bf16.msra.mxu0 0
        %2228 = vmatprep.subr.bf16.mxu0 0
        %2229 = vmatpush1.bf16.msra.mxu0 0
        %2230 = vmatprep.subr.bf16.mxu0 0
        %2231 = vmatpush1.bf16.msra.mxu0 0
        %2232 = vmatprep.subr.bf16.mxu0 0
        %2233 = vmatpush1.bf16.msra.mxu0 0
        %2234 = vmatprep.subr.bf16.mxu0 0
        %2235 = vmatpush1.bf16.msra.mxu0 0
        %2236 = vmatprep.subr.bf16.mxu0 0
        %2237 = vmatpush1.bf16.msra.mxu0 0
        %2238 = vmatprep.subr.bf16.mxu0 0
        %2239 = vmatpush1.bf16.msra.mxu0 0
        %2240 = vmatprep.subr.bf16.mxu0 0
        %2241 = vmatpush1.bf16.msra.mxu0 0
        %2242 = vmatprep.mubr.bf16.mxu0 0
        %2243 = vmatmul.mubr.bf16.gmra.mrb[0].mxu0 %v2202
        %v2244 = vpop.f32.mrb[0].mxu0
        %v2245 = vadd.f32 0.0, %v2244
        %v2246 = vpop.f32.mrb[0].mxu0
        %v2247 = vadd.f32 0.0, %v2246
        %v2248 = vpop.f32.mrb[0].mxu0
        %v2249 = vpop.f32.mrb[0].mxu0
        %2250 = vdwg.mxu0
        %v2251 = vadd.f32 %v2183, %v2245
        %v2252 = vadd.f32 %v2184, %v2247
        %v2253 = vld [vmem:[%s6] sm:$0xff]
        %2255 = vset.pattern.permute.xlu0 0
        %2256 = vperm.xlu0 %2255, %v2253
        %v2257 = vpop.permute.xlu0 %2256
        %v2259 = vadd.f32 %v2251, %v2257
        %v2260 = vadd.f32 %v2252, %v2257
        %v2261 = vmax.f32 %v2259, 0.0
        %v2262 = vmax.f32 %v2260, 0.0
        %v2263 = vpack.c.bf16 %v2261, %v2261
        %v2264 = vpack.c.bf16 %v2262, %v2262
        %v2267 = vunpack.c.l.b16 %v2263
        %v2268 = vunpack.c.l.b16 %v2264
        %v2269 = vpack.c.b16 %v2268, %v2267
        %2271 = vst [vmem:[#allocation3 + $0x20] sm:$0xff] %v2269
        %v2272 = vld [vmem:[%s7] sm:$0xf]
        %v2273 = vld [vmem:[%s7 + $0x4] sm:$0xf]
        %v2274 = vld [vmem:[#allocation3] sm:$0xff]
        %v2275 = vld [vmem:[#allocation3 + $0x8] sm:$0xff]
        %v2276 = vld [vmem:[#allocation3 + $0x10] sm:$0xff]
        %v2277 = vld [vmem:[#allocation3 + $0x18] sm:$0xff]
        %v2278 = vld [vmem:[#allocation3 + $0x20] sm:$0xff]
        %v2279 = vld [vmem:[%s8] sm:$0xff]
        %v2280 = vld [vmem:[%s8 + $0x8] sm:$0xff]
        %2282 = vset.pattern.permute.xlu0 0
        %2283 = vperm.xlu0 %2282, %v2279
        %v2284 = vpop.permute.xlu0 %2283
        %2287 = vset.pattern.permute.xlu0 0
        %2288 = vperm.xlu0 %2287, %v2280
        %v2289 = vpop.permute.xlu0 %2288
        %v2293 = vunpack.c.l.b16 %v2272
        %v2294 = vunpack.c.l.b16 %v2273
        %v2295 = vpack.c.b16 %v2294, %v2293
        %v2301 = vunpack.c.l.b16 %v2274
        %v2302 = vunpack.c.h.b16 %v2274
        %v2303 = vunpack.c.l.b16 %v2275
        %v2304 = vunpack.c.h.b16 %v2275
        %v2305 = vunpack.c.l.b16 %v2276
        %v2306 = vunpack.c.h.b16 %v2276
        %v2307 = vunpack.c.l.b16 %v2277
        %v2308 = vunpack.c.h.b16 %v2277
        %v2309 = vunpack.c.l.b16 %v2278
        %v2310 = vunpack.c.h.b16 %v2278
        %v2311 = vpack.c.b16 %v2303, %v2301
        %v2312 = vpack.c.b16 %v2304, %v2302
        %v2313 = vpack.c.b16 %v2307, %v2305
        %v2314 = vpack.c.b16 %v2308, %v2306
        %v2315 = vpack.c.b16 %v2309, %v2309
        %v2316 = vpack.c.b16 %v2310, %v2310
        %vm2321 = vcmask 326656
        %v2323 = vsel %vm2321, %v2295, 0
        %v2326 = vsel %vm1068, %v2315, 0
        %v2329 = vsel %vm1068, %v2316, 0
        %2331 = vmatprep.subr.bf16.mxu0 %v2312
        %2332 = vmatpush1.bf16.msra.mxu0 %v2311
        %2333 = vmatprep.subr.bf16.mxu0 %v2314
        %2334 = vmatpush1.bf16.msra.mxu0 %v2313
        %2335 = vmatprep.subr.bf16.mxu0 %v2329
        %2336 = vmatpush1.bf16.msra.mxu0 %v2326
        %2337 = vmatprep.subr.bf16.mxu0 0
        %2338 = vmatpush1.bf16.msra.mxu0 0
        %2339 = vmatprep.subr.bf16.mxu0 0
        %2340 = vmatpush1.bf16.msra.mxu0 0
        %2341 = vmatprep.subr.bf16.mxu0 0
        %2342 = vmatpush1.bf16.msra.mxu0 0
        %2343 = vmatprep.subr.bf16.mxu0 0
        %2344 = vmatpush1.bf16.msra.mxu0 0
        %2345 = vmatprep.subr.bf16.mxu0 0
        %2346 = vmatpush1.bf16.msra.mxu0 0
        %2347 = vmatprep.subr.bf16.mxu0 0
        %2348 = vmatpush1.bf16.msra.mxu0 0
        %2349 = vmatprep.subr.bf16.mxu0 0
        %2350 = vmatpush1.bf16.msra.mxu0 0
        %2351 = vmatprep.subr.bf16.mxu0 0
        %2352 = vmatpush1.bf16.msra.mxu0 0
        %2353 = vmatprep.subr.bf16.mxu0 0
        %2354 = vmatpush1.bf16.msra.mxu0 0
        %2355 = vmatprep.subr.bf16.mxu0 0
        %2356 = vmatpush1.bf16.msra.mxu0 0
        %2357 = vmatprep.subr.bf16.mxu0 0
        %2358 = vmatpush1.bf16.msra.mxu0 0
        %2359 = vmatprep.subr.bf16.mxu0 0
        %2360 = vmatpush1.bf16.msra.mxu0 0
        %2361 = vmatprep.subr.bf16.mxu0 0
        %2362 = vmatpush1.bf16.msra.mxu0 0
        %2363 = vmatprep.mubr.bf16.mxu0 0
        %2364 = vmatmul.mubr.bf16.gmra.mrb[0].mxu0 %v2323
        %v2365 = vpop.f32.mrb[0].mxu0
        %v2366 = vadd.f32 %v2284, %v2365
        %v2367 = vpop.f32.mrb[0].mxu0
        %v2368 = vadd.f32 %v2284, %v2367
        %v2369 = vpop.f32.mrb[0].mxu0
        %v2370 = vadd.f32 %v2289, %v2369
        %v2371 = vpop.f32.mrb[0].mxu0
        %v2372 = vadd.f32 %v2289, %v2371
        %2373 = vdwg.mxu0
        %v2374 = vmax.f32 %v2366, 0.0
        %v2375 = vmax.f32 %v2368, 0.0
        %v2376 = vmax.f32 %v2370, 0.0
        %v2377 = vmax.f32 %v2372, 0.0
        %v2378 = vunpack.c.l.bf16 %v367
        %v2379 = vunpack.c.h.bf16 %v367
        %v2380 = vunpack.c.l.bf16 %v368
        %v2381 = vunpack.c.h.bf16 %v368
        %v2382 = vadd.f32 %v2374, %v2378
        %v2383 = vadd.f32 %v2375, %v2379
        %v2384 = vadd.f32 %v2376, %v2380
        %v2385 = vadd.f32 %v2377, %v2381
        %v2386 = vpack.c.bf16 %v2384, %v2382
        %v2387 = vpack.c.bf16 %v2385, %v2383
        %v2390 = vunpack.c.l.b16 %v2386
        %v2391 = vunpack.c.l.b16 %v2387
        %v2392 = vunpack.c.h.b16 %v2386
        %v2393 = vunpack.c.h.b16 %v2387
        %v2394 = vpack.c.b16 %v2391, %v2390
        %v2395 = vpack.c.b16 %v2393, %v2392
        %2398 = vst [vmem:[%s325] sm:$0xff] %v2394
        %2399 = vst [vmem:[%s325 + $0x8] sm:$0xff] %v2395
        %s2400 = sand.u32 %s225, 1
        %s2401 = scalar_lea.sflag [#allocation5], %s2400
        %s2402 = sand.u32 %s225, 1
        %s2403 = smul.addr %s2402, 16
        %s2404 = scalar_lea.vmem [#allocation4], %s2403
        // Predicated region
        $region57: #{tpu_custom_call.1} parent=55 // pred_check
          %p2405 = pneg %p235
        $region58: #{tpu_custom_call.1} parent=55 // pred_check_branch
          %2407 = sbr.rel (%p2405) target = $region60
        $region59: #{tpu_custom_call.1} parent=55 // pred_region
          %s2409 = ssub.s32 256, 256
          %2410 = vsyncadd %s2401, %s2409
          %s2411 = smul.addr %s23, 4
          %s2412 = smul.addr %s2411, 64
          %s2413 = scalar_lea.hbm %s9, %s2412
          %s2414 = sshll.u32 %s2404, 4
          %s2415 = int_to_ptr.vmem [resolvable:$true] %s2414
          %2420 = dma.vmem_to_hbm [thread:$0]  %s2415, 256, %s2413, %s2401, 128, 128, 8
        $region60: #{tpu_custom_call.1} parent=55 // pred_fallthru
          _
      $region56: #{tpu_custom_call.1} parent=5 // pred_fallthru
        _
      %p2421 = scmp.le.s32.totalorder 2, %s18
      // Predicated region
      $region61: #{tpu_custom_call.1} parent=5 // pred_check
        %p2422 = pneg %p2421
      $region62: #{tpu_custom_call.1} parent=5 // pred_check_branch
        %2424 = sbr.rel (%p2422) target = $region64
      $region63: #{tpu_custom_call.1} parent=5 // pred_region
        %s2425 = ssub.s32 %s18, 2
        // Predicated region
        $region65: #{tpu_custom_call.1} parent=63 // pred_check
          %p2426 = pneg %p241
        $region66: #{tpu_custom_call.1} parent=63 // pred_check_branch
          %2428 = sbr.rel (%p2426) target = $region68
        $region67: #{tpu_custom_call.1} parent=63 // pred_region
          %s2429 = sand.u32 %s226, 1
          %s2430 = scalar_lea.sflag [#allocation5], %s2429
          %s2431 = sand.u32 %s226, 1
          %s2432 = smul.addr %s2431, 16
          %s2433 = scalar_lea.vmem [#allocation4], %s2432
          %2434 = dma.done %s2430, 256
        $region68: #{tpu_custom_call.1} parent=63 // pred_fallthru
          _
      $region64: #{tpu_custom_call.1} parent=5 // pred_fallthru
        _
    $region6: #{tpu_custom_call.1} parent=1 // loop_footer
      %s22 = sadd.s32 1, %s18
    $region7: #{tpu_custom_call.1} parent=1 // loop_footer_branch
      %17 = sbr.rel target = $region3
    $region8: #{tpu_custom_call.1} parent=1 // loop_exit
      _
    %2435 = vsyncpa [#allocation5], 1
    %s2436 = scalar_lea.sflag [#allocation5], 1
    %2437 = vsyncpa %s2436, 1

</llo_original>
